<compile_context>
chip_gen: v6e
topology: v6e:2x2x1
jax: 0.10.0
libtpu: 0.0.40
codegen_flags: <defaults>
</compile_context>

<pallas_src>
import jax
import jax.numpy as jnp
from jax import lax
from jax.experimental import pallas as pl
from jax.experimental.pallas import tpu as pltpu

F_HLA = 32          # num_features_hla
HIDDEN = 64         # hidden_channels
NEG_SLOPE = 0.2     # GAT LeakyReLU slope
BN_EPS = 1e-5
NEG_INF = -1e30
LANE = 128


def _round_up(n, m):
    return ((n + m - 1) // m) * m


def _pick_stripe(np_):
    """Row-stripe size for the N^2 phases (Np is a multiple of 128)."""
    for tr in (512, 256, 128):
        if np_ % tr == 0:
            return min(tr, np_)
    return np_


def _softmax_dtype():
    """bf16 N^2 softmax math on v6e/v7x (native bf16 VALU/EUP); f32 on v5e/other."""
    try:
        kind = jax.devices()[0].device_kind.lower()
    except Exception:
        return jnp.float32
    if ("v6" in kind) or ("v7" in kind):
        return jnp.bfloat16
    return jnp.float32


def _vmem_budget_bytes():
    try:
        cap = int(pltpu.get_tpu_info().vmem_capacity_bytes)
    except Exception:
        cap = 64 << 20          # conservative fallback (v7x per-TC VMEM)
    return int(0.75 * cap)


def _make_kernel(Np, TR, cdt):
    n_stripes = Np // TR

    def kernel(a_ref, x_ref, pool_ref, w1_ref, w2_ref, w3_ref,
               wf1_ref, wf2_ref, slab_ref, out_ref, h_ref, z_ref, zb_ref):
        slab = slab_ref[...]                     # [16, 128] packed small params
        b1 = slab[0:1, :F_HLA]
        a2s = slab[1:2, :F_HLA]
        a2d = slab[2:3, :F_HLA]
        b2 = slab[3:4, :F_HLA]
        a3s0 = slab[4:5, :F_HLA]
        a3s1 = slab[5:6, :F_HLA]
        a3d0 = slab[6:7, :F_HLA]
        a3d1 = slab[7:8, :F_HLA]
        b3 = slab[8:9, :2 * F_HLA]
        bf1 = slab[9:10, :2 * HIDDEN]
        bf2 = slab[10:11, :]                     # BN-folded fc2 bias, padded to 128

        def attend_stripe(edge, r, z_slot, a_dst, e_src_row):
            """One GAT head on a row stripe [TR, Np] of the adjacency mask."""
            z_stripe = z_ref[z_slot, pl.ds(r, TR), :]            # [TR, F] f32
            e_dst = lax.dot_general(z_stripe, a_dst, (((1,), (1,)), ((), ())),
                                    preferred_element_type=jnp.float32)  # [TR,1]
            e = e_dst.astype(cdt) + e_src_row                    # [TR, Np] cdt
            e = jnp.where(e > 0, e, NEG_SLOPE * e)               # LeakyReLU(0.2)
            logits = jnp.where(edge, e, NEG_INF)
            lmax = jnp.max(logits, axis=1, keepdims=True)
            p = jnp.exp(logits - lmax)        # masked entries underflow to exact 0
            inv = pl.reciprocal(
                jnp.sum(p, axis=1, keepdims=True, dtype=jnp.float32),
                approx=True)                                     # f32 row sums
            p_mxu = p if p.dtype == jnp.bfloat16 else p.astype(jnp.bfloat16)
            agg = jnp.dot(p_mxu, zb_ref[z_slot],
                          preferred_element_type=jnp.float32)    # [TR, F]
            return agg * inv                  # fold 1/rowsum into [TR,F], not N^2

        # ---- GCNConv: (D^-1/2 (A+I) D^-1/2) @ (x W1) + b1, ReLU ----
        # (symmetric normalization already folded into the bf16 adjacency)
        xw = jnp.dot(x_ref[0], w1_ref[...],
                     preferred_element_type=jnp.float32).astype(jnp.bfloat16)

        @pl.loop(0, n_stripes)
        def _(s):
            r = pl.multiple_of(s * TR, TR)
            a_blk = a_ref[0, pl.ds(r, TR), :]                    # [TR, Np] bf16
            h = jnp.dot(a_blk, xw, preferred_element_type=jnp.float32) + b1
            h_ref[pl.ds(r, TR), :] = jnp.maximum(h, 0.0)

        # ---- GATConv, 1 head ----
        z2 = jnp.dot(h_ref[...], w2_ref[...],
                     preferred_element_type=jnp.float32)         # [Np, 32]
        z_ref[0] = z2
        zb_ref[0] = z2.astype(jnp.bfloat16)
        e2_src = lax.dot_general(a2s, z2, (((1,), (1,)), ((), ())),
                                 preferred_element_type=jnp.float32).astype(cdt)

        @pl.loop(0, n_stripes)
        def _(s):
            r = pl.multiple_of(s * TR, TR)
            edge = a_ref[0, pl.ds(r, TR), :] > 0
            o = attend_stripe(edge, r, 0, a2d, e2_src)
            h_ref[pl.ds(r, TR), :] = jnp.maximum(o + b2, 0.0)    # h2 reuses h scratch

        # ---- GATConv, 2 heads (concat) + global mean pool (fused per stripe) ----
        z3 = jnp.dot(h_ref[...], w3_ref[...],
                     preferred_element_type=jnp.float32)         # [Np, 64]
        z_ref[0] = z3[:, :F_HLA]
        z_ref[1] = z3[:, F_HLA:]
        zb_ref[0] = z3[:, :F_HLA].astype(jnp.bfloat16)
        zb_ref[1] = z3[:, F_HLA:].astype(jnp.bfloat16)
        e3_src0 = lax.dot_general(a3s0, z3[:, :F_HLA], (((1,), (1,)), ((), ())),
                                  preferred_element_type=jnp.float32).astype(cdt)
        e3_src1 = lax.dot_general(a3s1, z3[:, F_HLA:], (((1,), (1,)), ((), ())),
                                  preferred_element_type=jnp.float32).astype(cdt)

        def gat2_body(s, pooled):
            r = pl.multiple_of(s * TR, TR)
            edge = a_ref[0, pl.ds(r, TR), :] > 0                 # shared by both heads
            o0 = attend_stripe(edge, r, 0, a3d0, e3_src0)
            o1 = attend_stripe(edge, r, 1, a3d1, e3_src1)
            h3 = jnp.maximum(jnp.concatenate([o0, o1], axis=1) + b3, 0.0)  # [TR, 64]
            pw = pool_ref[0, :, pl.ds(r, TR)]                    # [1, TR]
            return pooled + jnp.dot(pw, h3, preferred_element_type=jnp.float32)

        pooled = lax.fori_loop(0, n_stripes, gat2_body,
                               jnp.zeros((1, 2 * F_HLA), jnp.float32))

        # ---- MLP: fc1 -> ReLU -> BN (folded into wf2/bf2) -> fc2 -> ReLU ----
        y = jnp.maximum(
            jnp.dot(pooled, wf1_ref[...], preferred_element_type=jnp.float32) + bf1,
            0.0)
        y = jnp.maximum(
            jnp.dot(y, wf2_ref[...], preferred_element_type=jnp.float32) + bf2,
            0.0)
        out_ref[0] = y                                           # [1, 128] lane-dense

    return kernel


def contact_gnn_forward(x, edge_index, edge_weight, batch, params, num_graphs,
                        max_nodes=None):
    """Batch graphs densely (one [Np, Np] adjacency per graph) and run the kernel."""
    (w1, b1, w2, a2s, a2d, b2, w3, a3s, a3d, b3,
     wf1, bf1, bn_g, bn_b, bn_m, bn_v, wf2, bf2) = params

    N = x.shape[0]
    B = num_graphs
    batch = batch.astype(jnp.int32)
    counts = jnp.zeros((B,), jnp.int32).at[batch].add(1)
    if max_nodes is None:
        max_nodes = int(jnp.max(counts))      # eager only; pass statically under jit
    Np = max(_round_up(max_nodes, LANE), LANE)   # lane-dense N^2 work
    TR = _pick_stripe(Np)
    cdt = _softmax_dtype()

    offsets = jnp.concatenate([jnp.zeros((1,), jnp.int32), jnp.cumsum(counts)[:-1]])
    pos = jnp.arange(N, dtype=jnp.int32) - offsets[batch]   # node index within graph

    # Per-graph dense node features and adjacency A[b, target, source].
    xb = jnp.zeros((B, Np, F_HLA), jnp.float32).at[batch, pos].set(
        x.astype(jnp.float32))
    src, dst = edge_index[0], edge_index[1]
    ew = edge_weight.astype(jnp.float32)
    A = jnp.zeros((B, Np, Np), jnp.float32).at[
        batch[dst], pos[dst], pos[src]].add(ew)
    A = A + jnp.eye(Np, dtype=jnp.float32)[None]        # self loops (weight 1.0)

    # GCN symmetric norm folded into the adjacency on the host (O(E) degrees),
    # then ship the adjacency as bf16 (MXU operand precision is unchanged).
    deg = jnp.ones((B, Np), jnp.float32).at[batch[dst], pos[dst]].add(ew)
    dinv = jax.lax.rsqrt(deg)
    a_norm = (dinv[:, :, None] * A * dinv[:, None, :]).astype(jnp.bfloat16)
    # NOTE: the in-kernel GAT edge mask is (a_norm > 0); this assumes strictly
    # positive edge weights (true for contact-map graphs).

    # Mean-pool weights per graph, excluding padded rows (empty-graph safe).
    cnt_f = jnp.maximum(counts, 1).astype(jnp.float32)
    pool = jnp.where(jnp.arange(Np, dtype=jnp.int32)[None, :] < counts[:, None],
                     1.0, 0.0) / cnt_f[:, None]
    pool = pool.reshape(B, 1, Np)

    # Fold eval-mode BatchNorm into fc2.  Reference hla_fc order is
    # Linear -> ReLU -> BatchNorm -> Dropout -> Linear -> ReLU, so BN sits
    # directly in front of fc2 and the fold is exact at inference.
    bn_scale = bn_g * jax.lax.rsqrt(bn_v + BN_EPS)               # [1, 128]
    bn_shift = bn_b - bn_m * bn_scale
    wf2_f = wf2 * bn_scale.reshape(-1, 1)                        # [128, 64]
    bf2_f = bf2 + jnp.dot(bn_shift, wf2)                         # [1, 64]
    # Pad fc2 to 128 output lanes so the final store is an unmasked full row.
    wf2_p = jnp.zeros((2 * HIDDEN, LANE), jnp.float32).at[:, :HIDDEN].set(wf2_f)

    # Pack all small bias/attention vectors into one [16, 128] slab (single DMA).
    slab = jnp.zeros((16, LANE), jnp.float32)
    slab = slab.at[0, :F_HLA].set(b1[0])
    slab = slab.at[1, :F_HLA].set(a2s[0])
    slab = slab.at[2, :F_HLA].set(a2d[0])
    slab = slab.at[3, :F_HLA].set(b2[0])
    slab = slab.at[4, :F_HLA].set(a3s[0])
    slab = slab.at[5, :F_HLA].set(a3s[1])
    slab = slab.at[6, :F_HLA].set(a3d[0])
    slab = slab.at[7, :F_HLA].set(a3d[1])
    slab = slab.at[8, :2 * F_HLA].set(b3[0])
    slab = slab.at[9, :2 * HIDDEN].set(bf1[0])
    slab = slab.at[10, :HIDDEN].set(bf2_f[0])

    # ---- generation-aware VMEM budget + advisory cost estimate ----
    f32b, bf16b = 4, 2
    cdt_b = 2 if cdt == jnp.bfloat16 else 4
    param_bytes = f32b * (w1.size + w2.size + w3.size + wf1.size + wf2_p.size
                          + 16 * LANE)
    resident = (2 * Np * Np * bf16b              # double-buffered bf16 adjacency
                + 2 * Np * F_HLA * f32b          # double-buffered node features
                + 2 * Np * f32b                  # pool row
                + 2 * param_bytes                # double-buffered params
                + Np * F_HLA * f32b              # h scratch
                + 2 * Np * F_HLA * (f32b + bf16b)  # z / zb scratch (2 heads)
                + TR * Np * (bf16b + 1 + 3 * cdt_b)  # A stripe + mask + logits/p
                + 3 * Np * F_HLA * f32b          # xw / z2 / z3 live values
                + 4 * LANE * f32b)
    budget = _vmem_budget_bytes()
    if resident > budget:
        raise ValueError(
            f"Per-graph VMEM residency (~{resident >> 20} MiB) exceeds the "
            f"budget (~{budget >> 20} MiB) on this TPU generation; reduce "
            f"max_nodes or shrink the row-stripe size.")
    vmem_limit = int(min(budget, max(resident + (8 << 20), 16 << 20)))

    mm_flops = (2 * Np * F_HLA * F_HLA * 2          # x@w1, h1@w2
                + 2 * Np * F_HLA * 2 * F_HLA        # h2@w3 (fused 2 heads)
                + 4 * 2 * Np * Np * F_HLA           # GCN prop + 3 head aggregations
                + 2 * Np * 2 * F_HLA                # pooling
                + 2 * 2 * F_HLA * 2 * HIDDEN + 2 * 2 * HIDDEN * LANE)
    cost = pl.CostEstimate(
        flops=B * (mm_flops + 14 * Np * Np),
        transcendentals=B * 3 * Np * Np,
        bytes_accessed=B * (Np * Np * bf16b + Np * F_HLA * f32b + Np * f32b
                            + LANE * f32b) + param_bytes)

    kernel = _make_kernel(Np, TR, cdt)
    out = pl.pallas_call(
        kernel,
        out_shape=jax.ShapeDtypeStruct((B, 1, LANE), jnp.float32),
        grid=(B,),
        in_specs=[
            pl.BlockSpec((1, Np, Np), lambda b: (b, 0, 0)),          # bf16 adjacency
            pl.BlockSpec((1, Np, F_HLA), lambda b: (b, 0, 0)),       # node features
            pl.BlockSpec((1, 1, Np), lambda b: (b, 0, 0)),           # pool row
            pl.BlockSpec((F_HLA, F_HLA), lambda b: (0, 0)),          # w1
            pl.BlockSpec((F_HLA, F_HLA), lambda b: (0, 0)),          # w2
            pl.BlockSpec((F_HLA, 2 * F_HLA), lambda b: (0, 0)),      # w3
            pl.BlockSpec((2 * F_HLA, 2 * HIDDEN), lambda b: (0, 0)),  # wf1
            pl.BlockSpec((2 * HIDDEN, LANE), lambda b: (0, 0)),       # wf2 (BN folded, padded)
            pl.BlockSpec((16, LANE), lambda b: (0, 0)),              # param slab
        ],
        out_specs=pl.BlockSpec((1, 1, LANE), lambda b: (b, 0, 0)),
        scratch_shapes=[
            pltpu.VMEM((Np, F_HLA), jnp.float32),        # h1 (reused for h2)
            pltpu.VMEM((2, Np, F_HLA), jnp.float32),     # z per head (f32)
            pltpu.VMEM((2, Np, F_HLA), jnp.bfloat16),    # z per head (bf16, MXU)
        ],
        compiler_params=pltpu.CompilerParams(
            dimension_semantics=("parallel",),
            vmem_limit_bytes=vmem_limit),
        cost_estimate=cost,
    )(a_norm, xb, pool, w1, w2, w3, wf1, wf2_p, slab)
    return out.reshape(B, LANE)[:, :HIDDEN]


def init_params(key):
    ks = jax.random.split(key, 14)

    def nrm(k, shape, scale=0.1):
        return (scale * jax.random.normal(k, shape)).astype(jnp.float32)

    w1 = nrm(ks[0], (F_HLA, F_HLA));        b1 = nrm(ks[1], (1, F_HLA))
    w2 = nrm(ks[2], (F_HLA, F_HLA));        a2s = nrm(ks[3], (1, F_HLA))
    a2d = nrm(ks[4], (1, F_HLA));           b2 = nrm(ks[5], (1, F_HLA))
    w3 = nrm(ks[6], (F_HLA, 2 * F_HLA));    a3s = nrm(ks[7], (2, F_HLA))
    a3d = nrm(ks[8], (2, F_HLA));           b3 = nrm(ks[9], (1, 2 * F_HLA))
    wf1 = nrm(ks[10], (2 * F_HLA, 2 * HIDDEN)); bf1 = nrm(ks[11], (1, 2 * HIDDEN))
    bn_g = jnp.ones((1, 2 * HIDDEN), jnp.float32)
    bn_b = jnp.zeros((1, 2 * HIDDEN), jnp.float32)
    bn_m = jnp.zeros((1, 2 * HIDDEN), jnp.float32)
    bn_v = jnp.ones((1, 2 * HIDDEN), jnp.float32)
    wf2 = nrm(ks[12], (2 * HIDDEN, HIDDEN)); bf2 = nrm(ks[13], (1, HIDDEN))
    return (w1, b1, w2, a2s, a2d, b2, w3, a3s, a3d, b3,
            wf1, bf1, bn_g, bn_b, bn_m, bn_v, wf2, bf2)


if __name__ == "__main__":
    key = jax.random.PRNGKey(0)
    k_x, k_w, k_p = jax.random.split(key, 3)

    nodes_per_graph, num_graphs = 8, 2
    N = nodes_per_graph * num_graphs

    x = jax.random.normal(k_x, (N, F_HLA), jnp.float32)

    # Two small ring-ish contact graphs (edges within each graph, both directions).
    edges = []
    for g in range(num_graphs):
        base = g * nodes_per_graph
        for i in range(nodes_per_graph):
            for d in (1, 2):
                j = (i + d) % nodes_per_graph
                edges.append((base + i, base + j))
                edges.append((base + j, base + i))
    edge_index = jnp.asarray(edges, dtype=jnp.int32).T                 # [2, E]
    edge_weight = jax.random.uniform(k_w, (edge_index.shape[1],), jnp.float32,
                                     0.1, 1.0)
    batch = jnp.repeat(jnp.arange(num_graphs, dtype=jnp.int32), nodes_per_graph)

    params = init_params(k_p)
    out = contact_gnn_forward(x, edge_index, edge_weight, batch, params,
                              num_graphs)
    jax.block_until_ready(out)
    assert out.shape == (num_graphs, HIDDEN)
    assert bool(jnp.all(jnp.isfinite(out)))
    print("KERNEL_OK")
</pallas_src>

<mosaic_0001>
module attributes {stable_mosaic.version = 11 : i64} {
  func.func @kernel(%arg0: i32, %arg1: memref<1x128x128xbf16, #tpu.memory_space<vmem>>, %arg2: memref<1x128x32xf32, #tpu.memory_space<vmem>>, %arg3: memref<1x1x128xf32, #tpu.memory_space<vmem>>, %arg4: memref<32x32xf32, #tpu.memory_space<vmem>>, %arg5: memref<32x32xf32, #tpu.memory_space<vmem>>, %arg6: memref<32x64xf32, #tpu.memory_space<vmem>>, %arg7: memref<64x128xf32, #tpu.memory_space<vmem>>, %arg8: memref<128x128xf32, #tpu.memory_space<vmem>>, %arg9: memref<16x128xf32, #tpu.memory_space<vmem>>, %arg10: memref<1x1x128xf32, #tpu.memory_space<vmem>>, %arg11: memref<128x32xf32, #tpu.memory_space<vmem>>, %arg12: memref<2x128x32xf32, #tpu.memory_space<vmem>>, %arg13: memref<2x128x32xbf16, #tpu.memory_space<vmem>>) attributes {dimension_semantics = [#tpu.dimension_semantics<parallel>], iteration_bounds = array<i64: 2>, scalar_prefetch = 0 : i64, scratch_operands = 3 : i64, tpu.core_type = #tpu.core_type<tc>, window_params = [{transform_indices = @transform_0, window_bounds = array<i64: 1, 128, 128>}, {transform_indices = @transform_1, window_bounds = array<i64: 1, 128, 32>}, {transform_indices = @transform_2, window_bounds = array<i64: 1, 1, 128>}, {pipeline_mode = #tpu.pipeline_mode<synchronous>, transform_indices = @transform_3, window_bounds = array<i64: 32, 32>}, {pipeline_mode = #tpu.pipeline_mode<synchronous>, transform_indices = @transform_4, window_bounds = array<i64: 32, 32>}, {pipeline_mode = #tpu.pipeline_mode<synchronous>, transform_indices = @transform_5, window_bounds = array<i64: 32, 64>}, {pipeline_mode = #tpu.pipeline_mode<synchronous>, transform_indices = @transform_6, window_bounds = array<i64: 64, 128>}, {pipeline_mode = #tpu.pipeline_mode<synchronous>, transform_indices = @transform_7, window_bounds = array<i64: 128, 128>}, {pipeline_mode = #tpu.pipeline_mode<synchronous>, transform_indices = @transform_8, window_bounds = array<i64: 16, 128>}, {transform_indices = @transform_9, window_bounds = array<i64: 1, 1, 128>}]} {
    %c0 = arith.constant 0 : index
    %c0_0 = arith.constant 0 : index
    %0 = vector.load %arg9[%c0, %c0_0] : memref<16x128xf32, #tpu.memory_space<vmem>>, vector<16x128xf32>
    %1 = vector.extract_strided_slice %0 {offsets = [0, 0], sizes = [1, 32], strides = [1, 1]} : vector<16x128xf32> to vector<1x32xf32>
    %2 = vector.extract_strided_slice %0 {offsets = [1, 0], sizes = [1, 32], strides = [1, 1]} : vector<16x128xf32> to vector<1x32xf32>
    %3 = vector.extract_strided_slice %0 {offsets = [2, 0], sizes = [1, 32], strides = [1, 1]} : vector<16x128xf32> to vector<1x32xf32>
    %4 = vector.extract_strided_slice %0 {offsets = [3, 0], sizes = [1, 32], strides = [1, 1]} : vector<16x128xf32> to vector<1x32xf32>
    %5 = vector.extract_strided_slice %0 {offsets = [4, 0], sizes = [1, 32], strides = [1, 1]} : vector<16x128xf32> to vector<1x32xf32>
    %6 = vector.extract_strided_slice %0 {offsets = [5, 0], sizes = [1, 32], strides = [1, 1]} : vector<16x128xf32> to vector<1x32xf32>
    %7 = vector.extract_strided_slice %0 {offsets = [6, 0], sizes = [1, 32], strides = [1, 1]} : vector<16x128xf32> to vector<1x32xf32>
    %8 = vector.extract_strided_slice %0 {offsets = [7, 0], sizes = [1, 32], strides = [1, 1]} : vector<16x128xf32> to vector<1x32xf32>
    %9 = vector.extract_strided_slice %0 {offsets = [8, 0], sizes = [1, 64], strides = [1, 1]} : vector<16x128xf32> to vector<1x64xf32>
    %10 = vector.extract_strided_slice %0 {offsets = [9, 0], sizes = [1, 128], strides = [1, 1]} : vector<16x128xf32> to vector<1x128xf32>
    %11 = vector.extract_strided_slice %0 {offsets = [10, 0], sizes = [1, 128], strides = [1, 1]} : vector<16x128xf32> to vector<1x128xf32>
    %c0_1 = arith.constant 0 : index
    %c0_2 = arith.constant 0 : index
    %c0_3 = arith.constant 0 : index
    %12 = vector.load %arg2[%c0_1, %c0_2, %c0_3] : memref<1x128x32xf32, #tpu.memory_space<vmem>>, vector<1x128x32xf32>
    %13 = vector.shape_cast %12 : vector<1x128x32xf32> to vector<128x32xf32>
    %c0_4 = arith.constant 0 : index
    %c0_5 = arith.constant 0 : index
    %14 = vector.load %arg4[%c0_4, %c0_5] : memref<32x32xf32, #tpu.memory_space<vmem>>, vector<32x32xf32>
    %cst = arith.constant dense<0.000000e+00> : vector<128x32xf32>
    %15 = tpu.matmul %13, %14, %cst {dimension_numbers = #tpu.dot_dimension_numbers<[1], [0], [0], [1], [0, 0, 1, 1], [], []>} : vector<128x32xf32>, vector<32x32xf32>, vector<128x32xf32> -> vector<128x32xf32>
    %16 = arith.truncf %15 : vector<128x32xf32> to vector<128x32xbf16>
    %c0_i32 = arith.constant 0 : i32
    %c1_i32 = arith.constant 1 : i32
    %17 = arith.muli %c0_i32, %c1_i32 : i32
    %c0_i32_6 = arith.constant 0 : i32
    %18 = arith.addi %c0_i32_6, %17 : i32
    %c128_i32 = arith.constant 128 : i32
    %19 = arith.muli %18, %c128_i32 : i32
    %20 = tpu.assume_multiple %19, 128 : i32
    %c0_7 = arith.constant 0 : index
    %21 = arith.index_cast %20 : i32 to index
    %c0_8 = arith.constant 0 : index
    %22 = vector.load %arg1[%c0_7, %21, %c0_8] : memref<1x128x128xbf16, #tpu.memory_space<vmem>>, vector<1x128x128xbf16>
    %23 = vector.shape_cast %22 : vector<1x128x128xbf16> to vector<128x128xbf16>
    %cst_9 = arith.constant dense<0.000000e+00> : vector<128x32xf32>
    %24 = tpu.matmul %23, %16, %cst_9 {dimension_numbers = #tpu.dot_dimension_numbers<[1], [0], [0], [1], [0, 0, 1, 1], [], []>} : vector<128x128xbf16>, vector<128x32xbf16>, vector<128x32xf32> -> vector<128x32xf32>
    %25 = vector.broadcast %1 : vector<1x32xf32> to vector<128x32xf32>
    %26 = arith.addf %24, %25 : vector<128x32xf32>
    %cst_10 = arith.constant 0.000000e+00 : f32
    %27 = vector.broadcast %cst_10 : f32 to vector<128x32xf32>
    %28 = arith.maximumf %26, %27 : vector<128x32xf32>
    %29 = arith.index_cast %20 : i32 to index
    %c0_11 = arith.constant 0 : index
    %30 = vector.load %arg11[%29, %c0_11] : memref<128x32xf32, #tpu.memory_space<vmem>>, vector<128x32xf32>
    tpu.vector_store %arg11[%29, %c0_11], %28 {strides = array<i32>} : memref<128x32xf32, #tpu.memory_space<vmem>>, vector<128x32xf32>,
    %c1_i32_12 = arith.constant 1 : i32
    %c0_13 = arith.constant 0 : index
    %c0_14 = arith.constant 0 : index
    %31 = vector.load %arg11[%c0_13, %c0_14] : memref<128x32xf32, #tpu.memory_space<vmem>>, vector<128x32xf32>
    %c0_15 = arith.constant 0 : index
    %c0_16 = arith.constant 0 : index
    %32 = vector.load %arg5[%c0_15, %c0_16] : memref<32x32xf32, #tpu.memory_space<vmem>>, vector<32x32xf32>
    %cst_17 = arith.constant dense<0.000000e+00> : vector<128x32xf32>
    %33 = tpu.matmul %31, %32, %cst_17 {dimension_numbers = #tpu.dot_dimension_numbers<[1], [0], [0], [1], [0, 0, 1, 1], [], []>} : vector<128x32xf32>, vector<32x32xf32>, vector<128x32xf32> -> vector<128x32xf32>
    %c0_18 = arith.constant 0 : index
    %c0_19 = arith.constant 0 : index
    %c0_20 = arith.constant 0 : index
    %34 = vector.load %arg12[%c0_18, %c0_19, %c0_20] : memref<2x128x32xf32, #tpu.memory_space<vmem>>, vector<1x128x32xf32>
    %35 = vector.shape_cast %34 : vector<1x128x32xf32> to vector<128x32xf32>
    %36 = vector.shape_cast %33 : vector<128x32xf32> to vector<1x128x32xf32>
    tpu.vector_store %arg12[%c0_18, %c0_19, %c0_20], %36 {strides = array<i32>} : memref<2x128x32xf32, #tpu.memory_space<vmem>>, vector<1x128x32xf32>,
    %37 = arith.truncf %33 : vector<128x32xf32> to vector<128x32xbf16>
    %c0_21 = arith.constant 0 : index
    %c0_22 = arith.constant 0 : index
    %c0_23 = arith.constant 0 : index
    %38 = vector.load %arg13[%c0_21, %c0_22, %c0_23] : memref<2x128x32xbf16, #tpu.memory_space<vmem>>, vector<1x128x32xbf16>
    %39 = vector.shape_cast %38 : vector<1x128x32xbf16> to vector<128x32xbf16>
    %40 = vector.shape_cast %37 : vector<128x32xbf16> to vector<1x128x32xbf16>
    tpu.vector_store %arg13[%c0_21, %c0_22, %c0_23], %40 {strides = array<i32>} : memref<2x128x32xbf16, #tpu.memory_space<vmem>>, vector<1x128x32xbf16>,
    %cst_24 = arith.constant dense<0.000000e+00> : vector<1x128xf32>
    %41 = tpu.matmul %2, %33, %cst_24 {dimension_numbers = #tpu.dot_dimension_numbers<[1], [1], [0], [0], [0, 0, 1, 0], [], []>} : vector<1x32xf32>, vector<128x32xf32>, vector<1x128xf32> -> vector<1x128xf32>
    %c0_i32_25 = arith.constant 0 : i32
    %c1_i32_26 = arith.constant 1 : i32
    %42 = arith.muli %c0_i32_25, %c1_i32_26 : i32
    %c0_i32_27 = arith.constant 0 : i32
    %43 = arith.addi %c0_i32_27, %42 : i32
    %c128_i32_28 = arith.constant 128 : i32
    %44 = arith.muli %43, %c128_i32_28 : i32
    %45 = tpu.assume_multiple %44, 128 : i32
    %c0_29 = arith.constant 0 : index
    %46 = arith.index_cast %45 : i32 to index
    %c0_30 = arith.constant 0 : index
    %47 = vector.load %arg1[%c0_29, %46, %c0_30] : memref<1x128x128xbf16, #tpu.memory_space<vmem>>, vector<1x128x128xbf16>
    %48 = vector.shape_cast %47 : vector<1x128x128xbf16> to vector<128x128xbf16>
    %cst_31 = arith.constant 0.000000e+00 : bf16
    %49 = vector.broadcast %cst_31 : bf16 to vector<128x128xbf16>
    %50 = arith.cmpf ogt, %48, %49 : vector<128x128xbf16>
    %c0_32 = arith.constant 0 : index
    %51 = arith.index_cast %45 : i32 to index
    %c0_33 = arith.constant 0 : index
    %52 = vector.load %arg12[%c0_32, %51, %c0_33] : memref<2x128x32xf32, #tpu.memory_space<vmem>>, vector<1x128x32xf32>
    %53 = vector.shape_cast %52 : vector<1x128x32xf32> to vector<128x32xf32>
    %cst_34 = arith.constant dense<0.000000e+00> : vector<128x1xf32>
    %54 = tpu.matmul %53, %3, %cst_34 {dimension_numbers = #tpu.dot_dimension_numbers<[1], [1], [0], [0], [0, 0, 1, 0], [], []>} : vector<128x32xf32>, vector<1x32xf32>, vector<128x1xf32> -> vector<128x1xf32>
    %55 = vector.broadcast %54 : vector<128x1xf32> to vector<128x128xf32>
    %56 = vector.broadcast %41 : vector<1x128xf32> to vector<128x128xf32>
    %57 = arith.addf %55, %56 : vector<128x128xf32>
    %cst_35 = arith.constant 0.000000e+00 : f32
    %58 = vector.broadcast %cst_35 : f32 to vector<128x128xf32>
    %59 = arith.cmpf ogt, %57, %58 : vector<128x128xf32>
    %cst_36 = arith.constant 2.000000e-01 : f32
    %60 = vector.broadcast %cst_36 : f32 to vector<128x128xf32>
    %61 = arith.mulf %60, %57 : vector<128x128xf32>
    %62 = arith.select %59, %57, %61 : vector<128x128xi1>, vector<128x128xf32>
    %cst_37 = arith.constant -1.000000e+30 : f32
    %63 = vector.broadcast %cst_37 : f32 to vector<128x128xf32>
    %64 = arith.select %50, %62, %63 : vector<128x128xi1>, vector<128x128xf32>
    %cst_38 = arith.constant dense<0xFF800000> : vector<128xf32>
    %65 = vector.multi_reduction <maximumf>, %64, %cst_38 [1] : vector<128x128xf32> to vector<128xf32>
    %66 = vector.shape_cast %65 : vector<128xf32> to vector<128x1xf32>
    %67 = vector.broadcast %66 : vector<128x1xf32> to vector<128x128xf32>
    %68 = arith.subf %64, %67 : vector<128x128xf32>
    %69 = math.exp %68 : vector<128x128xf32>
    %cst_39 = arith.constant dense<0.000000e+00> : vector<128xf32>
    %70 = vector.multi_reduction <add>, %69, %cst_39 [1] : vector<128x128xf32> to vector<128xf32>
    %71 = vector.shape_cast %70 : vector<128xf32> to vector<128x1xf32>
    %72 = tpu.reciprocal %71 {approx = true} : vector<128x1xf32> -> vector<128x1xf32>
    %73 = arith.truncf %69 : vector<128x128xf32> to vector<128x128xbf16>
    %c0_40 = arith.constant 0 : index
    %c0_41 = arith.constant 0 : index
    %c0_42 = arith.constant 0 : index
    %74 = vector.load %arg13[%c0_40, %c0_41, %c0_42] : memref<2x128x32xbf16, #tpu.memory_space<vmem>>, vector<1x128x32xbf16>
    %75 = vector.shape_cast %74 : vector<1x128x32xbf16> to vector<128x32xbf16>
    %cst_43 = arith.constant dense<0.000000e+00> : vector<128x32xf32>
    %76 = tpu.matmul %73, %75, %cst_43 {dimension_numbers = #tpu.dot_dimension_numbers<[1], [0], [0], [1], [0, 0, 1, 1], [], []>} : vector<128x128xbf16>, vector<128x32xbf16>, vector<128x32xf32> -> vector<128x32xf32>
    %77 = vector.broadcast %72 : vector<128x1xf32> to vector<128x32xf32>
    %78 = arith.mulf %76, %77 : vector<128x32xf32>
    %79 = vector.broadcast %4 : vector<1x32xf32> to vector<128x32xf32>
    %80 = arith.addf %78, %79 : vector<128x32xf32>
    %cst_44 = arith.constant 0.000000e+00 : f32
    %81 = vector.broadcast %cst_44 : f32 to vector<128x32xf32>
    %82 = arith.maximumf %80, %81 : vector<128x32xf32>
    %83 = arith.index_cast %45 : i32 to index
    %c0_45 = arith.constant 0 : index
    %84 = vector.load %arg11[%83, %c0_45] : memref<128x32xf32, #tpu.memory_space<vmem>>, vector<128x32xf32>
    tpu.vector_store %arg11[%83, %c0_45], %82 {strides = array<i32>} : memref<128x32xf32, #tpu.memory_space<vmem>>, vector<128x32xf32>,
    %c1_i32_46 = arith.constant 1 : i32
    %c0_47 = arith.constant 0 : index
    %c0_48 = arith.constant 0 : index
    %85 = vector.load %arg11[%c0_47, %c0_48] : memref<128x32xf32, #tpu.memory_space<vmem>>, vector<128x32xf32>
    %c0_49 = arith.constant 0 : index
    %c0_50 = arith.constant 0 : index
    %86 = vector.load %arg6[%c0_49, %c0_50] : memref<32x64xf32, #tpu.memory_space<vmem>>, vector<32x64xf32>
    %cst_51 = arith.constant dense<0.000000e+00> : vector<128x64xf32>
    %87 = tpu.matmul %85, %86, %cst_51 {dimension_numbers = #tpu.dot_dimension_numbers<[1], [0], [0], [1], [0, 0, 1, 1], [], []>} : vector<128x32xf32>, vector<32x64xf32>, vector<128x64xf32> -> vector<128x64xf32>
    %88 = vector.extract_strided_slice %87 {offsets = [0, 0], sizes = [128, 32], strides = [1, 1]} : vector<128x64xf32> to vector<128x32xf32>
    %c0_52 = arith.constant 0 : index
    %c0_53 = arith.constant 0 : index
    %c0_54 = arith.constant 0 : index
    %89 = vector.load %arg12[%c0_52, %c0_53, %c0_54] : memref<2x128x32xf32, #tpu.memory_space<vmem>>, vector<1x128x32xf32>
    %90 = vector.shape_cast %89 : vector<1x128x32xf32> to vector<128x32xf32>
    %91 = vector.shape_cast %88 : vector<128x32xf32> to vector<1x128x32xf32>
    tpu.vector_store %arg12[%c0_52, %c0_53, %c0_54], %91 {strides = array<i32>} : memref<2x128x32xf32, #tpu.memory_space<vmem>>, vector<1x128x32xf32>,
    %92 = vector.extract_strided_slice %87 {offsets = [0, 32], sizes = [128, 32], strides = [1, 1]} : vector<128x64xf32> to vector<128x32xf32>
    %c1 = arith.constant 1 : index
    %c0_55 = arith.constant 0 : index
    %c0_56 = arith.constant 0 : index
    %93 = vector.load %arg12[%c1, %c0_55, %c0_56] : memref<2x128x32xf32, #tpu.memory_space<vmem>>, vector<1x128x32xf32>
    %94 = vector.shape_cast %93 : vector<1x128x32xf32> to vector<128x32xf32>
    %95 = vector.shape_cast %92 : vector<128x32xf32> to vector<1x128x32xf32>
    tpu.vector_store %arg12[%c1, %c0_55, %c0_56], %95 {strides = array<i32>} : memref<2x128x32xf32, #tpu.memory_space<vmem>>, vector<1x128x32xf32>,
    %96 = vector.extract_strided_slice %87 {offsets = [0, 0], sizes = [128, 32], strides = [1, 1]} : vector<128x64xf32> to vector<128x32xf32>
    %97 = arith.truncf %96 : vector<128x32xf32> to vector<128x32xbf16>
    %c0_57 = arith.constant 0 : index
    %c0_58 = arith.constant 0 : index
    %c0_59 = arith.constant 0 : index
    %98 = vector.load %arg13[%c0_57, %c0_58, %c0_59] : memref<2x128x32xbf16, #tpu.memory_space<vmem>>, vector<1x128x32xbf16>
    %99 = vector.shape_cast %98 : vector<1x128x32xbf16> to vector<128x32xbf16>
    %100 = vector.shape_cast %97 : vector<128x32xbf16> to vector<1x128x32xbf16>
    tpu.vector_store %arg13[%c0_57, %c0_58, %c0_59], %100 {strides = array<i32>} : memref<2x128x32xbf16, #tpu.memory_space<vmem>>, vector<1x128x32xbf16>,
    %101 = vector.extract_strided_slice %87 {offsets = [0, 32], sizes = [128, 32], strides = [1, 1]} : vector<128x64xf32> to vector<128x32xf32>
    %102 = arith.truncf %101 : vector<128x32xf32> to vector<128x32xbf16>
    %c1_60 = arith.constant 1 : index
    %c0_61 = arith.constant 0 : index
    %c0_62 = arith.constant 0 : index
    %103 = vector.load %arg13[%c1_60, %c0_61, %c0_62] : memref<2x128x32xbf16, #tpu.memory_space<vmem>>, vector<1x128x32xbf16>
    %104 = vector.shape_cast %103 : vector<1x128x32xbf16> to vector<128x32xbf16>
    %105 = vector.shape_cast %102 : vector<128x32xbf16> to vector<1x128x32xbf16>
    tpu.vector_store %arg13[%c1_60, %c0_61, %c0_62], %105 {strides = array<i32>} : memref<2x128x32xbf16, #tpu.memory_space<vmem>>, vector<1x128x32xbf16>,
    %106 = vector.extract_strided_slice %87 {offsets = [0, 0], sizes = [128, 32], strides = [1, 1]} : vector<128x64xf32> to vector<128x32xf32>
    %cst_63 = arith.constant dense<0.000000e+00> : vector<1x128xf32>
    %107 = tpu.matmul %5, %106, %cst_63 {dimension_numbers = #tpu.dot_dimension_numbers<[1], [1], [0], [0], [0, 0, 1, 0], [], []>} : vector<1x32xf32>, vector<128x32xf32>, vector<1x128xf32> -> vector<1x128xf32>
    %108 = vector.extract_strided_slice %87 {offsets = [0, 32], sizes = [128, 32], strides = [1, 1]} : vector<128x64xf32> to vector<128x32xf32>
    %cst_64 = arith.constant dense<0.000000e+00> : vector<1x128xf32>
    %109 = tpu.matmul %6, %108, %cst_64 {dimension_numbers = #tpu.dot_dimension_numbers<[1], [1], [0], [0], [0, 0, 1, 0], [], []>} : vector<1x32xf32>, vector<128x32xf32>, vector<1x128xf32> -> vector<1x128xf32>
    %cst_65 = arith.constant 0.000000e+00 : f32
    %110 = vector.broadcast %cst_65 : f32 to vector<1x64xf32>
    %c0_i32_66 = arith.constant 0 : i32
    %c128_i32_67 = arith.constant 128 : i32
    %111 = arith.muli %c0_i32_66, %c128_i32_67 : i32
    %112 = tpu.assume_multiple %111, 128 : i32
    %c0_68 = arith.constant 0 : index
    %113 = arith.index_cast %112 : i32 to index
    %c0_69 = arith.constant 0 : index
    %114 = vector.load %arg1[%c0_68, %113, %c0_69] : memref<1x128x128xbf16, #tpu.memory_space<vmem>>, vector<1x128x128xbf16>
    %115 = vector.shape_cast %114 : vector<1x128x128xbf16> to vector<128x128xbf16>
    %cst_70 = arith.constant 0.000000e+00 : bf16
    %116 = vector.broadcast %cst_70 : bf16 to vector<128x128xbf16>
    %117 = arith.cmpf ogt, %115, %116 : vector<128x128xbf16>
    %c0_71 = arith.constant 0 : index
    %118 = arith.index_cast %112 : i32 to index
    %c0_72 = arith.constant 0 : index
    %119 = vector.load %arg12[%c0_71, %118, %c0_72] : memref<2x128x32xf32, #tpu.memory_space<vmem>>, vector<1x128x32xf32>
    %120 = vector.shape_cast %119 : vector<1x128x32xf32> to vector<128x32xf32>
    %cst_73 = arith.constant dense<0.000000e+00> : vector<128x1xf32>
    %121 = tpu.matmul %120, %7, %cst_73 {dimension_numbers = #tpu.dot_dimension_numbers<[1], [1], [0], [0], [0, 0, 1, 0], [], []>} : vector<128x32xf32>, vector<1x32xf32>, vector<128x1xf32> -> vector<128x1xf32>
    %122 = vector.broadcast %121 : vector<128x1xf32> to vector<128x128xf32>
    %123 = vector.broadcast %107 : vector<1x128xf32> to vector<128x128xf32>
    %124 = arith.addf %122, %123 : vector<128x128xf32>
    %cst_74 = arith.constant 0.000000e+00 : f32
    %125 = vector.broadcast %cst_74 : f32 to vector<128x128xf32>
    %126 = arith.cmpf ogt, %124, %125 : vector<128x128xf32>
    %cst_75 = arith.constant 2.000000e-01 : f32
    %127 = vector.broadcast %cst_75 : f32 to vector<128x128xf32>
    %128 = arith.mulf %127, %124 : vector<128x128xf32>
    %129 = arith.select %126, %124, %128 : vector<128x128xi1>, vector<128x128xf32>
    %cst_76 = arith.constant -1.000000e+30 : f32
    %130 = vector.broadcast %cst_76 : f32 to vector<128x128xf32>
    %131 = arith.select %117, %129, %130 : vector<128x128xi1>, vector<128x128xf32>
    %cst_77 = arith.constant dense<0xFF800000> : vector<128xf32>
    %132 = vector.multi_reduction <maximumf>, %131, %cst_77 [1] : vector<128x128xf32> to vector<128xf32>
    %133 = vector.shape_cast %132 : vector<128xf32> to vector<128x1xf32>
    %134 = vector.broadcast %133 : vector<128x1xf32> to vector<128x128xf32>
    %135 = arith.subf %131, %134 : vector<128x128xf32>
    %136 = math.exp %135 : vector<128x128xf32>
    %cst_78 = arith.constant dense<0.000000e+00> : vector<128xf32>
    %137 = vector.multi_reduction <add>, %136, %cst_78 [1] : vector<128x128xf32> to vector<128xf32>
    %138 = vector.shape_cast %137 : vector<128xf32> to vector<128x1xf32>
    %139 = tpu.reciprocal %138 {approx = true} : vector<128x1xf32> -> vector<128x1xf32>
    %140 = arith.truncf %136 : vector<128x128xf32> to vector<128x128xbf16>
    %c0_79 = arith.constant 0 : index
    %c0_80 = arith.constant 0 : index
    %c0_81 = arith.constant 0 : index
    %141 = vector.load %arg13[%c0_79, %c0_80, %c0_81] : memref<2x128x32xbf16, #tpu.memory_space<vmem>>, vector<1x128x32xbf16>
    %142 = vector.shape_cast %141 : vector<1x128x32xbf16> to vector<128x32xbf16>
    %cst_82 = arith.constant dense<0.000000e+00> : vector<128x32xf32>
    %143 = tpu.matmul %140, %142, %cst_82 {dimension_numbers = #tpu.dot_dimension_numbers<[1], [0], [0], [1], [0, 0, 1, 1], [], []>} : vector<128x128xbf16>, vector<128x32xbf16>, vector<128x32xf32> -> vector<128x32xf32>
    %144 = vector.broadcast %139 : vector<128x1xf32> to vector<128x32xf32>
    %145 = arith.mulf %143, %144 : vector<128x32xf32>
    %c1_83 = arith.constant 1 : index
    %146 = arith.index_cast %112 : i32 to index
    %c0_84 = arith.constant 0 : index
    %147 = vector.load %arg12[%c1_83, %146, %c0_84] : memref<2x128x32xf32, #tpu.memory_space<vmem>>, vector<1x128x32xf32>
    %148 = vector.shape_cast %147 : vector<1x128x32xf32> to vector<128x32xf32>
    %cst_85 = arith.constant dense<0.000000e+00> : vector<128x1xf32>
    %149 = tpu.matmul %148, %8, %cst_85 {dimension_numbers = #tpu.dot_dimension_numbers<[1], [1], [0], [0], [0, 0, 1, 0], [], []>} : vector<128x32xf32>, vector<1x32xf32>, vector<128x1xf32> -> vector<128x1xf32>
    %150 = vector.broadcast %149 : vector<128x1xf32> to vector<128x128xf32>
    %151 = vector.broadcast %109 : vector<1x128xf32> to vector<128x128xf32>
    %152 = arith.addf %150, %151 : vector<128x128xf32>
    %cst_86 = arith.constant 0.000000e+00 : f32
    %153 = vector.broadcast %cst_86 : f32 to vector<128x128xf32>
    %154 = arith.cmpf ogt, %152, %153 : vector<128x128xf32>
    %cst_87 = arith.constant 2.000000e-01 : f32
    %155 = vector.broadcast %cst_87 : f32 to vector<128x128xf32>
    %156 = arith.mulf %155, %152 : vector<128x128xf32>
    %157 = arith.select %154, %152, %156 : vector<128x128xi1>, vector<128x128xf32>
    %cst_88 = arith.constant -1.000000e+30 : f32
    %158 = vector.broadcast %cst_88 : f32 to vector<128x128xf32>
    %159 = arith.select %117, %157, %158 : vector<128x128xi1>, vector<128x128xf32>
    %cst_89 = arith.constant dense<0xFF800000> : vector<128xf32>
    %160 = vector.multi_reduction <maximumf>, %159, %cst_89 [1] : vector<128x128xf32> to vector<128xf32>
    %161 = vector.shape_cast %160 : vector<128xf32> to vector<128x1xf32>
    %162 = vector.broadcast %161 : vector<128x1xf32> to vector<128x128xf32>
    %163 = arith.subf %159, %162 : vector<128x128xf32>
    %164 = math.exp %163 : vector<128x128xf32>
    %cst_90 = arith.constant dense<0.000000e+00> : vector<128xf32>
    %165 = vector.multi_reduction <add>, %164, %cst_90 [1] : vector<128x128xf32> to vector<128xf32>
    %166 = vector.shape_cast %165 : vector<128xf32> to vector<128x1xf32>
    %167 = tpu.reciprocal %166 {approx = true} : vector<128x1xf32> -> vector<128x1xf32>
    %168 = arith.truncf %164 : vector<128x128xf32> to vector<128x128xbf16>
    %c1_91 = arith.constant 1 : index
    %c0_92 = arith.constant 0 : index
    %c0_93 = arith.constant 0 : index
    %169 = vector.load %arg13[%c1_91, %c0_92, %c0_93] : memref<2x128x32xbf16, #tpu.memory_space<vmem>>, vector<1x128x32xbf16>
    %170 = vector.shape_cast %169 : vector<1x128x32xbf16> to vector<128x32xbf16>
    %cst_94 = arith.constant dense<0.000000e+00> : vector<128x32xf32>
    %171 = tpu.matmul %168, %170, %cst_94 {dimension_numbers = #tpu.dot_dimension_numbers<[1], [0], [0], [1], [0, 0, 1, 1], [], []>} : vector<128x128xbf16>, vector<128x32xbf16>, vector<128x32xf32> -> vector<128x32xf32>
    %172 = vector.broadcast %167 : vector<128x1xf32> to vector<128x32xf32>
    %173 = arith.mulf %171, %172 : vector<128x32xf32>
    %174 = tpu.concatenate %145, %173 in 1 : vector<128x32xf32>, vector<128x32xf32> -> vector<128x64xf32>
    %175 = vector.broadcast %9 : vector<1x64xf32> to vector<128x64xf32>
    %176 = arith.addf %174, %175 : vector<128x64xf32>
    %cst_95 = arith.constant 0.000000e+00 : f32
    %177 = vector.broadcast %cst_95 : f32 to vector<128x64xf32>
    %178 = arith.maximumf %176, %177 : vector<128x64xf32>
    %c0_96 = arith.constant 0 : index
    %c0_97 = arith.constant 0 : index
    %179 = arith.index_cast %112 : i32 to index
    %180 = vector.load %arg3[%c0_96, %c0_97, %179] : memref<1x1x128xf32, #tpu.memory_space<vmem>>, vector<1x1x128xf32>
    %181 = vector.shape_cast %180 : vector<1x1x128xf32> to vector<1x128xf32>
    %cst_98 = arith.constant dense<0.000000e+00> : vector<1x64xf32>
    %182 = tpu.matmul %181, %178, %cst_98 {dimension_numbers = #tpu.dot_dimension_numbers<[1], [0], [0], [1], [0, 0, 1, 1], [], []>} : vector<1x128xf32>, vector<128x64xf32>, vector<1x64xf32> -> vector<1x64xf32>
    %183 = arith.addf %110, %182 : vector<1x64xf32>
    %c1_i32_99 = arith.constant 1 : i32
    %c0_100 = arith.constant 0 : index
    %c0_101 = arith.constant 0 : index
    %184 = vector.load %arg7[%c0_100, %c0_101] : memref<64x128xf32, #tpu.memory_space<vmem>>, vector<64x128xf32>
    %cst_102 = arith.constant dense<0.000000e+00> : vector<1x128xf32>
    %185 = tpu.matmul %183, %184, %cst_102 {dimension_numbers = #tpu.dot_dimension_numbers<[1], [0], [0], [1], [0, 0, 1, 1], [], []>} : vector<1x64xf32>, vector<64x128xf32>, vector<1x128xf32> -> vector<1x128xf32>
    %186 = arith.addf %185, %10 : vector<1x128xf32>
    %cst_103 = arith.constant 0.000000e+00 : f32
    %187 = vector.broadcast %cst_103 : f32 to vector<1x128xf32>
    %188 = arith.maximumf %186, %187 : vector<1x128xf32>
    %c0_104 = arith.constant 0 : index
    %c0_105 = arith.constant 0 : index
    %189 = vector.load %arg8[%c0_104, %c0_105] : memref<128x128xf32, #tpu.memory_space<vmem>>, vector<128x128xf32>
    %cst_106 = arith.constant dense<0.000000e+00> : vector<1x128xf32>
    %190 = tpu.matmul %188, %189, %cst_106 {dimension_numbers = #tpu.dot_dimension_numbers<[1], [0], [0], [1], [0, 0, 1, 1], [], []>} : vector<1x128xf32>, vector<128x128xf32>, vector<1x128xf32> -> vector<1x128xf32>
    %191 = arith.addf %190, %11 : vector<1x128xf32>
    %cst_107 = arith.constant 0.000000e+00 : f32
    %192 = vector.broadcast %cst_107 : f32 to vector<1x128xf32>
    %193 = arith.maximumf %191, %192 : vector<1x128xf32>
    %c0_108 = arith.constant 0 : index
    %c0_109 = arith.constant 0 : index
    %c0_110 = arith.constant 0 : index
    %194 = vector.load %arg10[%c0_108, %c0_109, %c0_110] : memref<1x1x128xf32, #tpu.memory_space<vmem>>, vector<1x1x128xf32>
    %195 = vector.shape_cast %194 : vector<1x1x128xf32> to vector<1x128xf32>
    %196 = vector.shape_cast %193 : vector<1x128xf32> to vector<1x1x128xf32>
    tpu.vector_store %arg10[%c0_108, %c0_109, %c0_110], %196 {strides = array<i32>} : memref<1x1x128xf32, #tpu.memory_space<vmem>>, vector<1x1x128xf32>,
    return
  }
  func.func @transform_0(%arg0: i32) -> (i32, i32, i32) {
    %c0_i32 = arith.constant 0 : i32
    %c0_i32_0 = arith.constant 0 : i32
    %c0_i32_1 = arith.constant 0 : i32
    return %arg0, %c0_i32, %c0_i32_0 : i32, i32, i32
  }
  func.func @transform_1(%arg0: i32) -> (i32, i32, i32) {
    %c0_i32 = arith.constant 0 : i32
    %c0_i32_0 = arith.constant 0 : i32
    %c0_i32_1 = arith.constant 0 : i32
    return %arg0, %c0_i32, %c0_i32_0 : i32, i32, i32
  }
  func.func @transform_2(%arg0: i32) -> (i32, i32, i32) {
    %c0_i32 = arith.constant 0 : i32
    %c0_i32_0 = arith.constant 0 : i32
    %c0_i32_1 = arith.constant 0 : i32
    return %arg0, %c0_i32, %c0_i32_0 : i32, i32, i32
  }
  func.func @transform_3(%arg0: i32) -> (i32, i32) {
    %c0_i32 = arith.constant 0 : i32
    %c0_i32_0 = arith.constant 0 : i32
    %c0_i32_1 = arith.constant 0 : i32
    return %c0_i32, %c0_i32_0 : i32, i32
  }
  func.func @transform_4(%arg0: i32) -> (i32, i32) {
    %c0_i32 = arith.constant 0 : i32
    %c0_i32_0 = arith.constant 0 : i32
    %c0_i32_1 = arith.constant 0 : i32
    return %c0_i32, %c0_i32_0 : i32, i32
  }
  func.func @transform_5(%arg0: i32) -> (i32, i32) {
    %c0_i32 = arith.constant 0 : i32
    %c0_i32_0 = arith.constant 0 : i32
    %c0_i32_1 = arith.constant 0 : i32
    return %c0_i32, %c0_i32_0 : i32, i32
  }
  func.func @transform_6(%arg0: i32) -> (i32, i32) {
    %c0_i32 = arith.constant 0 : i32
    %c0_i32_0 = arith.constant 0 : i32
    %c0_i32_1 = arith.constant 0 : i32
    return %c0_i32, %c0_i32_0 : i32, i32
  }
  func.func @transform_7(%arg0: i32) -> (i32, i32) {
    %c0_i32 = arith.constant 0 : i32
    %c0_i32_0 = arith.constant 0 : i32
    %c0_i32_1 = arith.constant 0 : i32
    return %c0_i32, %c0_i32_0 : i32, i32
  }
  func.func @transform_8(%arg0: i32) -> (i32, i32) {
    %c0_i32 = arith.constant 0 : i32
    %c0_i32_0 = arith.constant 0 : i32
    %c0_i32_1 = arith.constant 0 : i32
    return %c0_i32, %c0_i32_0 : i32, i32
  }
  func.func @transform_9(%arg0: i32) -> (i32, i32, i32) {
    %c0_i32 = arith.constant 0 : i32
    %c0_i32_0 = arith.constant 0 : i32
    %c0_i32_1 = arith.constant 0 : i32
    return %arg0, %c0_i32, %c0_i32_0 : i32, i32, i32
  }
}

</mosaic_0001>

<llo_original>
// kernel: tpu_custom_call.1
$region0: #{tpu_custom_call.1}
  #allocation0 [shape = 'u32[]', space=smem, size = 0x4, offset = 0x4, fixed_abs, tag = 'smem constant byte address 0x4 - core index']
  #allocation1 [shape = 'u32[144,128]{1,0:T(1,128)}', space=vmem, size = 0x12000, scoped, tag = 'internal scratch']
  #allocation2 [shape = 'f32[128,32]{1,0:T(8,128)}', space=vmem, size = 0x10000, scoped, tag = 'scratch operand']
  #allocation3 [shape = 'f32[2,128,32]{2,1,0:T(8,128)}', space=vmem, size = 0x20000, scoped, tag = 'scratch operand']
  #allocation4 [shape = 'bf16[2,128,32]{2,1,0:T(8,128)(2,1)}', space=vmem, size = 0x10000, scoped, tag = 'scratch operand']
  %s0 = inlined_call_operand.vmem [shape: bf16[2,128,128], index: 0, kind: input, shape index: {}]
  %s1 = inlined_call_operand.vmem [shape: f32[2,128,32], index: 1, kind: input, shape index: {}]
  %s2 = inlined_call_operand.vmem [shape: f32[2,1,128], index: 2, kind: input, shape index: {}]
  %s3 = inlined_call_operand.hbm [shape: f32[32,32], index: 3, kind: input, shape index: {}]
  %s4 = inlined_call_operand.hbm [shape: f32[32,32], index: 4, kind: input, shape index: {}]
  %s5 = inlined_call_operand.hbm [shape: f32[32,64], index: 5, kind: input, shape index: {}]
  %s6 = inlined_call_operand.vmem [shape: f32[64,128], index: 6, kind: input, shape index: {}]
  %s7 = inlined_call_operand.vmem [shape: f32[128,128], index: 7, kind: input, shape index: {}]
  %s8 = inlined_call_operand.hbm [shape: f32[16,128], index: 8, kind: input, shape index: {}]
  %s9 = inlined_call_operand.hbm [shape: f32[2,1,128], index: 9, kind: output, shape index: {}]
  %s10 = sld [smem:[#allocation0]]
  $region85: #{tpu_custom_call.1} parent=0
    _
  %s12 = ssub.s32 1, %s10
  %s13 = scalar_select 0, %s12, %s10
  $region1: #{tpu_custom_call.1} parent=0
    #allocation5 [shape = 'u8[16384]{0}', space=vmem, size = 0x4000, scoped, tag = 'input window, operand 3, single buffered']
    #allocation6 [shape = 's32[2]{0}', space=sflag, size = 0x8, scoped, tag = 'scoped memory for tpu_custom_call.1']
    #allocation7 [shape = 's32[2]{0}', space=sflag, size = 0x8, scoped, tag = 'scoped memory for tpu_custom_call.1']
    #allocation8 [shape = 'u8[16384]{0}', space=vmem, size = 0x4000, scoped, tag = 'input window, operand 4, single buffered']
    #allocation9 [shape = 's32[1]{0}', space=sflag, size = 0x4, scoped, tag = 'scoped memory for tpu_custom_call.1']
    #allocation10 [shape = 'u8[16384]{0}', space=vmem, size = 0x4000, scoped, tag = 'input window, operand 5, single buffered']
    #allocation11 [shape = 'u8[8192]{0}', space=vmem, size = 0x2000, scoped, tag = 'input window, operand 8, single buffered']
    #allocation12 [shape = 's32[1]{0}', space=sflag, size = 0x4, scoped, tag = 'scoped memory for tpu_custom_call.1']
    #allocation13 [shape = 'u8[1024]{0}', space=vmem, size = 0x400, scoped, tag = 'output window, operand 0']
    %14 = vsyncpa [#allocation6], 0
    %15 = vsyncpa [#allocation9], 0
    %16 = vsyncpa [#allocation12], 0
    %17 = vsyncpa [#allocation7], 0
    %s18 = scalar_lea.sflag [#allocation7], 1
    %19 = vsyncpa %s18, 0
    loop: start=0, step=1, limit=4
    $region2: #{tpu_custom_call.1} parent=1 // loop_pre_header
      _
    $region3: #{tpu_custom_call.1} parent=1 // loop_header
      %s21 = sphi 0, %s25
      %p22 = scmp.ge.s32.totalorder %s21, 4
      %s31 = sphi 0, %s33
      %s34 = sphi 0, %s31
      %s35 = sphi 0, %s34
      %s51 = sphi 0, %s35
      %s57 = sphi 0, %s59
      %s60 = sphi 0, %s57
      %s61 = sphi 0, %s60
      %s77 = sphi 0, %s61
      %s83 = sphi 0, %s85
      %s86 = sphi 0, %s83
      %s87 = sphi 0, %s86
      %s103 = sphi 0, %s87
      %s107 = sphi 0, %s107
      %s109 = sphi 0, %s107
      %s110 = sphi 0, %s109
      %s124 = sphi 0, %s110
      %s128 = sphi 0, %s128
      %s130 = sphi 0, %s128
      %s131 = sphi 0, %s130
      %s145 = sphi 0, %s131
      %s149 = sphi 0, %s149
      %s151 = sphi 0, %s149
      %s152 = sphi 0, %s151
      %s166 = sphi 0, %s152
      %s170 = sphi 0, %s170
      %s172 = sphi 0, %s170
      %s173 = sphi 0, %s172
      %s187 = sphi 0, %s173
      %s191 = sphi 0, %s191
      %s193 = sphi 0, %s191
      %s194 = sphi 0, %s193
      %s208 = sphi 0, %s194
      %s212 = sphi 0, %s212
      %s214 = sphi 0, %s212
      %s215 = sphi 0, %s214
      %s229 = sphi 0, %s215
      %s235 = sphi 0, %s237
      %s238 = sphi 0, %s235
      %s239 = sphi 0, %s238
      %s255 = sphi 0, %s239
    $region4: #{tpu_custom_call.1} parent=1 // loop_header_branch
      %24 = sbr.rel (%p22) target = $region8
    $region5: #{tpu_custom_call.1} parent=1 // loop_body
      %s26 = ssub.s32 %s21, 1
      %s27 = ssub.s32 %s21, 2
      %s28 = sadd.s32 %s21, 1
      %s29 = ssub.s32 %s21, %s28
      %p30 = scmp.eq.s32.totalorder %s29, 0
      %s32 = sadd.s32 %s31, 1
      %s33 = scalar_select %p30, %s31, %s32
      %p36 = pneg %p30
      %p37 = scmp.eq.s32.totalorder %s21, 1
      %p38 = por %p36, %p37
      %p39 = scmp.ne.s32.totalorder %s31, %s34
      %p40 = scmp.eq.s32.totalorder %s21, 0
      %p41 = por %p39, %p40
      %p42 = scmp.ne.s32.totalorder %s31, %s34
      %p43 = scmp.eq.s32.totalorder %s26, 1
      %p44 = por %p42, %p43
      %p45 = scmp.ne.s32.totalorder %s34, %s35
      %p46 = scmp.eq.s32.totalorder %s26, 0
      %p47 = por %p45, %p46
      %p48 = scmp.ne.s32.totalorder %s34, %s35
      %p49 = scmp.eq.s32.totalorder %s27, 1
      %p50 = por %p48, %p49
      %p52 = scmp.ne.s32.totalorder %s35, %s51
      %p53 = scmp.eq.s32.totalorder %s27, 0
      %p54 = por %p52, %p53
      %s55 = ssub.s32 %s21, %s28
      %p56 = scmp.eq.s32.totalorder %s55, 0
      %s58 = sadd.s32 %s57, 1
      %s59 = scalar_select %p56, %s57, %s58
      %p62 = pneg %p56
      %p63 = scmp.eq.s32.totalorder %s21, 1
      %p64 = por %p62, %p63
      %p65 = scmp.ne.s32.totalorder %s57, %s60
      %p66 = scmp.eq.s32.totalorder %s21, 0
      %p67 = por %p65, %p66
      %p68 = scmp.ne.s32.totalorder %s57, %s60
      %p69 = scmp.eq.s32.totalorder %s26, 1
      %p70 = por %p68, %p69
      %p71 = scmp.ne.s32.totalorder %s60, %s61
      %p72 = scmp.eq.s32.totalorder %s26, 0
      %p73 = por %p71, %p72
      %p74 = scmp.ne.s32.totalorder %s60, %s61
      %p75 = scmp.eq.s32.totalorder %s27, 1
      %p76 = por %p74, %p75
      %p78 = scmp.ne.s32.totalorder %s61, %s77
      %p79 = scmp.eq.s32.totalorder %s27, 0
      %p80 = por %p78, %p79
      %s81 = ssub.s32 %s21, %s28
      %p82 = scmp.eq.s32.totalorder %s81, 0
      %s84 = sadd.s32 %s83, 1
      %s85 = scalar_select %p82, %s83, %s84
      %p88 = pneg %p82
      %p89 = scmp.eq.s32.totalorder %s21, 1
      %p90 = por %p88, %p89
      %p91 = scmp.ne.s32.totalorder %s83, %s86
      %p92 = scmp.eq.s32.totalorder %s21, 0
      %p93 = por %p91, %p92
      %p94 = scmp.ne.s32.totalorder %s83, %s86
      %p95 = scmp.eq.s32.totalorder %s26, 1
      %p96 = por %p94, %p95
      %p97 = scmp.ne.s32.totalorder %s86, %s87
      %p98 = scmp.eq.s32.totalorder %s26, 0
      %p99 = por %p97, %p98
      %p100 = scmp.ne.s32.totalorder %s86, %s87
      %p101 = scmp.eq.s32.totalorder %s27, 1
      %p102 = por %p100, %p101
      %p104 = scmp.ne.s32.totalorder %s87, %s103
      %p105 = scmp.eq.s32.totalorder %s27, 0
      %p106 = por %p104, %p105
      %s108 = sadd.s32 %s107, 1
      %p111 = scmp.eq.s32.totalorder %s21, 1
      %p112 = scmp.ne.s32.totalorder %s107, %s109
      %p113 = scmp.eq.s32.totalorder %s21, 0
      %p114 = por %p112, %p113
      %p115 = scmp.ne.s32.totalorder %s107, %s109
      %p116 = scmp.eq.s32.totalorder %s26, 1
      %p117 = por %p115, %p116
      %p118 = scmp.ne.s32.totalorder %s109, %s110
      %p119 = scmp.eq.s32.totalorder %s26, 0
      %p120 = por %p118, %p119
      %p121 = scmp.ne.s32.totalorder %s109, %s110
      %p122 = scmp.eq.s32.totalorder %s27, 1
      %p123 = por %p121, %p122
      %p125 = scmp.ne.s32.totalorder %s110, %s124
      %p126 = scmp.eq.s32.totalorder %s27, 0
      %p127 = por %p125, %p126
      %s129 = sadd.s32 %s128, 1
      %p132 = scmp.eq.s32.totalorder %s21, 1
      %p133 = scmp.ne.s32.totalorder %s128, %s130
      %p134 = scmp.eq.s32.totalorder %s21, 0
      %p135 = por %p133, %p134
      %p136 = scmp.ne.s32.totalorder %s128, %s130
      %p137 = scmp.eq.s32.totalorder %s26, 1
      %p138 = por %p136, %p137
      %p139 = scmp.ne.s32.totalorder %s130, %s131
      %p140 = scmp.eq.s32.totalorder %s26, 0
      %p141 = por %p139, %p140
      %p142 = scmp.ne.s32.totalorder %s130, %s131
      %p143 = scmp.eq.s32.totalorder %s27, 1
      %p144 = por %p142, %p143
      %p146 = scmp.ne.s32.totalorder %s131, %s145
      %p147 = scmp.eq.s32.totalorder %s27, 0
      %p148 = por %p146, %p147
      %s150 = sadd.s32 %s149, 1
      %p153 = scmp.eq.s32.totalorder %s21, 1
      %p154 = scmp.ne.s32.totalorder %s149, %s151
      %p155 = scmp.eq.s32.totalorder %s21, 0
      %p156 = por %p154, %p155
      %p157 = scmp.ne.s32.totalorder %s149, %s151
      %p158 = scmp.eq.s32.totalorder %s26, 1
      %p159 = por %p157, %p158
      %p160 = scmp.ne.s32.totalorder %s151, %s152
      %p161 = scmp.eq.s32.totalorder %s26, 0
      %p162 = por %p160, %p161
      %p163 = scmp.ne.s32.totalorder %s151, %s152
      %p164 = scmp.eq.s32.totalorder %s27, 1
      %p165 = por %p163, %p164
      %p167 = scmp.ne.s32.totalorder %s152, %s166
      %p168 = scmp.eq.s32.totalorder %s27, 0
      %p169 = por %p167, %p168
      %s171 = sadd.s32 %s170, 1
      %p174 = scmp.eq.s32.totalorder %s21, 1
      %p175 = scmp.ne.s32.totalorder %s170, %s172
      %p176 = scmp.eq.s32.totalorder %s21, 0
      %p177 = por %p175, %p176
      %p178 = scmp.ne.s32.totalorder %s170, %s172
      %p179 = scmp.eq.s32.totalorder %s26, 1
      %p180 = por %p178, %p179
      %p181 = scmp.ne.s32.totalorder %s172, %s173
      %p182 = scmp.eq.s32.totalorder %s26, 0
      %p183 = por %p181, %p182
      %p184 = scmp.ne.s32.totalorder %s172, %s173
      %p185 = scmp.eq.s32.totalorder %s27, 1
      %p186 = por %p184, %p185
      %p188 = scmp.ne.s32.totalorder %s173, %s187
      %p189 = scmp.eq.s32.totalorder %s27, 0
      %p190 = por %p188, %p189
      %s192 = sadd.s32 %s191, 1
      %p195 = scmp.eq.s32.totalorder %s21, 1
      %p196 = scmp.ne.s32.totalorder %s191, %s193
      %p197 = scmp.eq.s32.totalorder %s21, 0
      %p198 = por %p196, %p197
      %p199 = scmp.ne.s32.totalorder %s191, %s193
      %p200 = scmp.eq.s32.totalorder %s26, 1
      %p201 = por %p199, %p200
      %p202 = scmp.ne.s32.totalorder %s193, %s194
      %p203 = scmp.eq.s32.totalorder %s26, 0
      %p204 = por %p202, %p203
      %p205 = scmp.ne.s32.totalorder %s193, %s194
      %p206 = scmp.eq.s32.totalorder %s27, 1
      %p207 = por %p205, %p206
      %p209 = scmp.ne.s32.totalorder %s194, %s208
      %p210 = scmp.eq.s32.totalorder %s27, 0
      %p211 = por %p209, %p210
      %s213 = sadd.s32 %s212, 1
      %p216 = scmp.eq.s32.totalorder %s21, 1
      %p217 = scmp.ne.s32.totalorder %s212, %s214
      %p218 = scmp.eq.s32.totalorder %s21, 0
      %p219 = por %p217, %p218
      %p220 = scmp.ne.s32.totalorder %s212, %s214
      %p221 = scmp.eq.s32.totalorder %s26, 1
      %p222 = por %p220, %p221
      %p223 = scmp.ne.s32.totalorder %s214, %s215
      %p224 = scmp.eq.s32.totalorder %s26, 0
      %p225 = por %p223, %p224
      %p226 = scmp.ne.s32.totalorder %s214, %s215
      %p227 = scmp.eq.s32.totalorder %s27, 1
      %p228 = por %p226, %p227
      %p230 = scmp.ne.s32.totalorder %s215, %s229
      %p231 = scmp.eq.s32.totalorder %s27, 0
      %p232 = por %p230, %p231
      %s233 = ssub.s32 %s21, %s28
      %p234 = scmp.eq.s32.totalorder %s233, 0
      %s236 = sadd.s32 %s235, 1
      %s237 = scalar_select %p234, %s235, %s236
      %p240 = pneg %p234
      %p241 = scmp.eq.s32.totalorder %s21, 1
      %p242 = por %p240, %p241
      %p243 = scmp.ne.s32.totalorder %s235, %s238
      %p244 = scmp.eq.s32.totalorder %s21, 0
      %p245 = por %p243, %p244
      %p246 = scmp.ne.s32.totalorder %s235, %s238
      %p247 = scmp.eq.s32.totalorder %s26, 1
      %p248 = por %p246, %p247
      %p249 = scmp.ne.s32.totalorder %s238, %s239
      %p250 = scmp.eq.s32.totalorder %s26, 0
      %p251 = por %p249, %p250
      %p252 = scmp.ne.s32.totalorder %s238, %s239
      %p253 = scmp.eq.s32.totalorder %s27, 1
      %p254 = por %p252, %p253
      %p256 = scmp.ne.s32.totalorder %s239, %s255
      %p257 = scmp.eq.s32.totalorder %s27, 0
      %p258 = por %p256, %p257
      %p259 = scmp.le.s32.totalorder 1, %s21
      %p260 = scmp.lt.s32.totalorder %s21, 3
      %p261 = pnand %p259, %p260
      %p262 = pneg %p261
      // Predicated region
      $region9: #{tpu_custom_call.1} parent=5 // pred_check
        _
      $region10: #{tpu_custom_call.1} parent=5 // pred_check_branch
        %264 = sbr.rel (%p261) target = $region12
      $region11: #{tpu_custom_call.1} parent=5 // pred_region
        %s265 = ssub.s32 %s21, 1
        // Predicated region
        $region13: #{tpu_custom_call.1} parent=11 // pred_check
          %p266 = pneg %p120
        $region14: #{tpu_custom_call.1} parent=11 // pred_check_branch
          %268 = sbr.rel (%p266) target = $region16
        $region15: #{tpu_custom_call.1} parent=11 // pred_region
          %s270 = ssub.s32 512, 512
          %271 = vsyncadd [#allocation6], %s270
          %s272 = sshll.u32 [#allocation5], 4
          %s273 = int_to_ptr.vmem [resolvable:$true] %s272
          %278 = dma.hbm_to_vmem [thread:$0]  %s3, 512, %s273, [#allocation6], 128, 128, 8
        $region16: #{tpu_custom_call.1} parent=11 // pred_fallthru
          _
        // Predicated region
        $region17: #{tpu_custom_call.1} parent=11 // pred_check
          %p279 = pneg %p141
        $region18: #{tpu_custom_call.1} parent=11 // pred_check_branch
          %281 = sbr.rel (%p279) target = $region20
        $region19: #{tpu_custom_call.1} parent=11 // pred_region
          %s283 = ssub.s32 512, 512
          %284 = vsyncadd [#allocation9], %s283
          %s285 = sshll.u32 [#allocation8], 4
          %s286 = int_to_ptr.vmem [resolvable:$true] %s285
          %291 = dma.hbm_to_vmem [thread:$0]  %s4, 512, %s286, [#allocation9], 128, 128, 8
        $region20: #{tpu_custom_call.1} parent=11 // pred_fallthru
          _
        // Predicated region
        $region21: #{tpu_custom_call.1} parent=11 // pred_check
          %p292 = pneg %p162
        $region22: #{tpu_custom_call.1} parent=11 // pred_check_branch
          %294 = sbr.rel (%p292) target = $region24
        $region23: #{tpu_custom_call.1} parent=11 // pred_region
          %s296 = ssub.s32 512, 512
          %297 = vsyncadd [#allocation9], %s296
          %s298 = sshll.u32 [#allocation10], 4
          %s299 = int_to_ptr.vmem [resolvable:$true] %s298
          %304 = dma.hbm_to_vmem [thread:$0]  %s5, 512, %s299, [#allocation9], 128, 128, 8
        $region24: #{tpu_custom_call.1} parent=11 // pred_fallthru
          _
        // Predicated region
        $region25: #{tpu_custom_call.1} parent=11 // pred_check
          %p305 = pneg %p183
        $region26: #{tpu_custom_call.1} parent=11 // pred_check_branch
          %307 = sbr.rel (%p305) target = $region28
        $region27: #{tpu_custom_call.1} parent=11 // pred_region
          _
        $region28: #{tpu_custom_call.1} parent=11 // pred_fallthru
          _
        // Predicated region
        $region29: #{tpu_custom_call.1} parent=11 // pred_check
          %p308 = pneg %p204
        $region30: #{tpu_custom_call.1} parent=11 // pred_check_branch
          %310 = sbr.rel (%p308) target = $region32
        $region31: #{tpu_custom_call.1} parent=11 // pred_region
          _
        $region32: #{tpu_custom_call.1} parent=11 // pred_fallthru
          _
        // Predicated region
        $region33: #{tpu_custom_call.1} parent=11 // pred_check
          %p311 = pneg %p225
        $region34: #{tpu_custom_call.1} parent=11 // pred_check_branch
          %313 = sbr.rel (%p311) target = $region36
        $region35: #{tpu_custom_call.1} parent=11 // pred_region
          %s315 = ssub.s32 256, 256
          %316 = vsyncadd [#allocation12], %s315
          %s317 = sshll.u32 [#allocation11], 4
          %s318 = int_to_ptr.vmem [resolvable:$true] %s317
          %323 = dma.hbm_to_vmem [thread:$0]  %s8, 256, %s318, [#allocation12], 128, 128, 8
        $region36: #{tpu_custom_call.1} parent=11 // pred_fallthru
          _
      $region12: #{tpu_custom_call.1} parent=5 // pred_fallthru
        _
      %p324 = scmp.lt.s32.totalorder %s21, 2
      // Predicated region
      $region37: #{tpu_custom_call.1} parent=5 // pred_check
        %p325 = pneg %p324
      $region38: #{tpu_custom_call.1} parent=5 // pred_check_branch
        %327 = sbr.rel (%p325) target = $region40
      $region39: #{tpu_custom_call.1} parent=5 // pred_region
        // Predicated region
        $region41: #{tpu_custom_call.1} parent=39 // pred_check
          %p328 = pneg %p41
        $region42: #{tpu_custom_call.1} parent=39 // pred_check_branch
          %330 = sbr.rel (%p328) target = $region44
        $region43: #{tpu_custom_call.1} parent=39 // pred_region
          %p331 = scmp.lt.s32.totalorder %s21, 1
          %s332 = scalar_select %p331, %s21, 1
          %s333 = smul.addr %s332, 16
          %s334 = smul.addr %s333, 4
          %s335 = scalar_lea.vmem %s0, %s334
        $region44: #{tpu_custom_call.1} parent=39 // pred_fallthru
          _
        // Predicated region
        $region45: #{tpu_custom_call.1} parent=39 // pred_check
          %p336 = pneg %p67
        $region46: #{tpu_custom_call.1} parent=39 // pred_check_branch
          %338 = sbr.rel (%p336) target = $region48
        $region47: #{tpu_custom_call.1} parent=39 // pred_region
          %p339 = scmp.lt.s32.totalorder %s21, 1
          %s340 = scalar_select %p339, %s21, 1
          %s341 = smul.addr %s340, 16
          %s342 = smul.addr %s341, 8
          %s343 = scalar_lea.vmem %s1, %s342
        $region48: #{tpu_custom_call.1} parent=39 // pred_fallthru
          _
        // Predicated region
        $region49: #{tpu_custom_call.1} parent=39 // pred_check
          %p344 = pneg %p93
        $region50: #{tpu_custom_call.1} parent=39 // pred_check_branch
          %346 = sbr.rel (%p344) target = $region52
        $region51: #{tpu_custom_call.1} parent=39 // pred_region
          %p347 = scmp.lt.s32.totalorder %s21, 1
          %s348 = scalar_select %p347, %s21, 1
          %s349 = scalar_lea.vmem %s2, %s348
        $region52: #{tpu_custom_call.1} parent=39 // pred_fallthru
          _
      $region40: #{tpu_custom_call.1} parent=5 // pred_fallthru
        _
      %p350 = scmp.le.s32.totalorder 1, %s21
      %p351 = scmp.lt.s32.totalorder %s21, 3
      %p352 = pnand %p350, %p351
      %p353 = pneg %p352
      // Predicated region
      $region53: #{tpu_custom_call.1} parent=5 // pred_check
        _
      $region54: #{tpu_custom_call.1} parent=5 // pred_check_branch
        %355 = sbr.rel (%p352) target = $region56
      $region55: #{tpu_custom_call.1} parent=5 // pred_region
        %s356 = ssub.s32 %s21, 1
        // Predicated region
        $region57: #{tpu_custom_call.1} parent=55 // pred_check
          %p357 = pneg %p120
        $region58: #{tpu_custom_call.1} parent=55 // pred_check_branch
          %359 = sbr.rel (%p357) target = $region60
        $region59: #{tpu_custom_call.1} parent=55 // pred_region
          %360 = dma.done [#allocation6], 512
        $region60: #{tpu_custom_call.1} parent=55 // pred_fallthru
          _
        // Predicated region
        $region61: #{tpu_custom_call.1} parent=55 // pred_check
          %p361 = pneg %p141
        $region62: #{tpu_custom_call.1} parent=55 // pred_check_branch
          %363 = sbr.rel (%p361) target = $region64
        $region63: #{tpu_custom_call.1} parent=55 // pred_region
          %364 = dma.done [#allocation9], 512
        $region64: #{tpu_custom_call.1} parent=55 // pred_fallthru
          _
        // Predicated region
        $region65: #{tpu_custom_call.1} parent=55 // pred_check
          %p365 = pneg %p162
        $region66: #{tpu_custom_call.1} parent=55 // pred_check_branch
          %367 = sbr.rel (%p365) target = $region68
        $region67: #{tpu_custom_call.1} parent=55 // pred_region
          %368 = dma.done [#allocation9], 512
        $region68: #{tpu_custom_call.1} parent=55 // pred_fallthru
          _
        // Predicated region
        $region69: #{tpu_custom_call.1} parent=55 // pred_check
          %p369 = pneg %p225
        $region70: #{tpu_custom_call.1} parent=55 // pred_check_branch
          %371 = sbr.rel (%p369) target = $region72
        $region71: #{tpu_custom_call.1} parent=55 // pred_region
          %372 = dma.done [#allocation12], 256
        $region72: #{tpu_custom_call.1} parent=55 // pred_fallthru
          _
        %p373 = scmp.lt.s32.totalorder %s26, 1
        %s374 = scalar_select %p373, %s26, 1
        %s375 = smul.addr %s374, 16
        %s376 = smul.addr %s375, 4
        %s377 = scalar_lea.vmem %s0, %s376
        %p378 = pneg %p47
        %p379 = pneg %p44
        %p380 = scmp.lt.s32.totalorder %s26, 1
        %s381 = scalar_select %p380, %s26, 1
        %s382 = smul.addr %s381, 16
        %s383 = smul.addr %s382, 8
        %s384 = scalar_lea.vmem %s1, %s383
        %p385 = pneg %p73
        %p386 = pneg %p70
        %p387 = scmp.lt.s32.totalorder %s26, 1
        %s388 = scalar_select %p387, %s26, 1
        %s389 = scalar_lea.vmem %s2, %s388
        %p390 = pneg %p99
        %p391 = pneg %p96
        %p392 = pneg %p120
        %p393 = pneg %p117
        %p394 = pneg %p141
        %p395 = pneg %p138
        %p396 = pneg %p162
        %p397 = pneg %p159
        %p398 = pneg %p183
        %p399 = pneg %p180
        %p400 = pneg %p204
        %p401 = pneg %p201
        %p402 = pneg %p225
        %p403 = pneg %p222
        %p404 = pneg %p251
        %p405 = pneg %p248
        %s406 = sand.u32 %s238, 1
        %s407 = scalar_lea.sflag [#allocation7], %s406
        %s408 = sand.u32 %s238, 1
        %s409 = scalar_lea.vmem [#allocation13], %s408
        %p410 = scmp.lt.s32.totalorder %s26, 1
        %s411 = scalar_select %p410, %s26, 1
        %s412 = smul.addr %s411, 16
        %s413 = smul.addr %s412, 4
        %s414 = scalar_lea.vmem %s0, %s413
        %p415 = scmp.lt.s32.totalorder %s26, 1
        %s416 = scalar_select %p415, %s26, 1
        %s417 = smul.addr %s416, 16
        %s418 = smul.addr %s417, 8
        %s419 = scalar_lea.vmem %s1, %s418
        %p420 = scmp.lt.s32.totalorder %s26, 1
        %s421 = scalar_select %p420, %s26, 1
        %s422 = scalar_lea.vmem %s2, %s421
        %v426 = vld [vmem:[#allocation11] sm:$0xff]
        %v427 = vld [vmem:[#allocation11 + $0x8] sm:$0xff]
        %v428 = vld [vmem:[%s419] sm:$0xff]
        %v429 = vld [vmem:[%s419 + $0x8] sm:$0xff]
        %v430 = vld [vmem:[%s419 + $0x10] sm:$0xff]
        %v431 = vld [vmem:[%s419 + $0x18] sm:$0xff]
        %v432 = vld [vmem:[%s419 + $0x20] sm:$0xff]
        %v433 = vld [vmem:[%s419 + $0x28] sm:$0xff]
        %v434 = vld [vmem:[%s419 + $0x30] sm:$0xff]
        %v435 = vld [vmem:[%s419 + $0x38] sm:$0xff]
        %v436 = vld [vmem:[%s419 + $0x40] sm:$0xff]
        %v437 = vld [vmem:[%s419 + $0x48] sm:$0xff]
        %v438 = vld [vmem:[%s419 + $0x50] sm:$0xff]
        %v439 = vld [vmem:[%s419 + $0x58] sm:$0xff]
        %v440 = vld [vmem:[%s419 + $0x60] sm:$0xff]
        %v441 = vld [vmem:[%s419 + $0x68] sm:$0xff]
        %v442 = vld [vmem:[%s419 + $0x70] sm:$0xff]
        %v443 = vld [vmem:[%s419 + $0x78] sm:$0xff]
        %v444 = vld [vmem:[#allocation5] sm:$0xff]
        %v445 = vld [vmem:[#allocation5 + $0x8] sm:$0xff]
        %v446 = vld [vmem:[#allocation5 + $0x10] sm:$0xff]
        %v447 = vld [vmem:[#allocation5 + $0x18] sm:$0xff]
        %vm448 = vcmask 261120
        %v450 = vsel %vm448, %v428, 0
        %v453 = vsel %vm448, %v429, 0
        %v456 = vsel %vm448, %v430, 0
        %v459 = vsel %vm448, %v431, 0
        %v462 = vsel %vm448, %v432, 0
        %v465 = vsel %vm448, %v433, 0
        %v468 = vsel %vm448, %v434, 0
        %v471 = vsel %vm448, %v435, 0
        %v474 = vsel %vm448, %v436, 0
        %v477 = vsel %vm448, %v437, 0
        %v480 = vsel %vm448, %v438, 0
        %v483 = vsel %vm448, %v439, 0
        %v486 = vsel %vm448, %v440, 0
        %v489 = vsel %vm448, %v441, 0
        %v492 = vsel %vm448, %v442, 0
        %v495 = vsel %vm448, %v443, 0
        %497 = vmatprep.subr.mxu0 0.0
        %498 = vmatpush1.msra.mxu0 0.0
        %499 = vmatprep.subr.mxu0 0.0
        %500 = vmatpush1.msra.mxu0 0.0
        %501 = vmatprep.subr.mxu0 0.0
        %502 = vmatpush1.msra.mxu0 0.0
        %503 = vmatprep.subr.mxu0 0.0
        %504 = vmatpush1.msra.mxu0 0.0
        %505 = vmatprep.subr.mxu0 0.0
        %506 = vmatpush1.msra.mxu0 0.0
        %507 = vmatprep.subr.mxu0 0.0
        %508 = vmatpush1.msra.mxu0 0.0
        %509 = vmatprep.subr.mxu0 0.0
        %510 = vmatpush1.msra.mxu0 0.0
        %511 = vmatprep.subr.mxu0 0.0
        %512 = vmatpush1.msra.mxu0 0.0
        %513 = vmatprep.subr.mxu0 0.0
        %514 = vmatpush1.msra.mxu0 0.0
        %515 = vmatprep.subr.mxu0 0.0
        %516 = vmatpush1.msra.mxu0 0.0
        %517 = vmatprep.subr.mxu0 0.0
        %518 = vmatpush1.msra.mxu0 0.0
        %519 = vmatprep.subr.mxu0 0.0
        %520 = vmatpush1.msra.mxu0 0.0
        %521 = vmatprep.subr.mxu0 0.0
        %522 = vmatpush1.msra.mxu0 %v447
        %523 = vmatprep.subr.mxu0 0.0
        %524 = vmatpush1.msra.mxu0 %v446
        %525 = vmatprep.subr.mxu0 0.0
        %526 = vmatpush1.msra.mxu0 %v445
        %527 = vmatprep.subr.mxu0 0.0
        %528 = vmatpush1.msra.mxu0 %v444
        %529 = vmatprep.subr.mxu0 0.0
        %530 = vmatpush2.msra.mxu0 0.0
        %531 = vmatprep.subr.mxu0 0.0
        %532 = vmatpush2.msra.mxu0 0.0
        %533 = vmatprep.subr.mxu0 0.0
        %534 = vmatpush2.msra.mxu0 0.0
        %535 = vmatprep.subr.mxu0 0.0
        %536 = vmatpush2.msra.mxu0 0.0
        %537 = vmatprep.subr.mxu0 0.0
        %538 = vmatpush2.msra.mxu0 0.0
        %539 = vmatprep.subr.mxu0 0.0
        %540 = vmatpush2.msra.mxu0 0.0
        %541 = vmatprep.subr.mxu0 0.0
        %542 = vmatpush2.msra.mxu0 0.0
        %543 = vmatprep.subr.mxu0 0.0
        %544 = vmatpush2.msra.mxu0 0.0
        %545 = vmatprep.subr.mxu0 0.0
        %546 = vmatpush2.msra.mxu0 0.0
        %547 = vmatprep.subr.mxu0 0.0
        %548 = vmatpush2.msra.mxu0 0.0
        %549 = vmatprep.subr.mxu0 0.0
        %550 = vmatpush2.msra.mxu0 0.0
        %551 = vmatprep.subr.mxu0 0.0
        %552 = vmatpush2.msra.mxu0 0.0
        %553 = vmatprep.subr.mxu0 0.0
        %554 = vmatpush2.msra.mxu0 0.0
        %555 = vmatprep.subr.mxu0 0.0
        %556 = vmatpush2.msra.mxu0 0.0
        %557 = vmatprep.subr.mxu0 0.0
        %558 = vmatpush2.msra.mxu0 0.0
        %559 = vmatprep.subr.mxu0 0.0
        %560 = vmatpush2.msra.mxu0 0.0
        %561 = vmatprep.mubr.f32.mxu0 0.0
        %562 = vmatmul.mubr.f32.gmra.mxu0 %v450
        %v563 = vpop.f32.mrf.mxu0
        %v564 = vadd.f32 0.0, %v563
        %v565 = vpop.f32.mrf.mxu0
        %566 = vmatprep.mubr.f32.mxu0 0.0
        %567 = vmatmul.mubr.f32.gmra.mxu0 %v453
        %v568 = vpop.f32.mrf.mxu0
        %v569 = vadd.f32 0.0, %v568
        %v570 = vpop.f32.mrf.mxu0
        %571 = vmatprep.mubr.f32.mxu0 0.0
        %572 = vmatmul.mubr.f32.gmra.mxu0 %v456
        %v573 = vpop.f32.mrf.mxu0
        %v574 = vadd.f32 0.0, %v573
        %v575 = vpop.f32.mrf.mxu0
        %576 = vmatprep.mubr.f32.mxu0 0.0
        %577 = vmatmul.mubr.f32.gmra.mxu0 %v459
        %v578 = vpop.f32.mrf.mxu0
        %v579 = vadd.f32 0.0, %v578
        %v580 = vpop.f32.mrf.mxu0
        %581 = vmatprep.mubr.f32.mxu0 0.0
        %582 = vmatmul.mubr.f32.gmra.mxu0 %v462
        %v583 = vpop.f32.mrf.mxu0
        %v584 = vadd.f32 0.0, %v583
        %v585 = vpop.f32.mrf.mxu0
        %586 = vmatprep.mubr.f32.mxu0 0.0
        %587 = vmatmul.mubr.f32.gmra.mxu0 %v465
        %v588 = vpop.f32.mrf.mxu0
        %v589 = vadd.f32 0.0, %v588
        %v590 = vpop.f32.mrf.mxu0
        %591 = vmatprep.mubr.f32.mxu0 0.0
        %592 = vmatmul.mubr.f32.gmra.mxu0 %v468
        %v593 = vpop.f32.mrf.mxu0
        %v594 = vadd.f32 0.0, %v593
        %v595 = vpop.f32.mrf.mxu0
        %596 = vmatprep.mubr.f32.mxu0 0.0
        %597 = vmatmul.mubr.f32.gmra.mxu0 %v471
        %v598 = vpop.f32.mrf.mxu0
        %v599 = vadd.f32 0.0, %v598
        %v600 = vpop.f32.mrf.mxu0
        %601 = vmatprep.mubr.f32.mxu0 0.0
        %602 = vmatmul.mubr.f32.gmra.mxu0 %v474
        %v603 = vpop.f32.mrf.mxu0
        %v604 = vadd.f32 0.0, %v603
        %v605 = vpop.f32.mrf.mxu0
        %606 = vmatprep.mubr.f32.mxu0 0.0
        %607 = vmatmul.mubr.f32.gmra.mxu0 %v477
        %v608 = vpop.f32.mrf.mxu0
        %v609 = vadd.f32 0.0, %v608
        %v610 = vpop.f32.mrf.mxu0
        %611 = vmatprep.mubr.f32.mxu0 0.0
        %612 = vmatmul.mubr.f32.gmra.mxu0 %v480
        %v613 = vpop.f32.mrf.mxu0
        %v614 = vadd.f32 0.0, %v613
        %v615 = vpop.f32.mrf.mxu0
        %616 = vmatprep.mubr.f32.mxu0 0.0
        %617 = vmatmul.mubr.f32.gmra.mxu0 %v483
        %v618 = vpop.f32.mrf.mxu0
        %v619 = vadd.f32 0.0, %v618
        %v620 = vpop.f32.mrf.mxu0
        %621 = vmatprep.mubr.f32.mxu0 0.0
        %622 = vmatmul.mubr.f32.gmra.mxu0 %v486
        %v623 = vpop.f32.mrf.mxu0
        %v624 = vadd.f32 0.0, %v623
        %v625 = vpop.f32.mrf.mxu0
        %626 = vmatprep.mubr.f32.mxu0 0.0
        %627 = vmatmul.mubr.f32.gmra.mxu0 %v489
        %v628 = vpop.f32.mrf.mxu0
        %v629 = vadd.f32 0.0, %v628
        %v630 = vpop.f32.mrf.mxu0
        %631 = vmatprep.mubr.f32.mxu0 0.0
        %632 = vmatmul.mubr.f32.gmra.mxu0 %v492
        %v633 = vpop.f32.mrf.mxu0
        %v634 = vadd.f32 0.0, %v633
        %v635 = vpop.f32.mrf.mxu0
        %636 = vmatprep.mubr.f32.mxu0 0.0
        %637 = vmatmul.mubr.f32.gmra.mxu0 %v495
        %v638 = vpop.f32.mrf.mxu0
        %v639 = vadd.f32 0.0, %v638
        %v640 = vpop.f32.mrf.mxu0
        %641 = vdwg.mxu0
        %v642 = vpack.c.bf16 %v569, %v564
        %v643 = vpack.c.bf16 %v579, %v574
        %v644 = vpack.c.bf16 %v589, %v584
        %v645 = vpack.c.bf16 %v599, %v594
        %v646 = vpack.c.bf16 %v609, %v604
        %v647 = vpack.c.bf16 %v619, %v614
        %v648 = vpack.c.bf16 %v629, %v624
        %v649 = vpack.c.bf16 %v639, %v634
        %v650 = vld [vmem:[%s414] sm:$0xf]
        %v651 = vld [vmem:[%s414 + $0x4] sm:$0xf]
        %v652 = vld [vmem:[%s414 + $0x8] sm:$0xf]
        %v653 = vld [vmem:[%s414 + $0xc] sm:$0xf]
        %v654 = vld [vmem:[%s414 + $0x10] sm:$0xf]
        %v655 = vld [vmem:[%s414 + $0x14] sm:$0xf]
        %v656 = vld [vmem:[%s414 + $0x18] sm:$0xf]
        %v657 = vld [vmem:[%s414 + $0x1c] sm:$0xf]
        %v658 = vld [vmem:[%s414 + $0x20] sm:$0xf]
        %v659 = vld [vmem:[%s414 + $0x24] sm:$0xf]
        %v660 = vld [vmem:[%s414 + $0x28] sm:$0xf]
        %v661 = vld [vmem:[%s414 + $0x2c] sm:$0xf]
        %v662 = vld [vmem:[%s414 + $0x30] sm:$0xf]
        %v663 = vld [vmem:[%s414 + $0x34] sm:$0xf]
        %v664 = vld [vmem:[%s414 + $0x38] sm:$0xf]
        %v665 = vld [vmem:[%s414 + $0x3c] sm:$0xf]
        %v666 = vlaneseq
        %v667 = vshrl.u32 %v666, 7
        %v668 = vsub.s32 0, %v667
        %v669 = vrot.slane %v426, %v668
        %v686 = vunpack.c.l.b16 %v650
        %v687 = vunpack.c.l.b16 %v651
        %v688 = vunpack.c.l.b16 %v652
        %v689 = vunpack.c.l.b16 %v653
        %v690 = vunpack.c.l.b16 %v654
        %v691 = vunpack.c.l.b16 %v655
        %v692 = vunpack.c.l.b16 %v656
        %v693 = vunpack.c.l.b16 %v657
        %v694 = vunpack.c.l.b16 %v658
        %v695 = vunpack.c.l.b16 %v659
        %v696 = vunpack.c.l.b16 %v660
        %v697 = vunpack.c.l.b16 %v661
        %v698 = vunpack.c.l.b16 %v662
        %v699 = vunpack.c.l.b16 %v663
        %v700 = vunpack.c.l.b16 %v664
        %v701 = vunpack.c.l.b16 %v665
        %v702 = vpack.c.b16 %v687, %v686
        %v703 = vpack.c.b16 %v689, %v688
        %v704 = vpack.c.b16 %v691, %v690
        %v705 = vpack.c.b16 %v693, %v692
        %v706 = vpack.c.b16 %v695, %v694
        %v707 = vpack.c.b16 %v697, %v696
        %v708 = vpack.c.b16 %v699, %v698
        %v709 = vpack.c.b16 %v701, %v700
        %718 = vmatprep.subr.bf16.mxu0 0
        %719 = vmatpush1.bf16.msra.mxu0 %v649
        %720 = vmatprep.subr.bf16.mxu0 0
        %721 = vmatpush1.bf16.msra.mxu0 %v648
        %722 = vmatprep.subr.bf16.mxu0 0
        %723 = vmatpush1.bf16.msra.mxu0 %v647
        %724 = vmatprep.subr.bf16.mxu0 0
        %725 = vmatpush1.bf16.msra.mxu0 %v646
        %726 = vmatprep.subr.bf16.mxu0 0
        %727 = vmatpush1.bf16.msra.mxu0 %v645
        %728 = vmatprep.subr.bf16.mxu0 0
        %729 = vmatpush1.bf16.msra.mxu0 %v644
        %730 = vmatprep.subr.bf16.mxu0 0
        %731 = vmatpush1.bf16.msra.mxu0 %v643
        %732 = vmatprep.subr.bf16.mxu0 0
        %733 = vmatpush1.bf16.msra.mxu0 %v642
        %734 = vmatprep.subr.bf16.mxu0 0
        %735 = vmatpush2.bf16.msra.mxu0 0
        %736 = vmatprep.subr.bf16.mxu0 0
        %737 = vmatpush2.bf16.msra.mxu0 0
        %738 = vmatprep.subr.bf16.mxu0 0
        %739 = vmatpush2.bf16.msra.mxu0 0
        %740 = vmatprep.subr.bf16.mxu0 0
        %741 = vmatpush2.bf16.msra.mxu0 0
        %742 = vmatprep.subr.bf16.mxu0 0
        %743 = vmatpush2.bf16.msra.mxu0 0
        %744 = vmatprep.subr.bf16.mxu0 0
        %745 = vmatpush2.bf16.msra.mxu0 0
        %746 = vmatprep.subr.bf16.mxu0 0
        %747 = vmatpush2.bf16.msra.mxu0 0
        %748 = vmatprep.subr.bf16.mxu0 0
        %749 = vmatpush2.bf16.msra.mxu0 0
        %750 = vmatprep.mubr.bf16.mxu0 0
        %751 = vmatmul.mubr.bf16.gmra.mxu0 %v702
        %v752 = vpop.f32.mrf.mxu0
        %v753 = vadd.f32 %v669, %v752
        %v754 = vpop.f32.mrf.mxu0
        %v755 = vpop.f32.mrf.mxu0
        %v756 = vadd.f32 %v669, %v755
        %v757 = vpop.f32.mrf.mxu0
        %758 = vmatprep.mubr.bf16.mxu0 0
        %759 = vmatmul.mubr.bf16.gmra.mxu0 %v703
        %v760 = vpop.f32.mrf.mxu0
        %v761 = vadd.f32 %v669, %v760
        %v762 = vpop.f32.mrf.mxu0
        %v763 = vpop.f32.mrf.mxu0
        %v764 = vadd.f32 %v669, %v763
        %v765 = vpop.f32.mrf.mxu0
        %766 = vmatprep.mubr.bf16.mxu0 0
        %767 = vmatmul.mubr.bf16.gmra.mxu0 %v704
        %v768 = vpop.f32.mrf.mxu0
        %v769 = vadd.f32 %v669, %v768
        %v770 = vpop.f32.mrf.mxu0
        %v771 = vpop.f32.mrf.mxu0
        %v772 = vadd.f32 %v669, %v771
        %v773 = vpop.f32.mrf.mxu0
        %774 = vmatprep.mubr.bf16.mxu0 0
        %775 = vmatmul.mubr.bf16.gmra.mxu0 %v705
        %v776 = vpop.f32.mrf.mxu0
        %v777 = vadd.f32 %v669, %v776
        %v778 = vpop.f32.mrf.mxu0
        %v779 = vpop.f32.mrf.mxu0
        %v780 = vadd.f32 %v669, %v779
        %v781 = vpop.f32.mrf.mxu0
        %782 = vmatprep.mubr.bf16.mxu0 0
        %783 = vmatmul.mubr.bf16.gmra.mxu0 %v706
        %v784 = vpop.f32.mrf.mxu0
        %v785 = vadd.f32 %v669, %v784
        %v786 = vpop.f32.mrf.mxu0
        %v787 = vpop.f32.mrf.mxu0
        %v788 = vadd.f32 %v669, %v787
        %v789 = vpop.f32.mrf.mxu0
        %790 = vmatprep.mubr.bf16.mxu0 0
        %791 = vmatmul.mubr.bf16.gmra.mxu0 %v707
        %v792 = vpop.f32.mrf.mxu0
        %v793 = vadd.f32 %v669, %v792
        %v794 = vpop.f32.mrf.mxu0
        %v795 = vpop.f32.mrf.mxu0
        %v796 = vadd.f32 %v669, %v795
        %v797 = vpop.f32.mrf.mxu0
        %798 = vmatprep.mubr.bf16.mxu0 0
        %799 = vmatmul.mubr.bf16.gmra.mxu0 %v708
        %v800 = vpop.f32.mrf.mxu0
        %v801 = vadd.f32 %v669, %v800
        %v802 = vpop.f32.mrf.mxu0
        %v803 = vpop.f32.mrf.mxu0
        %v804 = vadd.f32 %v669, %v803
        %v805 = vpop.f32.mrf.mxu0
        %806 = vmatprep.mubr.bf16.mxu0 0
        %807 = vmatmul.mubr.bf16.gmra.mxu0 %v709
        %v808 = vpop.f32.mrf.mxu0
        %v809 = vadd.f32 %v669, %v808
        %v810 = vpop.f32.mrf.mxu0
        %v811 = vpop.f32.mrf.mxu0
        %v812 = vadd.f32 %v669, %v811
        %v813 = vpop.f32.mrf.mxu0
        %814 = vdwg.mxu0
        %v815 = vmax.f32 %v753, 0.0
        %v816 = vmax.f32 %v756, 0.0
        %v817 = vmax.f32 %v761, 0.0
        %v818 = vmax.f32 %v764, 0.0
        %v819 = vmax.f32 %v769, 0.0
        %v820 = vmax.f32 %v772, 0.0
        %v821 = vmax.f32 %v777, 0.0
        %v822 = vmax.f32 %v780, 0.0
        %v823 = vmax.f32 %v785, 0.0
        %v824 = vmax.f32 %v788, 0.0
        %v825 = vmax.f32 %v793, 0.0
        %v826 = vmax.f32 %v796, 0.0
        %v827 = vmax.f32 %v801, 0.0
        %v828 = vmax.f32 %v804, 0.0
        %v829 = vmax.f32 %v809, 0.0
        %v830 = vmax.f32 %v812, 0.0
        %831 = vst.msk [vmem:[#allocation2] sm:$0xff] %vm448, %v815
        %832 = vst.msk [vmem:[#allocation2 + $0x8] sm:$0xff] %vm448, %v816
        %833 = vst.msk [vmem:[#allocation2 + $0x10] sm:$0xff] %vm448, %v817
        %834 = vst.msk [vmem:[#allocation2 + $0x18] sm:$0xff] %vm448, %v818
        %835 = vst.msk [vmem:[#allocation2 + $0x20] sm:$0xff] %vm448, %v819
        %836 = vst.msk [vmem:[#allocation2 + $0x28] sm:$0xff] %vm448, %v820
        %837 = vst.msk [vmem:[#allocation2 + $0x30] sm:$0xff] %vm448, %v821
        %838 = vst.msk [vmem:[#allocation2 + $0x38] sm:$0xff] %vm448, %v822
        %839 = vst.msk [vmem:[#allocation2 + $0x40] sm:$0xff] %vm448, %v823
        %840 = vst.msk [vmem:[#allocation2 + $0x48] sm:$0xff] %vm448, %v824
        %841 = vst.msk [vmem:[#allocation2 + $0x50] sm:$0xff] %vm448, %v825
        %842 = vst.msk [vmem:[#allocation2 + $0x58] sm:$0xff] %vm448, %v826
        %843 = vst.msk [vmem:[#allocation2 + $0x60] sm:$0xff] %vm448, %v827
        %844 = vst.msk [vmem:[#allocation2 + $0x68] sm:$0xff] %vm448, %v828
        %845 = vst.msk [vmem:[#allocation2 + $0x70] sm:$0xff] %vm448, %v829
        %846 = vst.msk [vmem:[#allocation2 + $0x78] sm:$0xff] %vm448, %v830
        %v847 = vld [vmem:[#allocation2] sm:$0xff]
        %v848 = vld [vmem:[#allocation2 + $0x8] sm:$0xff]
        %v849 = vld [vmem:[#allocation2 + $0x10] sm:$0xff]
        %v850 = vld [vmem:[#allocation2 + $0x18] sm:$0xff]
        %v851 = vld [vmem:[#allocation2 + $0x20] sm:$0xff]
        %v852 = vld [vmem:[#allocation2 + $0x28] sm:$0xff]
        %v853 = vld [vmem:[#allocation2 + $0x30] sm:$0xff]
        %v854 = vld [vmem:[#allocation2 + $0x38] sm:$0xff]
        %v855 = vld [vmem:[#allocation2 + $0x40] sm:$0xff]
        %v856 = vld [vmem:[#allocation2 + $0x48] sm:$0xff]
        %v857 = vld [vmem:[#allocation2 + $0x50] sm:$0xff]
        %v858 = vld [vmem:[#allocation2 + $0x58] sm:$0xff]
        %v859 = vld [vmem:[#allocation2 + $0x60] sm:$0xff]
        %v860 = vld [vmem:[#allocation2 + $0x68] sm:$0xff]
        %v861 = vld [vmem:[#allocation2 + $0x70] sm:$0xff]
        %v862 = vld [vmem:[#allocation2 + $0x78] sm:$0xff]
        %v863 = vld [vmem:[#allocation8] sm:$0xff]
        %v864 = vld [vmem:[#allocation8 + $0x8] sm:$0xff]
        %v865 = vld [vmem:[#allocation8 + $0x10] sm:$0xff]
        %v866 = vld [vmem:[#allocation8 + $0x18] sm:$0xff]
        %v868 = vsel %vm448, %v847, 0
        %v871 = vsel %vm448, %v848, 0
        %v874 = vsel %vm448, %v849, 0
        %v877 = vsel %vm448, %v850, 0
        %v880 = vsel %vm448, %v851, 0
        %v883 = vsel %vm448, %v852, 0
        %v886 = vsel %vm448, %v853, 0
        %v889 = vsel %vm448, %v854, 0
        %v892 = vsel %vm448, %v855, 0
        %v895 = vsel %vm448, %v856, 0
        %v898 = vsel %vm448, %v857, 0
        %v901 = vsel %vm448, %v858, 0
        %v904 = vsel %vm448, %v859, 0
        %v907 = vsel %vm448, %v860, 0
        %v910 = vsel %vm448, %v861, 0
        %v913 = vsel %vm448, %v862, 0
        %915 = vmatprep.subr.mxu0 0.0
        %916 = vmatpush1.msra.mxu0 0.0
        %917 = vmatprep.subr.mxu0 0.0
        %918 = vmatpush1.msra.mxu0 0.0
        %919 = vmatprep.subr.mxu0 0.0
        %920 = vmatpush1.msra.mxu0 0.0
        %921 = vmatprep.subr.mxu0 0.0
        %922 = vmatpush1.msra.mxu0 0.0
        %923 = vmatprep.subr.mxu0 0.0
        %924 = vmatpush1.msra.mxu0 0.0
        %925 = vmatprep.subr.mxu0 0.0
        %926 = vmatpush1.msra.mxu0 0.0
        %927 = vmatprep.subr.mxu0 0.0
        %928 = vmatpush1.msra.mxu0 0.0
        %929 = vmatprep.subr.mxu0 0.0
        %930 = vmatpush1.msra.mxu0 0.0
        %931 = vmatprep.subr.mxu0 0.0
        %932 = vmatpush1.msra.mxu0 0.0
        %933 = vmatprep.subr.mxu0 0.0
        %934 = vmatpush1.msra.mxu0 0.0
        %935 = vmatprep.subr.mxu0 0.0
        %936 = vmatpush1.msra.mxu0 0.0
        %937 = vmatprep.subr.mxu0 0.0
        %938 = vmatpush1.msra.mxu0 0.0
        %939 = vmatprep.subr.mxu0 0.0
        %940 = vmatpush1.msra.mxu0 %v866
        %941 = vmatprep.subr.mxu0 0.0
        %942 = vmatpush1.msra.mxu0 %v865
        %943 = vmatprep.subr.mxu0 0.0
        %944 = vmatpush1.msra.mxu0 %v864
        %945 = vmatprep.subr.mxu0 0.0
        %946 = vmatpush1.msra.mxu0 %v863
        %947 = vmatprep.subr.mxu0 0.0
        %948 = vmatpush2.msra.mxu0 0.0
        %949 = vmatprep.subr.mxu0 0.0
        %950 = vmatpush2.msra.mxu0 0.0
        %951 = vmatprep.subr.mxu0 0.0
        %952 = vmatpush2.msra.mxu0 0.0
        %953 = vmatprep.subr.mxu0 0.0
        %954 = vmatpush2.msra.mxu0 0.0
        %955 = vmatprep.subr.mxu0 0.0
        %956 = vmatpush2.msra.mxu0 0.0
        %957 = vmatprep.subr.mxu0 0.0
        %958 = vmatpush2.msra.mxu0 0.0
        %959 = vmatprep.subr.mxu0 0.0
        %960 = vmatpush2.msra.mxu0 0.0
        %961 = vmatprep.subr.mxu0 0.0
        %962 = vmatpush2.msra.mxu0 0.0
        %963 = vmatprep.subr.mxu0 0.0
        %964 = vmatpush2.msra.mxu0 0.0
        %965 = vmatprep.subr.mxu0 0.0
        %966 = vmatpush2.msra.mxu0 0.0
        %967 = vmatprep.subr.mxu0 0.0
        %968 = vmatpush2.msra.mxu0 0.0
        %969 = vmatprep.subr.mxu0 0.0
        %970 = vmatpush2.msra.mxu0 0.0
        %971 = vmatprep.subr.mxu0 0.0
        %972 = vmatpush2.msra.mxu0 0.0
        %973 = vmatprep.subr.mxu0 0.0
        %974 = vmatpush2.msra.mxu0 0.0
        %975 = vmatprep.subr.mxu0 0.0
        %976 = vmatpush2.msra.mxu0 0.0
        %977 = vmatprep.subr.mxu0 0.0
        %978 = vmatpush2.msra.mxu0 0.0
        %979 = vmatprep.mubr.f32.mxu0 0.0
        %980 = vmatmul.mubr.f32.gmra.mxu0 %v868
        %v981 = vpop.f32.mrf.mxu0
        %v982 = vadd.f32 0.0, %v981
        %v983 = vpop.f32.mrf.mxu0
        %984 = vmatprep.mubr.f32.mxu0 0.0
        %985 = vmatmul.mubr.f32.gmra.mxu0 %v871
        %v986 = vpop.f32.mrf.mxu0
        %v987 = vadd.f32 0.0, %v986
        %v988 = vpop.f32.mrf.mxu0
        %989 = vmatprep.mubr.f32.mxu0 0.0
        %990 = vmatmul.mubr.f32.gmra.mxu0 %v874
        %v991 = vpop.f32.mrf.mxu0
        %v992 = vadd.f32 0.0, %v991
        %v993 = vpop.f32.mrf.mxu0
        %994 = vmatprep.mubr.f32.mxu0 0.0
        %995 = vmatmul.mubr.f32.gmra.mxu0 %v877
        %v996 = vpop.f32.mrf.mxu0
        %v997 = vadd.f32 0.0, %v996
        %v998 = vpop.f32.mrf.mxu0
        %999 = vmatprep.mubr.f32.mxu0 0.0
        %1000 = vmatmul.mubr.f32.gmra.mxu0 %v880
        %v1001 = vpop.f32.mrf.mxu0
        %v1002 = vadd.f32 0.0, %v1001
        %v1003 = vpop.f32.mrf.mxu0
        %1004 = vmatprep.mubr.f32.mxu0 0.0
        %1005 = vmatmul.mubr.f32.gmra.mxu0 %v883
        %v1006 = vpop.f32.mrf.mxu0
        %v1007 = vadd.f32 0.0, %v1006
        %v1008 = vpop.f32.mrf.mxu0
        %1009 = vmatprep.mubr.f32.mxu0 0.0
        %1010 = vmatmul.mubr.f32.gmra.mxu0 %v886
        %v1011 = vpop.f32.mrf.mxu0
        %v1012 = vadd.f32 0.0, %v1011
        %v1013 = vpop.f32.mrf.mxu0
        %1014 = vmatprep.mubr.f32.mxu0 0.0
        %1015 = vmatmul.mubr.f32.gmra.mxu0 %v889
        %v1016 = vpop.f32.mrf.mxu0
        %v1017 = vadd.f32 0.0, %v1016
        %v1018 = vpop.f32.mrf.mxu0
        %1019 = vmatprep.mubr.f32.mxu0 0.0
        %1020 = vmatmul.mubr.f32.gmra.mxu0 %v892
        %v1021 = vpop.f32.mrf.mxu0
        %v1022 = vadd.f32 0.0, %v1021
        %v1023 = vpop.f32.mrf.mxu0
        %1024 = vmatprep.mubr.f32.mxu0 0.0
        %1025 = vmatmul.mubr.f32.gmra.mxu0 %v895
        %v1026 = vpop.f32.mrf.mxu0
        %v1027 = vadd.f32 0.0, %v1026
        %v1028 = vpop.f32.mrf.mxu0
        %1029 = vmatprep.mubr.f32.mxu0 0.0
        %1030 = vmatmul.mubr.f32.gmra.mxu0 %v898
        %v1031 = vpop.f32.mrf.mxu0
        %v1032 = vadd.f32 0.0, %v1031
        %v1033 = vpop.f32.mrf.mxu0
        %1034 = vmatprep.mubr.f32.mxu0 0.0
        %1035 = vmatmul.mubr.f32.gmra.mxu0 %v901
        %v1036 = vpop.f32.mrf.mxu0
        %v1037 = vadd.f32 0.0, %v1036
        %v1038 = vpop.f32.mrf.mxu0
        %1039 = vmatprep.mubr.f32.mxu0 0.0
        %1040 = vmatmul.mubr.f32.gmra.mxu0 %v904
        %v1041 = vpop.f32.mrf.mxu0
        %v1042 = vadd.f32 0.0, %v1041
        %v1043 = vpop.f32.mrf.mxu0
        %1044 = vmatprep.mubr.f32.mxu0 0.0
        %1045 = vmatmul.mubr.f32.gmra.mxu0 %v907
        %v1046 = vpop.f32.mrf.mxu0
        %v1047 = vadd.f32 0.0, %v1046
        %v1048 = vpop.f32.mrf.mxu0
        %1049 = vmatprep.mubr.f32.mxu0 0.0
        %1050 = vmatmul.mubr.f32.gmra.mxu0 %v910
        %v1051 = vpop.f32.mrf.mxu0
        %v1052 = vadd.f32 0.0, %v1051
        %v1053 = vpop.f32.mrf.mxu0
        %1054 = vmatprep.mubr.f32.mxu0 0.0
        %1055 = vmatmul.mubr.f32.gmra.mxu0 %v913
        %v1056 = vpop.f32.mrf.mxu0
        %v1057 = vadd.f32 0.0, %v1056
        %v1058 = vpop.f32.mrf.mxu0
        %1059 = vdwg.mxu0
        %1060 = vst.msk [vmem:[#allocation3] sm:$0xff] %vm448, %v982
        %1061 = vst.msk [vmem:[#allocation3 + $0x8] sm:$0xff] %vm448, %v987
        %1062 = vst.msk [vmem:[#allocation3 + $0x10] sm:$0xff] %vm448, %v992
        %1063 = vst.msk [vmem:[#allocation3 + $0x18] sm:$0xff] %vm448, %v997
        %1064 = vst.msk [vmem:[#allocation3 + $0x20] sm:$0xff] %vm448, %v1002
        %1065 = vst.msk [vmem:[#allocation3 + $0x28] sm:$0xff] %vm448, %v1007
        %1066 = vst.msk [vmem:[#allocation3 + $0x30] sm:$0xff] %vm448, %v1012
        %1067 = vst.msk [vmem:[#allocation3 + $0x38] sm:$0xff] %vm448, %v1017
        %1068 = vst.msk [vmem:[#allocation3 + $0x40] sm:$0xff] %vm448, %v1022
        %1069 = vst.msk [vmem:[#allocation3 + $0x48] sm:$0xff] %vm448, %v1027
        %1070 = vst.msk [vmem:[#allocation3 + $0x50] sm:$0xff] %vm448, %v1032
        %1071 = vst.msk [vmem:[#allocation3 + $0x58] sm:$0xff] %vm448, %v1037
        %1072 = vst.msk [vmem:[#allocation3 + $0x60] sm:$0xff] %vm448, %v1042
        %1073 = vst.msk [vmem:[#allocation3 + $0x68] sm:$0xff] %vm448, %v1047
        %1074 = vst.msk [vmem:[#allocation3 + $0x70] sm:$0xff] %vm448, %v1052
        %1075 = vst.msk [vmem:[#allocation3 + $0x78] sm:$0xff] %vm448, %v1057
        %v1076 = vpack.c.bf16 %v987, %v982
        %v1077 = vpack.c.bf16 %v997, %v992
        %v1078 = vpack.c.bf16 %v1007, %v1002
        %v1079 = vpack.c.bf16 %v1017, %v1012
        %v1080 = vpack.c.bf16 %v1027, %v1022
        %v1081 = vpack.c.bf16 %v1037, %v1032
        %v1082 = vpack.c.bf16 %v1047, %v1042
        %v1083 = vpack.c.bf16 %v1057, %v1052
        %v1092 = vunpack.c.l.b16 %v1076
        %v1093 = vunpack.c.h.b16 %v1076
        %v1094 = vunpack.c.l.b16 %v1077
        %v1095 = vunpack.c.h.b16 %v1077
        %v1096 = vunpack.c.l.b16 %v1078
        %v1097 = vunpack.c.h.b16 %v1078
        %v1098 = vunpack.c.l.b16 %v1079
        %v1099 = vunpack.c.h.b16 %v1079
        %v1100 = vunpack.c.l.b16 %v1080
        %v1101 = vunpack.c.h.b16 %v1080
        %v1102 = vunpack.c.l.b16 %v1081
        %v1103 = vunpack.c.h.b16 %v1081
        %v1104 = vunpack.c.l.b16 %v1082
        %v1105 = vunpack.c.h.b16 %v1082
        %v1106 = vunpack.c.l.b16 %v1083
        %v1107 = vunpack.c.h.b16 %v1083
        %v1108 = vpack.c.b16 %v1092, %v1092
        %v1109 = vpack.c.b16 %v1093, %v1093
        %v1110 = vpack.c.b16 %v1094, %v1094
        %v1111 = vpack.c.b16 %v1095, %v1095
        %v1112 = vpack.c.b16 %v1096, %v1096
        %v1113 = vpack.c.b16 %v1097, %v1097
        %v1114 = vpack.c.b16 %v1098, %v1098
        %v1115 = vpack.c.b16 %v1099, %v1099
        %v1116 = vpack.c.b16 %v1100, %v1100
        %v1117 = vpack.c.b16 %v1101, %v1101
        %v1118 = vpack.c.b16 %v1102, %v1102
        %v1119 = vpack.c.b16 %v1103, %v1103
        %v1120 = vpack.c.b16 %v1104, %v1104
        %v1121 = vpack.c.b16 %v1105, %v1105
        %v1122 = vpack.c.b16 %v1106, %v1106
        %v1123 = vpack.c.b16 %v1107, %v1107
        %vm1140 = vcmask 257024
        %1141 = vst.msk [vmem:[#allocation4] sm:$0xf] %vm1140, %v1108
        %1142 = vst.msk [vmem:[#allocation4 + $0x4] sm:$0xf] %vm1140, %v1109
        %1143 = vst.msk [vmem:[#allocation4 + $0x8] sm:$0xf] %vm1140, %v1110
        %1144 = vst.msk [vmem:[#allocation4 + $0xc] sm:$0xf] %vm1140, %v1111
        %1145 = vst.msk [vmem:[#allocation4 + $0x10] sm:$0xf] %vm1140, %v1112
        %1146 = vst.msk [vmem:[#allocation4 + $0x14] sm:$0xf] %vm1140, %v1113
        %1147 = vst.msk [vmem:[#allocation4 + $0x18] sm:$0xf] %vm1140, %v1114
        %1148 = vst.msk [vmem:[#allocation4 + $0x1c] sm:$0xf] %vm1140, %v1115
        %1149 = vst.msk [vmem:[#allocation4 + $0x20] sm:$0xf] %vm1140, %v1116
        %1150 = vst.msk [vmem:[#allocation4 + $0x24] sm:$0xf] %vm1140, %v1117
        %1151 = vst.msk [vmem:[#allocation4 + $0x28] sm:$0xf] %vm1140, %v1118
        %1152 = vst.msk [vmem:[#allocation4 + $0x2c] sm:$0xf] %vm1140, %v1119
        %1153 = vst.msk [vmem:[#allocation4 + $0x30] sm:$0xf] %vm1140, %v1120
        %1154 = vst.msk [vmem:[#allocation4 + $0x34] sm:$0xf] %vm1140, %v1121
        %1155 = vst.msk [vmem:[#allocation4 + $0x38] sm:$0xf] %vm1140, %v1122
        %1156 = vst.msk [vmem:[#allocation4 + $0x3c] sm:$0xf] %vm1140, %v1123
        %v1158 = vrot.slane %v426, 1
        %v1159 = vsel %vm448, %v1158, 0
        %v1162 = vsel %vm448, %v982, 0
        %v1165 = vsel %vm448, %v987, 0
        %v1168 = vsel %vm448, %v992, 0
        %v1171 = vsel %vm448, %v997, 0
        %v1174 = vsel %vm448, %v1002, 0
        %v1177 = vsel %vm448, %v1007, 0
        %v1180 = vsel %vm448, %v1012, 0
        %v1183 = vsel %vm448, %v1017, 0
        %v1186 = vsel %vm448, %v1022, 0
        %v1189 = vsel %vm448, %v1027, 0
        %v1192 = vsel %vm448, %v1032, 0
        %v1195 = vsel %vm448, %v1037, 0
        %v1198 = vsel %vm448, %v1042, 0
        %v1201 = vsel %vm448, %v1047, 0
        %v1204 = vsel %vm448, %v1052, 0
        %v1207 = vsel %vm448, %v1057, 0
        %1209 = vmatprep.subr.mxu0 0.0
        %1210 = vmatpush1.xpose.msra.mxu0 %v1207
        %1211 = vmatprep.subr.mxu0 0.0
        %1212 = vmatpush1.xpose.msra.mxu0 %v1204
        %1213 = vmatprep.subr.mxu0 0.0
        %1214 = vmatpush1.xpose.msra.mxu0 %v1201
        %1215 = vmatprep.subr.mxu0 0.0
        %1216 = vmatpush1.xpose.msra.mxu0 %v1198
        %1217 = vmatprep.subr.mxu0 0.0
        %1218 = vmatpush1.xpose.msra.mxu0 %v1195
        %1219 = vmatprep.subr.mxu0 0.0
        %1220 = vmatpush1.xpose.msra.mxu0 %v1192
        %1221 = vmatprep.subr.mxu0 0.0
        %1222 = vmatpush1.xpose.msra.mxu0 %v1189
        %1223 = vmatprep.subr.mxu0 0.0
        %1224 = vmatpush1.xpose.msra.mxu0 %v1186
        %1225 = vmatprep.subr.mxu0 0.0
        %1226 = vmatpush1.xpose.msra.mxu0 %v1183
        %1227 = vmatprep.subr.mxu0 0.0
        %1228 = vmatpush1.xpose.msra.mxu0 %v1180
        %1229 = vmatprep.subr.mxu0 0.0
        %1230 = vmatpush1.xpose.msra.mxu0 %v1177
        %1231 = vmatprep.subr.mxu0 0.0
        %1232 = vmatpush1.xpose.msra.mxu0 %v1174
        %1233 = vmatprep.subr.mxu0 0.0
        %1234 = vmatpush1.xpose.msra.mxu0 %v1171
        %1235 = vmatprep.subr.mxu0 0.0
        %1236 = vmatpush1.xpose.msra.mxu0 %v1168
        %1237 = vmatprep.subr.mxu0 0.0
        %1238 = vmatpush1.xpose.msra.mxu0 %v1165
        %1239 = vmatprep.subr.mxu0 0.0
        %1240 = vmatpush1.xpose.msra.mxu0 %v1162
        %1241 = vmatprep.subr.mxu0 0.0
        %1242 = vmatpush2.xpose.msra.mxu0 0.0
        %1243 = vmatprep.subr.mxu0 0.0
        %1244 = vmatpush2.xpose.msra.mxu0 0.0
        %1245 = vmatprep.subr.mxu0 0.0
        %1246 = vmatpush2.xpose.msra.mxu0 0.0
        %1247 = vmatprep.subr.mxu0 0.0
        %1248 = vmatpush2.xpose.msra.mxu0 0.0
        %1249 = vmatprep.subr.mxu0 0.0
        %1250 = vmatpush2.xpose.msra.mxu0 0.0
        %1251 = vmatprep.subr.mxu0 0.0
        %1252 = vmatpush2.xpose.msra.mxu0 0.0
        %1253 = vmatprep.subr.mxu0 0.0
        %1254 = vmatpush2.xpose.msra.mxu0 0.0
        %1255 = vmatprep.subr.mxu0 0.0
        %1256 = vmatpush2.xpose.msra.mxu0 0.0
        %1257 = vmatprep.subr.mxu0 0.0
        %1258 = vmatpush2.xpose.msra.mxu0 0.0
        %1259 = vmatprep.subr.mxu0 0.0
        %1260 = vmatpush2.xpose.msra.mxu0 0.0
        %1261 = vmatprep.subr.mxu0 0.0
        %1262 = vmatpush2.xpose.msra.mxu0 0.0
        %1263 = vmatprep.subr.mxu0 0.0
        %1264 = vmatpush2.xpose.msra.mxu0 0.0
        %1265 = vmatprep.subr.mxu0 0.0
        %1266 = vmatpush2.xpose.msra.mxu0 0.0
        %1267 = vmatprep.subr.mxu0 0.0
        %1268 = vmatpush2.xpose.msra.mxu0 0.0
        %1269 = vmatprep.subr.mxu0 0.0
        %1270 = vmatpush2.xpose.msra.mxu0 0.0
        %1271 = vmatprep.subr.mxu0 0.0
        %1272 = vmatpush2.xpose.msra.mxu0 0.0
        %1273 = vmatprep.mubr.f32.mxu0 0.0
        %1274 = vmatmul.mubr.f32.gmra.mxu0 %v1159
        %v1275 = vpop.f32.mrf.mxu0
        %v1276 = vadd.f32 0.0, %v1275
        %v1277 = vpop.f32.mrf.mxu0
        %1278 = vdwg.mxu0
        %v1279 = vld [vmem:[%s414] sm:$0xf]
        %v1280 = vld [vmem:[%s414 + $0x4] sm:$0xf]
        %v1281 = vld [vmem:[%s414 + $0x8] sm:$0xf]
        %v1282 = vld [vmem:[%s414 + $0xc] sm:$0xf]
        %v1283 = vld [vmem:[%s414 + $0x10] sm:$0xf]
        %v1284 = vld [vmem:[%s414 + $0x14] sm:$0xf]
        %v1285 = vld [vmem:[%s414 + $0x18] sm:$0xf]
        %v1286 = vld [vmem:[%s414 + $0x1c] sm:$0xf]
        %v1287 = vld [vmem:[%s414 + $0x20] sm:$0xf]
        %v1288 = vld [vmem:[%s414 + $0x24] sm:$0xf]
        %v1289 = vld [vmem:[%s414 + $0x28] sm:$0xf]
        %v1290 = vld [vmem:[%s414 + $0x2c] sm:$0xf]
        %v1291 = vld [vmem:[%s414 + $0x30] sm:$0xf]
        %v1292 = vld [vmem:[%s414 + $0x34] sm:$0xf]
        %v1293 = vld [vmem:[%s414 + $0x38] sm:$0xf]
        %v1294 = vld [vmem:[%s414 + $0x3c] sm:$0xf]
        %vm1295 = vcmp.gt.bf16.partialorder %v1279, 0
        %vm1296 = vcmp.gt.bf16.partialorder %v1280, 0
        %vm1297 = vcmp.gt.bf16.partialorder %v1281, 0
        %vm1298 = vcmp.gt.bf16.partialorder %v1282, 0
        %vm1299 = vcmp.gt.bf16.partialorder %v1283, 0
        %vm1300 = vcmp.gt.bf16.partialorder %v1284, 0
        %vm1301 = vcmp.gt.bf16.partialorder %v1285, 0
        %vm1302 = vcmp.gt.bf16.partialorder %v1286, 0
        %vm1303 = vcmp.gt.bf16.partialorder %v1287, 0
        %vm1304 = vcmp.gt.bf16.partialorder %v1288, 0
        %vm1305 = vcmp.gt.bf16.partialorder %v1289, 0
        %vm1306 = vcmp.gt.bf16.partialorder %v1290, 0
        %vm1307 = vcmp.gt.bf16.partialorder %v1291, 0
        %vm1308 = vcmp.gt.bf16.partialorder %v1292, 0
        %vm1309 = vcmp.gt.bf16.partialorder %v1293, 0
        %vm1310 = vcmp.gt.bf16.partialorder %v1294, 0
        %v1311 = vld [vmem:[#allocation3] sm:$0xff]
        %v1312 = vld [vmem:[#allocation3 + $0x8] sm:$0xff]
        %v1313 = vld [vmem:[#allocation3 + $0x10] sm:$0xff]
        %v1314 = vld [vmem:[#allocation3 + $0x18] sm:$0xff]
        %v1315 = vld [vmem:[#allocation3 + $0x20] sm:$0xff]
        %v1316 = vld [vmem:[#allocation3 + $0x28] sm:$0xff]
        %v1317 = vld [vmem:[#allocation3 + $0x30] sm:$0xff]
        %v1318 = vld [vmem:[#allocation3 + $0x38] sm:$0xff]
        %v1319 = vld [vmem:[#allocation3 + $0x40] sm:$0xff]
        %v1320 = vld [vmem:[#allocation3 + $0x48] sm:$0xff]
        %v1321 = vld [vmem:[#allocation3 + $0x50] sm:$0xff]
        %v1322 = vld [vmem:[#allocation3 + $0x58] sm:$0xff]
        %v1323 = vld [vmem:[#allocation3 + $0x60] sm:$0xff]
        %v1324 = vld [vmem:[#allocation3 + $0x68] sm:$0xff]
        %v1325 = vld [vmem:[#allocation3 + $0x70] sm:$0xff]
        %v1326 = vld [vmem:[#allocation3 + $0x78] sm:$0xff]
        %v1327 = vlaneseq
        %v1328 = vshrl.u32 %v1327, 7
        %v1329 = vsub.s32 2, %v1328
        %v1330 = vrot.slane %v426, %v1329
        %v1331 = vmul.f32 %v1311, %v1330
        %v1332 = vmul.f32 %v1312, %v1330
        %v1333 = vmul.f32 %v1313, %v1330
        %v1334 = vmul.f32 %v1314, %v1330
        %v1335 = vmul.f32 %v1315, %v1330
        %v1336 = vmul.f32 %v1316, %v1330
        %v1337 = vmul.f32 %v1317, %v1330
        %v1338 = vmul.f32 %v1318, %v1330
        %v1339 = vmul.f32 %v1319, %v1330
        %v1340 = vmul.f32 %v1320, %v1330
        %v1341 = vmul.f32 %v1321, %v1330
        %v1342 = vmul.f32 %v1322, %v1330
        %v1343 = vmul.f32 %v1323, %v1330
        %v1344 = vmul.f32 %v1324, %v1330
        %v1345 = vmul.f32 %v1325, %v1330
        %v1346 = vmul.f32 %v1326, %v1330
        %v1347 = vsel %vm448, %v1331, 0.0
        %1348 = vadd.xlane.f32.xlu0 %v1347
        %v1349 = vpop.xlane.xlu0 %1348
        %v1350 = vsel %vm448, %v1332, 0.0
        %1351 = vadd.xlane.f32.xlu0 %v1350
        %v1352 = vpop.xlane.xlu0 %1351
        %v1353 = vsel %vm448, %v1333, 0.0
        %1354 = vadd.xlane.f32.xlu0 %v1353
        %v1355 = vpop.xlane.xlu0 %1354
        %v1356 = vsel %vm448, %v1334, 0.0
        %1357 = vadd.xlane.f32.xlu0 %v1356
        %v1358 = vpop.xlane.xlu0 %1357
        %v1359 = vsel %vm448, %v1335, 0.0
        %1360 = vadd.xlane.f32.xlu0 %v1359
        %v1361 = vpop.xlane.xlu0 %1360
        %v1362 = vsel %vm448, %v1336, 0.0
        %1363 = vadd.xlane.f32.xlu0 %v1362
        %v1364 = vpop.xlane.xlu0 %1363
        %v1365 = vsel %vm448, %v1337, 0.0
        %1366 = vadd.xlane.f32.xlu0 %v1365
        %v1367 = vpop.xlane.xlu0 %1366
        %v1368 = vsel %vm448, %v1338, 0.0
        %1369 = vadd.xlane.f32.xlu0 %v1368
        %v1370 = vpop.xlane.xlu0 %1369
        %v1371 = vsel %vm448, %v1339, 0.0
        %1372 = vadd.xlane.f32.xlu0 %v1371
        %v1373 = vpop.xlane.xlu0 %1372
        %v1374 = vsel %vm448, %v1340, 0.0
        %1375 = vadd.xlane.f32.xlu0 %v1374
        %v1376 = vpop.xlane.xlu0 %1375
        %v1377 = vsel %vm448, %v1341, 0.0
        %1378 = vadd.xlane.f32.xlu0 %v1377
        %v1379 = vpop.xlane.xlu0 %1378
        %v1380 = vsel %vm448, %v1342, 0.0
        %1381 = vadd.xlane.f32.xlu0 %v1380
        %v1382 = vpop.xlane.xlu0 %1381
        %v1383 = vsel %vm448, %v1343, 0.0
        %1384 = vadd.xlane.f32.xlu0 %v1383
        %v1385 = vpop.xlane.xlu0 %1384
        %v1386 = vsel %vm448, %v1344, 0.0
        %1387 = vadd.xlane.f32.xlu0 %v1386
        %v1388 = vpop.xlane.xlu0 %1387
        %v1389 = vsel %vm448, %v1345, 0.0
        %1390 = vadd.xlane.f32.xlu0 %v1389
        %v1391 = vpop.xlane.xlu0 %1390
        %v1392 = vsel %vm448, %v1346, 0.0
        %1393 = vadd.xlane.f32.xlu0 %v1392
        %v1394 = vpop.xlane.xlu0 %1393
        %v1395 = vlaneseq
        %v1396 = vshrl.u32 %v1395, 7
        %v1397 = vsub.s32 0, %v1396
        %v1398 = vrot.slane %v1276, %v1397
        %v1399 = vadd.f32 %v1349, %v1398
        %v1400 = vadd.f32 %v1352, %v1398
        %v1401 = vadd.f32 %v1355, %v1398
        %v1402 = vadd.f32 %v1358, %v1398
        %v1403 = vadd.f32 %v1361, %v1398
        %v1404 = vadd.f32 %v1364, %v1398
        %v1405 = vadd.f32 %v1367, %v1398
        %v1406 = vadd.f32 %v1370, %v1398
        %v1407 = vadd.f32 %v1373, %v1398
        %v1408 = vadd.f32 %v1376, %v1398
        %v1409 = vadd.f32 %v1379, %v1398
        %v1410 = vadd.f32 %v1382, %v1398
        %v1411 = vadd.f32 %v1385, %v1398
        %v1412 = vadd.f32 %v1388, %v1398
        %v1413 = vadd.f32 %v1391, %v1398
        %v1414 = vadd.f32 %v1394, %v1398
        %vm1415 = vcmp.gt.f32.partialorder %v1399, 0.0
        %vm1416 = vcmp.gt.f32.partialorder %v1400, 0.0
        %vm1417 = vcmp.gt.f32.partialorder %v1401, 0.0
        %vm1418 = vcmp.gt.f32.partialorder %v1402, 0.0
        %vm1419 = vcmp.gt.f32.partialorder %v1403, 0.0
        %vm1420 = vcmp.gt.f32.partialorder %v1404, 0.0
        %vm1421 = vcmp.gt.f32.partialorder %v1405, 0.0
        %vm1422 = vcmp.gt.f32.partialorder %v1406, 0.0
        %vm1423 = vcmp.gt.f32.partialorder %v1407, 0.0
        %vm1424 = vcmp.gt.f32.partialorder %v1408, 0.0
        %vm1425 = vcmp.gt.f32.partialorder %v1409, 0.0
        %vm1426 = vcmp.gt.f32.partialorder %v1410, 0.0
        %vm1427 = vcmp.gt.f32.partialorder %v1411, 0.0
        %vm1428 = vcmp.gt.f32.partialorder %v1412, 0.0
        %vm1429 = vcmp.gt.f32.partialorder %v1413, 0.0
        %vm1430 = vcmp.gt.f32.partialorder %v1414, 0.0
        %v1431 = vmul.f32 %v1399, 0.2
        %v1432 = vmul.f32 %v1400, 0.2
        %v1433 = vmul.f32 %v1401, 0.2
        %v1434 = vmul.f32 %v1402, 0.2
        %v1435 = vmul.f32 %v1403, 0.2
        %v1436 = vmul.f32 %v1404, 0.2
        %v1437 = vmul.f32 %v1405, 0.2
        %v1438 = vmul.f32 %v1406, 0.2
        %v1439 = vmul.f32 %v1407, 0.2
        %v1440 = vmul.f32 %v1408, 0.2
        %v1441 = vmul.f32 %v1409, 0.2
        %v1442 = vmul.f32 %v1410, 0.2
        %v1443 = vmul.f32 %v1411, 0.2
        %v1444 = vmul.f32 %v1412, 0.2
        %v1445 = vmul.f32 %v1413, 0.2
        %v1446 = vmul.f32 %v1414, 0.2
        %v1447 = vsel %vm1415, %v1399, %v1431
        %v1448 = vsel %vm1416, %v1400, %v1432
        %v1449 = vsel %vm1417, %v1401, %v1433
        %v1450 = vsel %vm1418, %v1402, %v1434
        %v1451 = vsel %vm1419, %v1403, %v1435
        %v1452 = vsel %vm1420, %v1404, %v1436
        %v1453 = vsel %vm1421, %v1405, %v1437
        %v1454 = vsel %vm1422, %v1406, %v1438
        %v1455 = vsel %vm1423, %v1407, %v1439
        %v1456 = vsel %vm1424, %v1408, %v1440
        %v1457 = vsel %vm1425, %v1409, %v1441
        %v1458 = vsel %vm1426, %v1410, %v1442
        %v1459 = vsel %vm1427, %v1411, %v1443
        %v1460 = vsel %vm1428, %v1412, %v1444
        %v1461 = vsel %vm1429, %v1413, %v1445
        %v1462 = vsel %vm1430, %v1414, %v1446
        %v1463 = vsel %vm1295, 65537, 0
        %v1464 = vsel %vm1296, 65537, 0
        %v1465 = vsel %vm1297, 65537, 0
        %v1466 = vsel %vm1298, 65537, 0
        %v1467 = vsel %vm1299, 65537, 0
        %v1468 = vsel %vm1300, 65537, 0
        %v1469 = vsel %vm1301, 65537, 0
        %v1470 = vsel %vm1302, 65537, 0
        %v1471 = vsel %vm1303, 65537, 0
        %v1472 = vsel %vm1304, 65537, 0
        %v1473 = vsel %vm1305, 65537, 0
        %v1474 = vsel %vm1306, 65537, 0
        %v1475 = vsel %vm1307, 65537, 0
        %v1476 = vsel %vm1308, 65537, 0
        %v1477 = vsel %vm1309, 65537, 0
        %v1478 = vsel %vm1310, 65537, 0
        %v1479 = vunpack.c.l.b16 %v1463
        %v1480 = vunpack.c.l.b16 %v1464
        %v1481 = vunpack.c.l.b16 %v1465
        %v1482 = vunpack.c.l.b16 %v1466
        %v1483 = vunpack.c.l.b16 %v1467
        %v1484 = vunpack.c.l.b16 %v1468
        %v1485 = vunpack.c.l.b16 %v1469
        %v1486 = vunpack.c.l.b16 %v1470
        %v1487 = vunpack.c.l.b16 %v1471
        %v1488 = vunpack.c.l.b16 %v1472
        %v1489 = vunpack.c.l.b16 %v1473
        %v1490 = vunpack.c.l.b16 %v1474
        %v1491 = vunpack.c.l.b16 %v1475
        %v1492 = vunpack.c.l.b16 %v1476
        %v1493 = vunpack.c.l.b16 %v1477
        %v1494 = vunpack.c.l.b16 %v1478
        %vm1495 = vcmp.ne.s32.totalorder %v1479, 0
        %vm1496 = vcmp.ne.s32.totalorder %v1480, 0
        %vm1497 = vcmp.ne.s32.totalorder %v1481, 0
        %vm1498 = vcmp.ne.s32.totalorder %v1482, 0
        %vm1499 = vcmp.ne.s32.totalorder %v1483, 0
        %vm1500 = vcmp.ne.s32.totalorder %v1484, 0
        %vm1501 = vcmp.ne.s32.totalorder %v1485, 0
        %vm1502 = vcmp.ne.s32.totalorder %v1486, 0
        %vm1503 = vcmp.ne.s32.totalorder %v1487, 0
        %vm1504 = vcmp.ne.s32.totalorder %v1488, 0
        %vm1505 = vcmp.ne.s32.totalorder %v1489, 0
        %vm1506 = vcmp.ne.s32.totalorder %v1490, 0
        %vm1507 = vcmp.ne.s32.totalorder %v1491, 0
        %vm1508 = vcmp.ne.s32.totalorder %v1492, 0
        %vm1509 = vcmp.ne.s32.totalorder %v1493, 0
        %vm1510 = vcmp.ne.s32.totalorder %v1494, 0
        %v1511 = vsel %vm1495, %v1447, -1e+30
        %v1512 = vsel %vm1496, %v1448, -1e+30
        %v1513 = vsel %vm1497, %v1449, -1e+30
        %v1514 = vsel %vm1498, %v1450, -1e+30
        %v1515 = vsel %vm1499, %v1451, -1e+30
        %v1516 = vsel %vm1500, %v1452, -1e+30
        %v1517 = vsel %vm1501, %v1453, -1e+30
        %v1518 = vsel %vm1502, %v1454, -1e+30
        %v1519 = vsel %vm1503, %v1455, -1e+30
        %v1520 = vsel %vm1504, %v1456, -1e+30
        %v1521 = vsel %vm1505, %v1457, -1e+30
        %v1522 = vsel %vm1506, %v1458, -1e+30
        %v1523 = vsel %vm1507, %v1459, -1e+30
        %v1524 = vsel %vm1508, %v1460, -1e+30
        %v1525 = vsel %vm1509, %v1461, -1e+30
        %v1526 = vsel %vm1510, %v1462, -1e+30
        %1527 = vmax.xlane.f32.xlu0 %v1511
        %v1528 = vpop.xlane.xlu0 %1527
        %1529 = vmax.xlane.f32.xlu0 %v1512
        %v1530 = vpop.xlane.xlu0 %1529
        %1531 = vmax.xlane.f32.xlu0 %v1513
        %v1532 = vpop.xlane.xlu0 %1531
        %1533 = vmax.xlane.f32.xlu0 %v1514
        %v1534 = vpop.xlane.xlu0 %1533
        %1535 = vmax.xlane.f32.xlu0 %v1515
        %v1536 = vpop.xlane.xlu0 %1535
        %1537 = vmax.xlane.f32.xlu0 %v1516
        %v1538 = vpop.xlane.xlu0 %1537
        %1539 = vmax.xlane.f32.xlu0 %v1517
        %v1540 = vpop.xlane.xlu0 %1539
        %1541 = vmax.xlane.f32.xlu0 %v1518
        %v1542 = vpop.xlane.xlu0 %1541
        %1543 = vmax.xlane.f32.xlu0 %v1519
        %v1544 = vpop.xlane.xlu0 %1543
        %1545 = vmax.xlane.f32.xlu0 %v1520
        %v1546 = vpop.xlane.xlu0 %1545
        %1547 = vmax.xlane.f32.xlu0 %v1521
        %v1548 = vpop.xlane.xlu0 %1547
        %1549 = vmax.xlane.f32.xlu0 %v1522
        %v1550 = vpop.xlane.xlu0 %1549
        %1551 = vmax.xlane.f32.xlu0 %v1523
        %v1552 = vpop.xlane.xlu0 %1551
        %1553 = vmax.xlane.f32.xlu0 %v1524
        %v1554 = vpop.xlane.xlu0 %1553
        %1555 = vmax.xlane.f32.xlu0 %v1525
        %v1556 = vpop.xlane.xlu0 %1555
        %1557 = vmax.xlane.f32.xlu0 %v1526
        %v1558 = vpop.xlane.xlu0 %1557
        %v1559 = vsub.f32 %v1511, %v1528
        %v1560 = vsub.f32 %v1512, %v1530
        %v1561 = vsub.f32 %v1513, %v1532
        %v1562 = vsub.f32 %v1514, %v1534
        %v1563 = vsub.f32 %v1515, %v1536
        %v1564 = vsub.f32 %v1516, %v1538
        %v1565 = vsub.f32 %v1517, %v1540
        %v1566 = vsub.f32 %v1518, %v1542
        %v1567 = vsub.f32 %v1519, %v1544
        %v1568 = vsub.f32 %v1520, %v1546
        %v1569 = vsub.f32 %v1521, %v1548
        %v1570 = vsub.f32 %v1522, %v1550
        %v1571 = vsub.f32 %v1523, %v1552
        %v1572 = vsub.f32 %v1524, %v1554
        %v1573 = vsub.f32 %v1525, %v1556
        %v1574 = vsub.f32 %v1526, %v1558
        %v1575 = vmul.f32 %v1559, 1.442695
        %v1576 = vpow.pop %v1575
        %v1577 = vmul.f32 %v1560, 1.442695
        %v1578 = vpow.pop %v1577
        %v1579 = vmul.f32 %v1561, 1.442695
        %v1580 = vpow.pop %v1579
        %v1581 = vmul.f32 %v1562, 1.442695
        %v1582 = vpow.pop %v1581
        %v1583 = vmul.f32 %v1563, 1.442695
        %v1584 = vpow.pop %v1583
        %v1585 = vmul.f32 %v1564, 1.442695
        %v1586 = vpow.pop %v1585
        %v1587 = vmul.f32 %v1565, 1.442695
        %v1588 = vpow.pop %v1587
        %v1589 = vmul.f32 %v1566, 1.442695
        %v1590 = vpow.pop %v1589
        %v1591 = vmul.f32 %v1567, 1.442695
        %v1592 = vpow.pop %v1591
        %v1593 = vmul.f32 %v1568, 1.442695
        %v1594 = vpow.pop %v1593
        %v1595 = vmul.f32 %v1569, 1.442695
        %v1596 = vpow.pop %v1595
        %v1597 = vmul.f32 %v1570, 1.442695
        %v1598 = vpow.pop %v1597
        %v1599 = vmul.f32 %v1571, 1.442695
        %v1600 = vpow.pop %v1599
        %v1601 = vmul.f32 %v1572, 1.442695
        %v1602 = vpow.pop %v1601
        %v1603 = vmul.f32 %v1573, 1.442695
        %v1604 = vpow.pop %v1603
        %v1605 = vmul.f32 %v1574, 1.442695
        %v1606 = vpow.pop %v1605
        %1607 = vadd.xlane.f32.xlu0 %v1576
        %v1608 = vpop.xlane.xlu0 %1607
        %1609 = vadd.xlane.f32.xlu0 %v1578
        %v1610 = vpop.xlane.xlu0 %1609
        %1611 = vadd.xlane.f32.xlu0 %v1580
        %v1612 = vpop.xlane.xlu0 %1611
        %1613 = vadd.xlane.f32.xlu0 %v1582
        %v1614 = vpop.xlane.xlu0 %1613
        %1615 = vadd.xlane.f32.xlu0 %v1584
        %v1616 = vpop.xlane.xlu0 %1615
        %1617 = vadd.xlane.f32.xlu0 %v1586
        %v1618 = vpop.xlane.xlu0 %1617
        %1619 = vadd.xlane.f32.xlu0 %v1588
        %v1620 = vpop.xlane.xlu0 %1619
        %1621 = vadd.xlane.f32.xlu0 %v1590
        %v1622 = vpop.xlane.xlu0 %1621
        %1623 = vadd.xlane.f32.xlu0 %v1592
        %v1624 = vpop.xlane.xlu0 %1623
        %1625 = vadd.xlane.f32.xlu0 %v1594
        %v1626 = vpop.xlane.xlu0 %1625
        %1627 = vadd.xlane.f32.xlu0 %v1596
        %v1628 = vpop.xlane.xlu0 %1627
        %1629 = vadd.xlane.f32.xlu0 %v1598
        %v1630 = vpop.xlane.xlu0 %1629
        %1631 = vadd.xlane.f32.xlu0 %v1600
        %v1632 = vpop.xlane.xlu0 %1631
        %1633 = vadd.xlane.f32.xlu0 %v1602
        %v1634 = vpop.xlane.xlu0 %1633
        %1635 = vadd.xlane.f32.xlu0 %v1604
        %v1636 = vpop.xlane.xlu0 %1635
        %1637 = vadd.xlane.f32.xlu0 %v1606
        %v1638 = vpop.xlane.xlu0 %1637
        %v1639 = vrcp.pop %v1608
        %v1640 = vrcp.pop %v1610
        %v1641 = vrcp.pop %v1612
        %v1642 = vrcp.pop %v1614
        %v1643 = vrcp.pop %v1616
        %v1644 = vrcp.pop %v1618
        %v1645 = vrcp.pop %v1620
        %v1646 = vrcp.pop %v1622
        %v1647 = vrcp.pop %v1624
        %v1648 = vrcp.pop %v1626
        %v1649 = vrcp.pop %v1628
        %v1650 = vrcp.pop %v1630
        %v1651 = vrcp.pop %v1632
        %v1652 = vrcp.pop %v1634
        %v1653 = vrcp.pop %v1636
        %v1654 = vrcp.pop %v1638
        %v1655 = vpack.c.bf16 %v1578, %v1576
        %v1656 = vpack.c.bf16 %v1582, %v1580
        %v1657 = vpack.c.bf16 %v1586, %v1584
        %v1658 = vpack.c.bf16 %v1590, %v1588
        %v1659 = vpack.c.bf16 %v1594, %v1592
        %v1660 = vpack.c.bf16 %v1598, %v1596
        %v1661 = vpack.c.bf16 %v1602, %v1600
        %v1662 = vpack.c.bf16 %v1606, %v1604
        %v1663 = vld [vmem:[#allocation4] sm:$0xf]
        %v1664 = vld [vmem:[#allocation4 + $0x4] sm:$0xf]
        %v1665 = vld [vmem:[#allocation4 + $0x8] sm:$0xf]
        %v1666 = vld [vmem:[#allocation4 + $0xc] sm:$0xf]
        %v1667 = vld [vmem:[#allocation4 + $0x10] sm:$0xf]
        %v1668 = vld [vmem:[#allocation4 + $0x14] sm:$0xf]
        %v1669 = vld [vmem:[#allocation4 + $0x18] sm:$0xf]
        %v1670 = vld [vmem:[#allocation4 + $0x1c] sm:$0xf]
        %v1671 = vld [vmem:[#allocation4 + $0x20] sm:$0xf]
        %v1672 = vld [vmem:[#allocation4 + $0x24] sm:$0xf]
        %v1673 = vld [vmem:[#allocation4 + $0x28] sm:$0xf]
        %v1674 = vld [vmem:[#allocation4 + $0x2c] sm:$0xf]
        %v1675 = vld [vmem:[#allocation4 + $0x30] sm:$0xf]
        %v1676 = vld [vmem:[#allocation4 + $0x34] sm:$0xf]
        %v1677 = vld [vmem:[#allocation4 + $0x38] sm:$0xf]
        %v1678 = vld [vmem:[#allocation4 + $0x3c] sm:$0xf]
        %v1695 = vunpack.c.l.b16 %v1663
        %v1696 = vunpack.c.l.b16 %v1664
        %v1697 = vunpack.c.l.b16 %v1665
        %v1698 = vunpack.c.l.b16 %v1666
        %v1699 = vunpack.c.l.b16 %v1667
        %v1700 = vunpack.c.l.b16 %v1668
        %v1701 = vunpack.c.l.b16 %v1669
        %v1702 = vunpack.c.l.b16 %v1670
        %v1703 = vunpack.c.l.b16 %v1671
        %v1704 = vunpack.c.l.b16 %v1672
        %v1705 = vunpack.c.l.b16 %v1673
        %v1706 = vunpack.c.l.b16 %v1674
        %v1707 = vunpack.c.l.b16 %v1675
        %v1708 = vunpack.c.l.b16 %v1676
        %v1709 = vunpack.c.l.b16 %v1677
        %v1710 = vunpack.c.l.b16 %v1678
        %v1711 = vpack.c.b16 %v1696, %v1695
        %v1712 = vpack.c.b16 %v1698, %v1697
        %v1713 = vpack.c.b16 %v1700, %v1699
        %v1714 = vpack.c.b16 %v1702, %v1701
        %v1715 = vpack.c.b16 %v1704, %v1703
        %v1716 = vpack.c.b16 %v1706, %v1705
        %v1717 = vpack.c.b16 %v1708, %v1707
        %v1718 = vpack.c.b16 %v1710, %v1709
        %1727 = vmatprep.subr.bf16.mxu0 0
        %1728 = vmatpush1.bf16.msra.mxu0 %v1718
        %1729 = vmatprep.subr.bf16.mxu0 0
        %1730 = vmatpush1.bf16.msra.mxu0 %v1717
        %1731 = vmatprep.subr.bf16.mxu0 0
        %1732 = vmatpush1.bf16.msra.mxu0 %v1716
        %1733 = vmatprep.subr.bf16.mxu0 0
        %1734 = vmatpush1.bf16.msra.mxu0 %v1715
        %1735 = vmatprep.subr.bf16.mxu0 0
        %1736 = vmatpush1.bf16.msra.mxu0 %v1714
        %1737 = vmatprep.subr.bf16.mxu0 0
        %1738 = vmatpush1.bf16.msra.mxu0 %v1713
        %1739 = vmatprep.subr.bf16.mxu0 0
        %1740 = vmatpush1.bf16.msra.mxu0 %v1712
        %1741 = vmatprep.subr.bf16.mxu0 0
        %1742 = vmatpush1.bf16.msra.mxu0 %v1711
        %1743 = vmatprep.subr.bf16.mxu0 0
        %1744 = vmatpush2.bf16.msra.mxu0 0
        %1745 = vmatprep.subr.bf16.mxu0 0
        %1746 = vmatpush2.bf16.msra.mxu0 0
        %1747 = vmatprep.subr.bf16.mxu0 0
        %1748 = vmatpush2.bf16.msra.mxu0 0
        %1749 = vmatprep.subr.bf16.mxu0 0
        %1750 = vmatpush2.bf16.msra.mxu0 0
        %1751 = vmatprep.subr.bf16.mxu0 0
        %1752 = vmatpush2.bf16.msra.mxu0 0
        %1753 = vmatprep.subr.bf16.mxu0 0
        %1754 = vmatpush2.bf16.msra.mxu0 0
        %1755 = vmatprep.subr.bf16.mxu0 0
        %1756 = vmatpush2.bf16.msra.mxu0 0
        %1757 = vmatprep.subr.bf16.mxu0 0
        %1758 = vmatpush2.bf16.msra.mxu0 0
        %1759 = vmatprep.mubr.bf16.mxu0 0
        %1760 = vmatmul.mubr.bf16.gmra.mxu0 %v1655
        %v1761 = vpop.f32.mrf.mxu0
        %v1762 = vadd.f32 0.0, %v1761
        %v1763 = vpop.f32.mrf.mxu0
        %v1764 = vpop.f32.mrf.mxu0
        %v1765 = vadd.f32 0.0, %v1764
        %v1766 = vpop.f32.mrf.mxu0
        %1767 = vmatprep.mubr.bf16.mxu0 0
        %1768 = vmatmul.mubr.bf16.gmra.mxu0 %v1656
        %v1769 = vpop.f32.mrf.mxu0
        %v1770 = vadd.f32 0.0, %v1769
        %v1771 = vpop.f32.mrf.mxu0
        %v1772 = vpop.f32.mrf.mxu0
        %v1773 = vadd.f32 0.0, %v1772
        %v1774 = vpop.f32.mrf.mxu0
        %1775 = vmatprep.mubr.bf16.mxu0 0
        %1776 = vmatmul.mubr.bf16.gmra.mxu0 %v1657
        %v1777 = vpop.f32.mrf.mxu0
        %v1778 = vadd.f32 0.0, %v1777
        %v1779 = vpop.f32.mrf.mxu0
        %v1780 = vpop.f32.mrf.mxu0
        %v1781 = vadd.f32 0.0, %v1780
        %v1782 = vpop.f32.mrf.mxu0
        %1783 = vmatprep.mubr.bf16.mxu0 0
        %1784 = vmatmul.mubr.bf16.gmra.mxu0 %v1658
        %v1785 = vpop.f32.mrf.mxu0
        %v1786 = vadd.f32 0.0, %v1785
        %v1787 = vpop.f32.mrf.mxu0
        %v1788 = vpop.f32.mrf.mxu0
        %v1789 = vadd.f32 0.0, %v1788
        %v1790 = vpop.f32.mrf.mxu0
        %1791 = vmatprep.mubr.bf16.mxu0 0
        %1792 = vmatmul.mubr.bf16.gmra.mxu0 %v1659
        %v1793 = vpop.f32.mrf.mxu0
        %v1794 = vadd.f32 0.0, %v1793
        %v1795 = vpop.f32.mrf.mxu0
        %v1796 = vpop.f32.mrf.mxu0
        %v1797 = vadd.f32 0.0, %v1796
        %v1798 = vpop.f32.mrf.mxu0
        %1799 = vmatprep.mubr.bf16.mxu0 0
        %1800 = vmatmul.mubr.bf16.gmra.mxu0 %v1660
        %v1801 = vpop.f32.mrf.mxu0
        %v1802 = vadd.f32 0.0, %v1801
        %v1803 = vpop.f32.mrf.mxu0
        %v1804 = vpop.f32.mrf.mxu0
        %v1805 = vadd.f32 0.0, %v1804
        %v1806 = vpop.f32.mrf.mxu0
        %1807 = vmatprep.mubr.bf16.mxu0 0
        %1808 = vmatmul.mubr.bf16.gmra.mxu0 %v1661
        %v1809 = vpop.f32.mrf.mxu0
        %v1810 = vadd.f32 0.0, %v1809
        %v1811 = vpop.f32.mrf.mxu0
        %v1812 = vpop.f32.mrf.mxu0
        %v1813 = vadd.f32 0.0, %v1812
        %v1814 = vpop.f32.mrf.mxu0
        %1815 = vmatprep.mubr.bf16.mxu0 0
        %1816 = vmatmul.mubr.bf16.gmra.mxu0 %v1662
        %v1817 = vpop.f32.mrf.mxu0
        %v1818 = vadd.f32 0.0, %v1817
        %v1819 = vpop.f32.mrf.mxu0
        %v1820 = vpop.f32.mrf.mxu0
        %v1821 = vadd.f32 0.0, %v1820
        %v1822 = vpop.f32.mrf.mxu0
        %1823 = vdwg.mxu0
        %v1824 = vmul.f32 %v1762, %v1639
        %v1825 = vmul.f32 %v1765, %v1640
        %v1826 = vmul.f32 %v1770, %v1641
        %v1827 = vmul.f32 %v1773, %v1642
        %v1828 = vmul.f32 %v1778, %v1643
        %v1829 = vmul.f32 %v1781, %v1644
        %v1830 = vmul.f32 %v1786, %v1645
        %v1831 = vmul.f32 %v1789, %v1646
        %v1832 = vmul.f32 %v1794, %v1647
        %v1833 = vmul.f32 %v1797, %v1648
        %v1834 = vmul.f32 %v1802, %v1649
        %v1835 = vmul.f32 %v1805, %v1650
        %v1836 = vmul.f32 %v1810, %v1651
        %v1837 = vmul.f32 %v1813, %v1652
        %v1838 = vmul.f32 %v1818, %v1653
        %v1839 = vmul.f32 %v1821, %v1654
        %v1840 = vlaneseq
        %v1841 = vshrl.u32 %v1840, 7
        %v1842 = vsub.s32 3, %v1841
        %v1843 = vrot.slane %v426, %v1842
        %v1844 = vadd.f32 %v1824, %v1843
        %v1845 = vadd.f32 %v1825, %v1843
        %v1846 = vadd.f32 %v1826, %v1843
        %v1847 = vadd.f32 %v1827, %v1843
        %v1848 = vadd.f32 %v1828, %v1843
        %v1849 = vadd.f32 %v1829, %v1843
        %v1850 = vadd.f32 %v1830, %v1843
        %v1851 = vadd.f32 %v1831, %v1843
        %v1852 = vadd.f32 %v1832, %v1843
        %v1853 = vadd.f32 %v1833, %v1843
        %v1854 = vadd.f32 %v1834, %v1843
        %v1855 = vadd.f32 %v1835, %v1843
        %v1856 = vadd.f32 %v1836, %v1843
        %v1857 = vadd.f32 %v1837, %v1843
        %v1858 = vadd.f32 %v1838, %v1843
        %v1859 = vadd.f32 %v1839, %v1843
        %v1860 = vmax.f32 %v1844, 0.0
        %v1861 = vmax.f32 %v1845, 0.0
        %v1862 = vmax.f32 %v1846, 0.0
        %v1863 = vmax.f32 %v1847, 0.0
        %v1864 = vmax.f32 %v1848, 0.0
        %v1865 = vmax.f32 %v1849, 0.0
        %v1866 = vmax.f32 %v1850, 0.0
        %v1867 = vmax.f32 %v1851, 0.0
        %v1868 = vmax.f32 %v1852, 0.0
        %v1869 = vmax.f32 %v1853, 0.0
        %v1870 = vmax.f32 %v1854, 0.0
        %v1871 = vmax.f32 %v1855, 0.0
        %v1872 = vmax.f32 %v1856, 0.0
        %v1873 = vmax.f32 %v1857, 0.0
        %v1874 = vmax.f32 %v1858, 0.0
        %v1875 = vmax.f32 %v1859, 0.0
        %1876 = vst.msk [vmem:[#allocation2] sm:$0xff] %vm448, %v1860
        %1877 = vst.msk [vmem:[#allocation2 + $0x8] sm:$0xff] %vm448, %v1861
        %1878 = vst.msk [vmem:[#allocation2 + $0x10] sm:$0xff] %vm448, %v1862
        %1879 = vst.msk [vmem:[#allocation2 + $0x18] sm:$0xff] %vm448, %v1863
        %1880 = vst.msk [vmem:[#allocation2 + $0x20] sm:$0xff] %vm448, %v1864
        %1881 = vst.msk [vmem:[#allocation2 + $0x28] sm:$0xff] %vm448, %v1865
        %1882 = vst.msk [vmem:[#allocation2 + $0x30] sm:$0xff] %vm448, %v1866
        %1883 = vst.msk [vmem:[#allocation2 + $0x38] sm:$0xff] %vm448, %v1867
        %1884 = vst.msk [vmem:[#allocation2 + $0x40] sm:$0xff] %vm448, %v1868
        %1885 = vst.msk [vmem:[#allocation2 + $0x48] sm:$0xff] %vm448, %v1869
        %1886 = vst.msk [vmem:[#allocation2 + $0x50] sm:$0xff] %vm448, %v1870
        %1887 = vst.msk [vmem:[#allocation2 + $0x58] sm:$0xff] %vm448, %v1871
        %1888 = vst.msk [vmem:[#allocation2 + $0x60] sm:$0xff] %vm448, %v1872
        %1889 = vst.msk [vmem:[#allocation2 + $0x68] sm:$0xff] %vm448, %v1873
        %1890 = vst.msk [vmem:[#allocation2 + $0x70] sm:$0xff] %vm448, %v1874
        %1891 = vst.msk [vmem:[#allocation2 + $0x78] sm:$0xff] %vm448, %v1875
        %v1892 = vld [vmem:[#allocation2] sm:$0xff]
        %v1893 = vld [vmem:[#allocation2 + $0x8] sm:$0xff]
        %v1894 = vld [vmem:[#allocation2 + $0x10] sm:$0xff]
        %v1895 = vld [vmem:[#allocation2 + $0x18] sm:$0xff]
        %v1896 = vld [vmem:[#allocation2 + $0x20] sm:$0xff]
        %v1897 = vld [vmem:[#allocation2 + $0x28] sm:$0xff]
        %v1898 = vld [vmem:[#allocation2 + $0x30] sm:$0xff]
        %v1899 = vld [vmem:[#allocation2 + $0x38] sm:$0xff]
        %v1900 = vld [vmem:[#allocation2 + $0x40] sm:$0xff]
        %v1901 = vld [vmem:[#allocation2 + $0x48] sm:$0xff]
        %v1902 = vld [vmem:[#allocation2 + $0x50] sm:$0xff]
        %v1903 = vld [vmem:[#allocation2 + $0x58] sm:$0xff]
        %v1904 = vld [vmem:[#allocation2 + $0x60] sm:$0xff]
        %v1905 = vld [vmem:[#allocation2 + $0x68] sm:$0xff]
        %v1906 = vld [vmem:[#allocation2 + $0x70] sm:$0xff]
        %v1907 = vld [vmem:[#allocation2 + $0x78] sm:$0xff]
        %v1908 = vld [vmem:[#allocation10] sm:$0xff]
        %v1909 = vld [vmem:[#allocation10 + $0x8] sm:$0xff]
        %v1910 = vld [vmem:[#allocation10 + $0x10] sm:$0xff]
        %v1911 = vld [vmem:[#allocation10 + $0x18] sm:$0xff]
        %v1913 = vsel %vm448, %v1892, 0
        %v1916 = vsel %vm448, %v1893, 0
        %v1919 = vsel %vm448, %v1894, 0
        %v1922 = vsel %vm448, %v1895, 0
        %v1925 = vsel %vm448, %v1896, 0
        %v1928 = vsel %vm448, %v1897, 0
        %v1931 = vsel %vm448, %v1898, 0
        %v1934 = vsel %vm448, %v1899, 0
        %v1937 = vsel %vm448, %v1900, 0
        %v1940 = vsel %vm448, %v1901, 0
        %v1943 = vsel %vm448, %v1902, 0
        %v1946 = vsel %vm448, %v1903, 0
        %v1949 = vsel %vm448, %v1904, 0
        %v1952 = vsel %vm448, %v1905, 0
        %v1955 = vsel %vm448, %v1906, 0
        %v1958 = vsel %vm448, %v1907, 0
        %1960 = vmatprep.subr.mxu0 0.0
        %1961 = vmatpush1.msra.mxu0 0.0
        %1962 = vmatprep.subr.mxu0 0.0
        %1963 = vmatpush1.msra.mxu0 0.0
        %1964 = vmatprep.subr.mxu0 0.0
        %1965 = vmatpush1.msra.mxu0 0.0
        %1966 = vmatprep.subr.mxu0 0.0
        %1967 = vmatpush1.msra.mxu0 0.0
        %1968 = vmatprep.subr.mxu0 0.0
        %1969 = vmatpush1.msra.mxu0 0.0
        %1970 = vmatprep.subr.mxu0 0.0
        %1971 = vmatpush1.msra.mxu0 0.0
        %1972 = vmatprep.subr.mxu0 0.0
        %1973 = vmatpush1.msra.mxu0 0.0
        %1974 = vmatprep.subr.mxu0 0.0
        %1975 = vmatpush1.msra.mxu0 0.0
        %1976 = vmatprep.subr.mxu0 0.0
        %1977 = vmatpush1.msra.mxu0 0.0
        %1978 = vmatprep.subr.mxu0 0.0
        %1979 = vmatpush1.msra.mxu0 0.0
        %1980 = vmatprep.subr.mxu0 0.0
        %1981 = vmatpush1.msra.mxu0 0.0
        %1982 = vmatprep.subr.mxu0 0.0
        %1983 = vmatpush1.msra.mxu0 0.0
        %1984 = vmatprep.subr.mxu0 0.0
        %1985 = vmatpush1.msra.mxu0 %v1911
        %1986 = vmatprep.subr.mxu0 0.0
        %1987 = vmatpush1.msra.mxu0 %v1910
        %1988 = vmatprep.subr.mxu0 0.0
        %1989 = vmatpush1.msra.mxu0 %v1909
        %1990 = vmatprep.subr.mxu0 0.0
        %1991 = vmatpush1.msra.mxu0 %v1908
        %1992 = vmatprep.subr.mxu0 0.0
        %1993 = vmatpush2.msra.mxu0 0.0
        %1994 = vmatprep.subr.mxu0 0.0
        %1995 = vmatpush2.msra.mxu0 0.0
        %1996 = vmatprep.subr.mxu0 0.0
        %1997 = vmatpush2.msra.mxu0 0.0
        %1998 = vmatprep.subr.mxu0 0.0
        %1999 = vmatpush2.msra.mxu0 0.0
        %2000 = vmatprep.subr.mxu0 0.0
        %2001 = vmatpush2.msra.mxu0 0.0
        %2002 = vmatprep.subr.mxu0 0.0
        %2003 = vmatpush2.msra.mxu0 0.0
        %2004 = vmatprep.subr.mxu0 0.0
        %2005 = vmatpush2.msra.mxu0 0.0
        %2006 = vmatprep.subr.mxu0 0.0
        %2007 = vmatpush2.msra.mxu0 0.0
        %2008 = vmatprep.subr.mxu0 0.0
        %2009 = vmatpush2.msra.mxu0 0.0
        %2010 = vmatprep.subr.mxu0 0.0
        %2011 = vmatpush2.msra.mxu0 0.0
        %2012 = vmatprep.subr.mxu0 0.0
        %2013 = vmatpush2.msra.mxu0 0.0
        %2014 = vmatprep.subr.mxu0 0.0
        %2015 = vmatpush2.msra.mxu0 0.0
        %2016 = vmatprep.subr.mxu0 0.0
        %2017 = vmatpush2.msra.mxu0 0.0
        %2018 = vmatprep.subr.mxu0 0.0
        %2019 = vmatpush2.msra.mxu0 0.0
        %2020 = vmatprep.subr.mxu0 0.0
        %2021 = vmatpush2.msra.mxu0 0.0
        %2022 = vmatprep.subr.mxu0 0.0
        %2023 = vmatpush2.msra.mxu0 0.0
        %2024 = vmatprep.mubr.f32.mxu0 0.0
        %2025 = vmatmul.mubr.f32.gmra.mxu0 %v1913
        %v2026 = vpop.f32.mrf.mxu0
        %v2027 = vadd.f32 0.0, %v2026
        %v2028 = vpop.f32.mrf.mxu0
        %2029 = vmatprep.mubr.f32.mxu0 0.0
        %2030 = vmatmul.mubr.f32.gmra.mxu0 %v1916
        %v2031 = vpop.f32.mrf.mxu0
        %v2032 = vadd.f32 0.0, %v2031
        %v2033 = vpop.f32.mrf.mxu0
        %2034 = vmatprep.mubr.f32.mxu0 0.0
        %2035 = vmatmul.mubr.f32.gmra.mxu0 %v1919
        %v2036 = vpop.f32.mrf.mxu0
        %v2037 = vadd.f32 0.0, %v2036
        %v2038 = vpop.f32.mrf.mxu0
        %2039 = vmatprep.mubr.f32.mxu0 0.0
        %2040 = vmatmul.mubr.f32.gmra.mxu0 %v1922
        %v2041 = vpop.f32.mrf.mxu0
        %v2042 = vadd.f32 0.0, %v2041
        %v2043 = vpop.f32.mrf.mxu0
        %2044 = vmatprep.mubr.f32.mxu0 0.0
        %2045 = vmatmul.mubr.f32.gmra.mxu0 %v1925
        %v2046 = vpop.f32.mrf.mxu0
        %v2047 = vadd.f32 0.0, %v2046
        %v2048 = vpop.f32.mrf.mxu0
        %2049 = vmatprep.mubr.f32.mxu0 0.0
        %2050 = vmatmul.mubr.f32.gmra.mxu0 %v1928
        %v2051 = vpop.f32.mrf.mxu0
        %v2052 = vadd.f32 0.0, %v2051
        %v2053 = vpop.f32.mrf.mxu0
        %2054 = vmatprep.mubr.f32.mxu0 0.0
        %2055 = vmatmul.mubr.f32.gmra.mxu0 %v1931
        %v2056 = vpop.f32.mrf.mxu0
        %v2057 = vadd.f32 0.0, %v2056
        %v2058 = vpop.f32.mrf.mxu0
        %2059 = vmatprep.mubr.f32.mxu0 0.0
        %2060 = vmatmul.mubr.f32.gmra.mxu0 %v1934
        %v2061 = vpop.f32.mrf.mxu0
        %v2062 = vadd.f32 0.0, %v2061
        %v2063 = vpop.f32.mrf.mxu0
        %2064 = vmatprep.mubr.f32.mxu0 0.0
        %2065 = vmatmul.mubr.f32.gmra.mxu0 %v1937
        %v2066 = vpop.f32.mrf.mxu0
        %v2067 = vadd.f32 0.0, %v2066
        %v2068 = vpop.f32.mrf.mxu0
        %2069 = vmatprep.mubr.f32.mxu0 0.0
        %2070 = vmatmul.mubr.f32.gmra.mxu0 %v1940
        %v2071 = vpop.f32.mrf.mxu0
        %v2072 = vadd.f32 0.0, %v2071
        %v2073 = vpop.f32.mrf.mxu0
        %2074 = vmatprep.mubr.f32.mxu0 0.0
        %2075 = vmatmul.mubr.f32.gmra.mxu0 %v1943
        %v2076 = vpop.f32.mrf.mxu0
        %v2077 = vadd.f32 0.0, %v2076
        %v2078 = vpop.f32.mrf.mxu0
        %2079 = vmatprep.mubr.f32.mxu0 0.0
        %2080 = vmatmul.mubr.f32.gmra.mxu0 %v1946
        %v2081 = vpop.f32.mrf.mxu0
        %v2082 = vadd.f32 0.0, %v2081
        %v2083 = vpop.f32.mrf.mxu0
        %2084 = vmatprep.mubr.f32.mxu0 0.0
        %2085 = vmatmul.mubr.f32.gmra.mxu0 %v1949
        %v2086 = vpop.f32.mrf.mxu0
        %v2087 = vadd.f32 0.0, %v2086
        %v2088 = vpop.f32.mrf.mxu0
        %2089 = vmatprep.mubr.f32.mxu0 0.0
        %2090 = vmatmul.mubr.f32.gmra.mxu0 %v1952
        %v2091 = vpop.f32.mrf.mxu0
        %v2092 = vadd.f32 0.0, %v2091
        %v2093 = vpop.f32.mrf.mxu0
        %2094 = vmatprep.mubr.f32.mxu0 0.0
        %2095 = vmatmul.mubr.f32.gmra.mxu0 %v1955
        %v2096 = vpop.f32.mrf.mxu0
        %v2097 = vadd.f32 0.0, %v2096
        %v2098 = vpop.f32.mrf.mxu0
        %2099 = vmatprep.mubr.f32.mxu0 0.0
        %2100 = vmatmul.mubr.f32.gmra.mxu0 %v1958
        %v2101 = vpop.f32.mrf.mxu0
        %v2102 = vadd.f32 0.0, %v2101
        %v2103 = vpop.f32.mrf.mxu0
        %2104 = vdwg.mxu0
        %2105 = vst.msk [vmem:[#allocation3] sm:$0xff] %vm448, %v2027
        %2106 = vst.msk [vmem:[#allocation3 + $0x8] sm:$0xff] %vm448, %v2032
        %2107 = vst.msk [vmem:[#allocation3 + $0x10] sm:$0xff] %vm448, %v2037
        %2108 = vst.msk [vmem:[#allocation3 + $0x18] sm:$0xff] %vm448, %v2042
        %2109 = vst.msk [vmem:[#allocation3 + $0x20] sm:$0xff] %vm448, %v2047
        %2110 = vst.msk [vmem:[#allocation3 + $0x28] sm:$0xff] %vm448, %v2052
        %2111 = vst.msk [vmem:[#allocation3 + $0x30] sm:$0xff] %vm448, %v2057
        %2112 = vst.msk [vmem:[#allocation3 + $0x38] sm:$0xff] %vm448, %v2062
        %2113 = vst.msk [vmem:[#allocation3 + $0x40] sm:$0xff] %vm448, %v2067
        %2114 = vst.msk [vmem:[#allocation3 + $0x48] sm:$0xff] %vm448, %v2072
        %2115 = vst.msk [vmem:[#allocation3 + $0x50] sm:$0xff] %vm448, %v2077
        %2116 = vst.msk [vmem:[#allocation3 + $0x58] sm:$0xff] %vm448, %v2082
        %2117 = vst.msk [vmem:[#allocation3 + $0x60] sm:$0xff] %vm448, %v2087
        %2118 = vst.msk [vmem:[#allocation3 + $0x68] sm:$0xff] %vm448, %v2092
        %2119 = vst.msk [vmem:[#allocation3 + $0x70] sm:$0xff] %vm448, %v2097
        %2120 = vst.msk [vmem:[#allocation3 + $0x78] sm:$0xff] %vm448, %v2102
        %2137 = vrot.lane.b32.xlu0 %v2027, 96
        %v2138 = vpop.permute.xlu0 %2137
        %2139 = vrot.lane.b32.xlu0 %v2032, 96
        %v2140 = vpop.permute.xlu0 %2139
        %2141 = vrot.lane.b32.xlu0 %v2037, 96
        %v2142 = vpop.permute.xlu0 %2141
        %2143 = vrot.lane.b32.xlu0 %v2042, 96
        %v2144 = vpop.permute.xlu0 %2143
        %2145 = vrot.lane.b32.xlu0 %v2047, 96
        %v2146 = vpop.permute.xlu0 %2145
        %2147 = vrot.lane.b32.xlu0 %v2052, 96
        %v2148 = vpop.permute.xlu0 %2147
        %2149 = vrot.lane.b32.xlu0 %v2057, 96
        %v2150 = vpop.permute.xlu0 %2149
        %2151 = vrot.lane.b32.xlu0 %v2062, 96
        %v2152 = vpop.permute.xlu0 %2151
        %2153 = vrot.lane.b32.xlu0 %v2067, 96
        %v2154 = vpop.permute.xlu0 %2153
        %2155 = vrot.lane.b32.xlu0 %v2072, 96
        %v2156 = vpop.permute.xlu0 %2155
        %2157 = vrot.lane.b32.xlu0 %v2077, 96
        %v2158 = vpop.permute.xlu0 %2157
        %2159 = vrot.lane.b32.xlu0 %v2082, 96
        %v2160 = vpop.permute.xlu0 %2159
        %2161 = vrot.lane.b32.xlu0 %v2087, 96
        %v2162 = vpop.permute.xlu0 %2161
        %2163 = vrot.lane.b32.xlu0 %v2092, 96
        %v2164 = vpop.permute.xlu0 %2163
        %2165 = vrot.lane.b32.xlu0 %v2097, 96
        %v2166 = vpop.permute.xlu0 %2165
        %2167 = vrot.lane.b32.xlu0 %v2102, 96
        %v2168 = vpop.permute.xlu0 %2167
        %s2185 = scalar_lea.vmem [#allocation3], 128
        %2186 = vst.msk [vmem:[%s2185] sm:$0xff] %vm448, %v2138
        %2187 = vst.msk [vmem:[%s2185 + $0x8] sm:$0xff] %vm448, %v2140
        %2188 = vst.msk [vmem:[%s2185 + $0x10] sm:$0xff] %vm448, %v2142
        %2189 = vst.msk [vmem:[%s2185 + $0x18] sm:$0xff] %vm448, %v2144
        %2190 = vst.msk [vmem:[%s2185 + $0x20] sm:$0xff] %vm448, %v2146
        %2191 = vst.msk [vmem:[%s2185 + $0x28] sm:$0xff] %vm448, %v2148
        %2192 = vst.msk [vmem:[%s2185 + $0x30] sm:$0xff] %vm448, %v2150
        %2193 = vst.msk [vmem:[%s2185 + $0x38] sm:$0xff] %vm448, %v2152
        %2194 = vst.msk [vmem:[%s2185 + $0x40] sm:$0xff] %vm448, %v2154
        %2195 = vst.msk [vmem:[%s2185 + $0x48] sm:$0xff] %vm448, %v2156
        %2196 = vst.msk [vmem:[%s2185 + $0x50] sm:$0xff] %vm448, %v2158
        %2197 = vst.msk [vmem:[%s2185 + $0x58] sm:$0xff] %vm448, %v2160
        %2198 = vst.msk [vmem:[%s2185 + $0x60] sm:$0xff] %vm448, %v2162
        %2199 = vst.msk [vmem:[%s2185 + $0x68] sm:$0xff] %vm448, %v2164
        %2200 = vst.msk [vmem:[%s2185 + $0x70] sm:$0xff] %vm448, %v2166
        %2201 = vst.msk [vmem:[%s2185 + $0x78] sm:$0xff] %vm448, %v2168
        %v2202 = vpack.c.bf16 %v2032, %v2027
        %v2203 = vpack.c.bf16 %v2042, %v2037
        %v2204 = vpack.c.bf16 %v2052, %v2047
        %v2205 = vpack.c.bf16 %v2062, %v2057
        %v2206 = vpack.c.bf16 %v2072, %v2067
        %v2207 = vpack.c.bf16 %v2082, %v2077
        %v2208 = vpack.c.bf16 %v2092, %v2087
        %v2209 = vpack.c.bf16 %v2102, %v2097
        %v2218 = vunpack.c.l.b16 %v2202
        %v2219 = vunpack.c.h.b16 %v2202
        %v2220 = vunpack.c.l.b16 %v2203
        %v2221 = vunpack.c.h.b16 %v2203
        %v2222 = vunpack.c.l.b16 %v2204
        %v2223 = vunpack.c.h.b16 %v2204
        %v2224 = vunpack.c.l.b16 %v2205
        %v2225 = vunpack.c.h.b16 %v2205
        %v2226 = vunpack.c.l.b16 %v2206
        %v2227 = vunpack.c.h.b16 %v2206
        %v2228 = vunpack.c.l.b16 %v2207
        %v2229 = vunpack.c.h.b16 %v2207
        %v2230 = vunpack.c.l.b16 %v2208
        %v2231 = vunpack.c.h.b16 %v2208
        %v2232 = vunpack.c.l.b16 %v2209
        %v2233 = vunpack.c.h.b16 %v2209
        %v2234 = vpack.c.b16 %v2218, %v2218
        %v2235 = vpack.c.b16 %v2219, %v2219
        %v2236 = vpack.c.b16 %v2220, %v2220
        %v2237 = vpack.c.b16 %v2221, %v2221
        %v2238 = vpack.c.b16 %v2222, %v2222
        %v2239 = vpack.c.b16 %v2223, %v2223
        %v2240 = vpack.c.b16 %v2224, %v2224
        %v2241 = vpack.c.b16 %v2225, %v2225
        %v2242 = vpack.c.b16 %v2226, %v2226
        %v2243 = vpack.c.b16 %v2227, %v2227
        %v2244 = vpack.c.b16 %v2228, %v2228
        %v2245 = vpack.c.b16 %v2229, %v2229
        %v2246 = vpack.c.b16 %v2230, %v2230
        %v2247 = vpack.c.b16 %v2231, %v2231
        %v2248 = vpack.c.b16 %v2232, %v2232
        %v2249 = vpack.c.b16 %v2233, %v2233
        %2266 = vst.msk [vmem:[#allocation4] sm:$0xf] %vm1140, %v2234
        %2267 = vst.msk [vmem:[#allocation4 + $0x4] sm:$0xf] %vm1140, %v2235
        %2268 = vst.msk [vmem:[#allocation4 + $0x8] sm:$0xf] %vm1140, %v2236
        %2269 = vst.msk [vmem:[#allocation4 + $0xc] sm:$0xf] %vm1140, %v2237
        %2270 = vst.msk [vmem:[#allocation4 + $0x10] sm:$0xf] %vm1140, %v2238
        %2271 = vst.msk [vmem:[#allocation4 + $0x14] sm:$0xf] %vm1140, %v2239
        %2272 = vst.msk [vmem:[#allocation4 + $0x18] sm:$0xf] %vm1140, %v2240
        %2273 = vst.msk [vmem:[#allocation4 + $0x1c] sm:$0xf] %vm1140, %v2241
        %2274 = vst.msk [vmem:[#allocation4 + $0x20] sm:$0xf] %vm1140, %v2242
        %2275 = vst.msk [vmem:[#allocation4 + $0x24] sm:$0xf] %vm1140, %v2243
        %2276 = vst.msk [vmem:[#allocation4 + $0x28] sm:$0xf] %vm1140, %v2244
        %2277 = vst.msk [vmem:[#allocation4 + $0x2c] sm:$0xf] %vm1140, %v2245
        %2278 = vst.msk [vmem:[#allocation4 + $0x30] sm:$0xf] %vm1140, %v2246
        %2279 = vst.msk [vmem:[#allocation4 + $0x34] sm:$0xf] %vm1140, %v2247
        %2280 = vst.msk [vmem:[#allocation4 + $0x38] sm:$0xf] %vm1140, %v2248
        %2281 = vst.msk [vmem:[#allocation4 + $0x3c] sm:$0xf] %vm1140, %v2249
        %2282 = vrot.lane.b32.xlu0 %v2234, 96
        %v2283 = vpop.permute.xlu0 %2282
        %2284 = vrot.lane.b32.xlu0 %v2235, 96
        %v2285 = vpop.permute.xlu0 %2284
        %2286 = vrot.lane.b32.xlu0 %v2236, 96
        %v2287 = vpop.permute.xlu0 %2286
        %2288 = vrot.lane.b32.xlu0 %v2237, 96
        %v2289 = vpop.permute.xlu0 %2288
        %2290 = vrot.lane.b32.xlu0 %v2238, 96
        %v2291 = vpop.permute.xlu0 %2290
        %2292 = vrot.lane.b32.xlu0 %v2239, 96
        %v2293 = vpop.permute.xlu0 %2292
        %2294 = vrot.lane.b32.xlu0 %v2240, 96
        %v2295 = vpop.permute.xlu0 %2294
        %2296 = vrot.lane.b32.xlu0 %v2241, 96
        %v2297 = vpop.permute.xlu0 %2296
        %2298 = vrot.lane.b32.xlu0 %v2242, 96
        %v2299 = vpop.permute.xlu0 %2298
        %2300 = vrot.lane.b32.xlu0 %v2243, 96
        %v2301 = vpop.permute.xlu0 %2300
        %2302 = vrot.lane.b32.xlu0 %v2244, 96
        %v2303 = vpop.permute.xlu0 %2302
        %2304 = vrot.lane.b32.xlu0 %v2245, 96
        %v2305 = vpop.permute.xlu0 %2304
        %2306 = vrot.lane.b32.xlu0 %v2246, 96
        %v2307 = vpop.permute.xlu0 %2306
        %2308 = vrot.lane.b32.xlu0 %v2247, 96
        %v2309 = vpop.permute.xlu0 %2308
        %2310 = vrot.lane.b32.xlu0 %v2248, 96
        %v2311 = vpop.permute.xlu0 %2310
        %2312 = vrot.lane.b32.xlu0 %v2249, 96
        %v2313 = vpop.permute.xlu0 %2312
        %s2330 = scalar_lea.vmem [#allocation4], 64
        %2331 = vst.msk [vmem:[%s2330] sm:$0xf] %vm1140, %v2283
        %2332 = vst.msk [vmem:[%s2330 + $0x4] sm:$0xf] %vm1140, %v2285
        %2333 = vst.msk [vmem:[%s2330 + $0x8] sm:$0xf] %vm1140, %v2287
        %2334 = vst.msk [vmem:[%s2330 + $0xc] sm:$0xf] %vm1140, %v2289
        %2335 = vst.msk [vmem:[%s2330 + $0x10] sm:$0xf] %vm1140, %v2291
        %2336 = vst.msk [vmem:[%s2330 + $0x14] sm:$0xf] %vm1140, %v2293
        %2337 = vst.msk [vmem:[%s2330 + $0x18] sm:$0xf] %vm1140, %v2295
        %2338 = vst.msk [vmem:[%s2330 + $0x1c] sm:$0xf] %vm1140, %v2297
        %2339 = vst.msk [vmem:[%s2330 + $0x20] sm:$0xf] %vm1140, %v2299
        %2340 = vst.msk [vmem:[%s2330 + $0x24] sm:$0xf] %vm1140, %v2301
        %2341 = vst.msk [vmem:[%s2330 + $0x28] sm:$0xf] %vm1140, %v2303
        %2342 = vst.msk [vmem:[%s2330 + $0x2c] sm:$0xf] %vm1140, %v2305
        %2343 = vst.msk [vmem:[%s2330 + $0x30] sm:$0xf] %vm1140, %v2307
        %2344 = vst.msk [vmem:[%s2330 + $0x34] sm:$0xf] %vm1140, %v2309
        %2345 = vst.msk [vmem:[%s2330 + $0x38] sm:$0xf] %vm1140, %v2311
        %2346 = vst.msk [vmem:[%s2330 + $0x3c] sm:$0xf] %vm1140, %v2313
        %v2347 = vrot.slane %v426, 4
        %v2348 = vsel %vm448, %v2347, 0
        %v2350 = vsel %vm448, %v2027, 0
        %v2352 = vsel %vm448, %v2032, 0
        %v2354 = vsel %vm448, %v2037, 0
        %v2356 = vsel %vm448, %v2042, 0
        %v2358 = vsel %vm448, %v2047, 0
        %v2360 = vsel %vm448, %v2052, 0
        %v2362 = vsel %vm448, %v2057, 0
        %v2364 = vsel %vm448, %v2062, 0
        %v2366 = vsel %vm448, %v2067, 0
        %v2368 = vsel %vm448, %v2072, 0
        %v2370 = vsel %vm448, %v2077, 0
        %v2372 = vsel %vm448, %v2082, 0
        %v2374 = vsel %vm448, %v2087, 0
        %v2376 = vsel %vm448, %v2092, 0
        %v2378 = vsel %vm448, %v2097, 0
        %v2380 = vsel %vm448, %v2102, 0
        %2382 = vmatprep.subr.mxu0 0.0
        %2383 = vmatpush1.xpose.msra.mxu0 %v2380
        %2384 = vmatprep.subr.mxu0 0.0
        %2385 = vmatpush1.xpose.msra.mxu0 %v2378
        %2386 = vmatprep.subr.mxu0 0.0
        %2387 = vmatpush1.xpose.msra.mxu0 %v2376
        %2388 = vmatprep.subr.mxu0 0.0
        %2389 = vmatpush1.xpose.msra.mxu0 %v2374
        %2390 = vmatprep.subr.mxu0 0.0
        %2391 = vmatpush1.xpose.msra.mxu0 %v2372
        %2392 = vmatprep.subr.mxu0 0.0
        %2393 = vmatpush1.xpose.msra.mxu0 %v2370
        %2394 = vmatprep.subr.mxu0 0.0
        %2395 = vmatpush1.xpose.msra.mxu0 %v2368
        %2396 = vmatprep.subr.mxu0 0.0
        %2397 = vmatpush1.xpose.msra.mxu0 %v2366
        %2398 = vmatprep.subr.mxu0 0.0
        %2399 = vmatpush1.xpose.msra.mxu0 %v2364
        %2400 = vmatprep.subr.mxu0 0.0
        %2401 = vmatpush1.xpose.msra.mxu0 %v2362
        %2402 = vmatprep.subr.mxu0 0.0
        %2403 = vmatpush1.xpose.msra.mxu0 %v2360
        %2404 = vmatprep.subr.mxu0 0.0
        %2405 = vmatpush1.xpose.msra.mxu0 %v2358
        %2406 = vmatprep.subr.mxu0 0.0
        %2407 = vmatpush1.xpose.msra.mxu0 %v2356
        %2408 = vmatprep.subr.mxu0 0.0
        %2409 = vmatpush1.xpose.msra.mxu0 %v2354
        %2410 = vmatprep.subr.mxu0 0.0
        %2411 = vmatpush1.xpose.msra.mxu0 %v2352
        %2412 = vmatprep.subr.mxu0 0.0
        %2413 = vmatpush1.xpose.msra.mxu0 %v2350
        %2414 = vmatprep.subr.mxu0 0.0
        %2415 = vmatpush2.xpose.msra.mxu0 0.0
        %2416 = vmatprep.subr.mxu0 0.0
        %2417 = vmatpush2.xpose.msra.mxu0 0.0
        %2418 = vmatprep.subr.mxu0 0.0
        %2419 = vmatpush2.xpose.msra.mxu0 0.0
        %2420 = vmatprep.subr.mxu0 0.0
        %2421 = vmatpush2.xpose.msra.mxu0 0.0
        %2422 = vmatprep.subr.mxu0 0.0
        %2423 = vmatpush2.xpose.msra.mxu0 0.0
        %2424 = vmatprep.subr.mxu0 0.0
        %2425 = vmatpush2.xpose.msra.mxu0 0.0
        %2426 = vmatprep.subr.mxu0 0.0
        %2427 = vmatpush2.xpose.msra.mxu0 0.0
        %2428 = vmatprep.subr.mxu0 0.0
        %2429 = vmatpush2.xpose.msra.mxu0 0.0
        %2430 = vmatprep.subr.mxu0 0.0
        %2431 = vmatpush2.xpose.msra.mxu0 0.0
        %2432 = vmatprep.subr.mxu0 0.0
        %2433 = vmatpush2.xpose.msra.mxu0 0.0
        %2434 = vmatprep.subr.mxu0 0.0
        %2435 = vmatpush2.xpose.msra.mxu0 0.0
        %2436 = vmatprep.subr.mxu0 0.0
        %2437 = vmatpush2.xpose.msra.mxu0 0.0
        %2438 = vmatprep.subr.mxu0 0.0
        %2439 = vmatpush2.xpose.msra.mxu0 0.0
        %2440 = vmatprep.subr.mxu0 0.0
        %2441 = vmatpush2.xpose.msra.mxu0 0.0
        %2442 = vmatprep.subr.mxu0 0.0
        %2443 = vmatpush2.xpose.msra.mxu0 0.0
        %2444 = vmatprep.subr.mxu0 0.0
        %2445 = vmatpush2.xpose.msra.mxu0 0.0
        %2446 = vmatprep.mubr.f32.mxu0 0.0
        %2447 = vmatmul.mubr.f32.gmra.mxu0 %v2348
        %v2448 = vpop.f32.mrf.mxu0
        %v2449 = vadd.f32 0.0, %v2448
        %v2450 = vpop.f32.mrf.mxu0
        %2451 = vdwg.mxu0
        %v2452 = vrot.slane %v426, 5
        %v2453 = vsel %vm448, %v2452, 0
        %v2455 = vsel %vm448, %v2138, 0
        %v2457 = vsel %vm448, %v2140, 0
        %v2459 = vsel %vm448, %v2142, 0
        %v2461 = vsel %vm448, %v2144, 0
        %v2463 = vsel %vm448, %v2146, 0
        %v2465 = vsel %vm448, %v2148, 0
        %v2467 = vsel %vm448, %v2150, 0
        %v2469 = vsel %vm448, %v2152, 0
        %v2471 = vsel %vm448, %v2154, 0
        %v2473 = vsel %vm448, %v2156, 0
        %v2475 = vsel %vm448, %v2158, 0
        %v2477 = vsel %vm448, %v2160, 0
        %v2479 = vsel %vm448, %v2162, 0
        %v2481 = vsel %vm448, %v2164, 0
        %v2483 = vsel %vm448, %v2166, 0
        %v2485 = vsel %vm448, %v2168, 0
        %2487 = vmatprep.subr.mxu0 0.0
        %2488 = vmatpush1.xpose.msra.mxu0 %v2485
        %2489 = vmatprep.subr.mxu0 0.0
        %2490 = vmatpush1.xpose.msra.mxu0 %v2483
        %2491 = vmatprep.subr.mxu0 0.0
        %2492 = vmatpush1.xpose.msra.mxu0 %v2481
        %2493 = vmatprep.subr.mxu0 0.0
        %2494 = vmatpush1.xpose.msra.mxu0 %v2479
        %2495 = vmatprep.subr.mxu0 0.0
        %2496 = vmatpush1.xpose.msra.mxu0 %v2477
        %2497 = vmatprep.subr.mxu0 0.0
        %2498 = vmatpush1.xpose.msra.mxu0 %v2475
        %2499 = vmatprep.subr.mxu0 0.0
        %2500 = vmatpush1.xpose.msra.mxu0 %v2473
        %2501 = vmatprep.subr.mxu0 0.0
        %2502 = vmatpush1.xpose.msra.mxu0 %v2471
        %2503 = vmatprep.subr.mxu0 0.0
        %2504 = vmatpush1.xpose.msra.mxu0 %v2469
        %2505 = vmatprep.subr.mxu0 0.0
        %2506 = vmatpush1.xpose.msra.mxu0 %v2467
        %2507 = vmatprep.subr.mxu0 0.0
        %2508 = vmatpush1.xpose.msra.mxu0 %v2465
        %2509 = vmatprep.subr.mxu0 0.0
        %2510 = vmatpush1.xpose.msra.mxu0 %v2463
        %2511 = vmatprep.subr.mxu0 0.0
        %2512 = vmatpush1.xpose.msra.mxu0 %v2461
        %2513 = vmatprep.subr.mxu0 0.0
        %2514 = vmatpush1.xpose.msra.mxu0 %v2459
        %2515 = vmatprep.subr.mxu0 0.0
        %2516 = vmatpush1.xpose.msra.mxu0 %v2457
        %2517 = vmatprep.subr.mxu0 0.0
        %2518 = vmatpush1.xpose.msra.mxu0 %v2455
        %2519 = vmatprep.subr.mxu0 0.0
        %2520 = vmatpush2.xpose.msra.mxu0 0.0
        %2521 = vmatprep.subr.mxu0 0.0
        %2522 = vmatpush2.xpose.msra.mxu0 0.0
        %2523 = vmatprep.subr.mxu0 0.0
        %2524 = vmatpush2.xpose.msra.mxu0 0.0
        %2525 = vmatprep.subr.mxu0 0.0
        %2526 = vmatpush2.xpose.msra.mxu0 0.0
        %2527 = vmatprep.subr.mxu0 0.0
        %2528 = vmatpush2.xpose.msra.mxu0 0.0
        %2529 = vmatprep.subr.mxu0 0.0
        %2530 = vmatpush2.xpose.msra.mxu0 0.0
        %2531 = vmatprep.subr.mxu0 0.0
        %2532 = vmatpush2.xpose.msra.mxu0 0.0
        %2533 = vmatprep.subr.mxu0 0.0
        %2534 = vmatpush2.xpose.msra.mxu0 0.0
        %2535 = vmatprep.subr.mxu0 0.0
        %2536 = vmatpush2.xpose.msra.mxu0 0.0
        %2537 = vmatprep.subr.mxu0 0.0
        %2538 = vmatpush2.xpose.msra.mxu0 0.0
        %2539 = vmatprep.subr.mxu0 0.0
        %2540 = vmatpush2.xpose.msra.mxu0 0.0
        %2541 = vmatprep.subr.mxu0 0.0
        %2542 = vmatpush2.xpose.msra.mxu0 0.0
        %2543 = vmatprep.subr.mxu0 0.0
        %2544 = vmatpush2.xpose.msra.mxu0 0.0
        %2545 = vmatprep.subr.mxu0 0.0
        %2546 = vmatpush2.xpose.msra.mxu0 0.0
        %2547 = vmatprep.subr.mxu0 0.0
        %2548 = vmatpush2.xpose.msra.mxu0 0.0
        %2549 = vmatprep.subr.mxu0 0.0
        %2550 = vmatpush2.xpose.msra.mxu0 0.0
        %2551 = vmatprep.mubr.f32.mxu0 0.0
        %2552 = vmatmul.mubr.f32.gmra.mxu0 %v2453
        %v2553 = vpop.f32.mrf.mxu0
        %v2554 = vadd.f32 0.0, %v2553
        %v2555 = vpop.f32.mrf.mxu0
        %2556 = vdwg.mxu0
        %v2557 = vld [vmem:[%s414] sm:$0xf]
        %v2558 = vld [vmem:[%s414 + $0x4] sm:$0xf]
        %v2559 = vld [vmem:[%s414 + $0x8] sm:$0xf]
        %v2560 = vld [vmem:[%s414 + $0xc] sm:$0xf]
        %v2561 = vld [vmem:[%s414 + $0x10] sm:$0xf]
        %v2562 = vld [vmem:[%s414 + $0x14] sm:$0xf]
        %v2563 = vld [vmem:[%s414 + $0x18] sm:$0xf]
        %v2564 = vld [vmem:[%s414 + $0x1c] sm:$0xf]
        %v2565 = vld [vmem:[%s414 + $0x20] sm:$0xf]
        %v2566 = vld [vmem:[%s414 + $0x24] sm:$0xf]
        %v2567 = vld [vmem:[%s414 + $0x28] sm:$0xf]
        %v2568 = vld [vmem:[%s414 + $0x2c] sm:$0xf]
        %v2569 = vld [vmem:[%s414 + $0x30] sm:$0xf]
        %v2570 = vld [vmem:[%s414 + $0x34] sm:$0xf]
        %v2571 = vld [vmem:[%s414 + $0x38] sm:$0xf]
        %v2572 = vld [vmem:[%s414 + $0x3c] sm:$0xf]
        %vm2573 = vcmp.gt.bf16.partialorder %v2557, 0
        %vm2574 = vcmp.gt.bf16.partialorder %v2558, 0
        %vm2575 = vcmp.gt.bf16.partialorder %v2559, 0
        %vm2576 = vcmp.gt.bf16.partialorder %v2560, 0
        %vm2577 = vcmp.gt.bf16.partialorder %v2561, 0
        %vm2578 = vcmp.gt.bf16.partialorder %v2562, 0
        %vm2579 = vcmp.gt.bf16.partialorder %v2563, 0
        %vm2580 = vcmp.gt.bf16.partialorder %v2564, 0
        %vm2581 = vcmp.gt.bf16.partialorder %v2565, 0
        %vm2582 = vcmp.gt.bf16.partialorder %v2566, 0
        %vm2583 = vcmp.gt.bf16.partialorder %v2567, 0
        %vm2584 = vcmp.gt.bf16.partialorder %v2568, 0
        %vm2585 = vcmp.gt.bf16.partialorder %v2569, 0
        %vm2586 = vcmp.gt.bf16.partialorder %v2570, 0
        %vm2587 = vcmp.gt.bf16.partialorder %v2571, 0
        %vm2588 = vcmp.gt.bf16.partialorder %v2572, 0
        %v2589 = vld [vmem:[#allocation3] sm:$0xff]
        %v2590 = vld [vmem:[#allocation3 + $0x8] sm:$0xff]
        %v2591 = vld [vmem:[#allocation3 + $0x10] sm:$0xff]
        %v2592 = vld [vmem:[#allocation3 + $0x18] sm:$0xff]
        %v2593 = vld [vmem:[#allocation3 + $0x20] sm:$0xff]
        %v2594 = vld [vmem:[#allocation3 + $0x28] sm:$0xff]
        %v2595 = vld [vmem:[#allocation3 + $0x30] sm:$0xff]
        %v2596 = vld [vmem:[#allocation3 + $0x38] sm:$0xff]
        %v2597 = vld [vmem:[#allocation3 + $0x40] sm:$0xff]
        %v2598 = vld [vmem:[#allocation3 + $0x48] sm:$0xff]
        %v2599 = vld [vmem:[#allocation3 + $0x50] sm:$0xff]
        %v2600 = vld [vmem:[#allocation3 + $0x58] sm:$0xff]
        %v2601 = vld [vmem:[#allocation3 + $0x60] sm:$0xff]
        %v2602 = vld [vmem:[#allocation3 + $0x68] sm:$0xff]
        %v2603 = vld [vmem:[#allocation3 + $0x70] sm:$0xff]
        %v2604 = vld [vmem:[#allocation3 + $0x78] sm:$0xff]
        %v2605 = vlaneseq
        %v2606 = vshrl.u32 %v2605, 7
        %v2607 = vsub.s32 6, %v2606
        %v2608 = vrot.slane %v426, %v2607
        %v2609 = vmul.f32 %v2589, %v2608
        %v2610 = vmul.f32 %v2590, %v2608
        %v2611 = vmul.f32 %v2591, %v2608
        %v2612 = vmul.f32 %v2592, %v2608
        %v2613 = vmul.f32 %v2593, %v2608
        %v2614 = vmul.f32 %v2594, %v2608
        %v2615 = vmul.f32 %v2595, %v2608
        %v2616 = vmul.f32 %v2596, %v2608
        %v2617 = vmul.f32 %v2597, %v2608
        %v2618 = vmul.f32 %v2598, %v2608
        %v2619 = vmul.f32 %v2599, %v2608
        %v2620 = vmul.f32 %v2600, %v2608
        %v2621 = vmul.f32 %v2601, %v2608
        %v2622 = vmul.f32 %v2602, %v2608
        %v2623 = vmul.f32 %v2603, %v2608
        %v2624 = vmul.f32 %v2604, %v2608
        %v2625 = vsel %vm448, %v2609, 0.0
        %2626 = vadd.xlane.f32.xlu0 %v2625
        %v2627 = vpop.xlane.xlu0 %2626
        %v2628 = vsel %vm448, %v2610, 0.0
        %2629 = vadd.xlane.f32.xlu0 %v2628
        %v2630 = vpop.xlane.xlu0 %2629
        %v2631 = vsel %vm448, %v2611, 0.0
        %2632 = vadd.xlane.f32.xlu0 %v2631
        %v2633 = vpop.xlane.xlu0 %2632
        %v2634 = vsel %vm448, %v2612, 0.0
        %2635 = vadd.xlane.f32.xlu0 %v2634
        %v2636 = vpop.xlane.xlu0 %2635
        %v2637 = vsel %vm448, %v2613, 0.0
        %2638 = vadd.xlane.f32.xlu0 %v2637
        %v2639 = vpop.xlane.xlu0 %2638
        %v2640 = vsel %vm448, %v2614, 0.0
        %2641 = vadd.xlane.f32.xlu0 %v2640
        %v2642 = vpop.xlane.xlu0 %2641
        %v2643 = vsel %vm448, %v2615, 0.0
        %2644 = vadd.xlane.f32.xlu0 %v2643
        %v2645 = vpop.xlane.xlu0 %2644
        %v2646 = vsel %vm448, %v2616, 0.0
        %2647 = vadd.xlane.f32.xlu0 %v2646
        %v2648 = vpop.xlane.xlu0 %2647
        %v2649 = vsel %vm448, %v2617, 0.0
        %2650 = vadd.xlane.f32.xlu0 %v2649
        %v2651 = vpop.xlane.xlu0 %2650
        %v2652 = vsel %vm448, %v2618, 0.0
        %2653 = vadd.xlane.f32.xlu0 %v2652
        %v2654 = vpop.xlane.xlu0 %2653
        %v2655 = vsel %vm448, %v2619, 0.0
        %2656 = vadd.xlane.f32.xlu0 %v2655
        %v2657 = vpop.xlane.xlu0 %2656
        %v2658 = vsel %vm448, %v2620, 0.0
        %2659 = vadd.xlane.f32.xlu0 %v2658
        %v2660 = vpop.xlane.xlu0 %2659
        %v2661 = vsel %vm448, %v2621, 0.0
        %2662 = vadd.xlane.f32.xlu0 %v2661
        %v2663 = vpop.xlane.xlu0 %2662
        %v2664 = vsel %vm448, %v2622, 0.0
        %2665 = vadd.xlane.f32.xlu0 %v2664
        %v2666 = vpop.xlane.xlu0 %2665
        %v2667 = vsel %vm448, %v2623, 0.0
        %2668 = vadd.xlane.f32.xlu0 %v2667
        %v2669 = vpop.xlane.xlu0 %2668
        %v2670 = vsel %vm448, %v2624, 0.0
        %2671 = vadd.xlane.f32.xlu0 %v2670
        %v2672 = vpop.xlane.xlu0 %2671
        %v2673 = vlaneseq
        %v2674 = vshrl.u32 %v2673, 7
        %v2675 = vsub.s32 0, %v2674
        %v2676 = vrot.slane %v2449, %v2675
        %v2677 = vadd.f32 %v2627, %v2676
        %v2678 = vadd.f32 %v2630, %v2676
        %v2679 = vadd.f32 %v2633, %v2676
        %v2680 = vadd.f32 %v2636, %v2676
        %v2681 = vadd.f32 %v2639, %v2676
        %v2682 = vadd.f32 %v2642, %v2676
        %v2683 = vadd.f32 %v2645, %v2676
        %v2684 = vadd.f32 %v2648, %v2676
        %v2685 = vadd.f32 %v2651, %v2676
        %v2686 = vadd.f32 %v2654, %v2676
        %v2687 = vadd.f32 %v2657, %v2676
        %v2688 = vadd.f32 %v2660, %v2676
        %v2689 = vadd.f32 %v2663, %v2676
        %v2690 = vadd.f32 %v2666, %v2676
        %v2691 = vadd.f32 %v2669, %v2676
        %v2692 = vadd.f32 %v2672, %v2676
        %vm2693 = vcmp.gt.f32.partialorder %v2677, 0.0
        %vm2694 = vcmp.gt.f32.partialorder %v2678, 0.0
        %vm2695 = vcmp.gt.f32.partialorder %v2679, 0.0
        %vm2696 = vcmp.gt.f32.partialorder %v2680, 0.0
        %vm2697 = vcmp.gt.f32.partialorder %v2681, 0.0
        %vm2698 = vcmp.gt.f32.partialorder %v2682, 0.0
        %vm2699 = vcmp.gt.f32.partialorder %v2683, 0.0
        %vm2700 = vcmp.gt.f32.partialorder %v2684, 0.0
        %vm2701 = vcmp.gt.f32.partialorder %v2685, 0.0
        %vm2702 = vcmp.gt.f32.partialorder %v2686, 0.0
        %vm2703 = vcmp.gt.f32.partialorder %v2687, 0.0
        %vm2704 = vcmp.gt.f32.partialorder %v2688, 0.0
        %vm2705 = vcmp.gt.f32.partialorder %v2689, 0.0
        %vm2706 = vcmp.gt.f32.partialorder %v2690, 0.0
        %vm2707 = vcmp.gt.f32.partialorder %v2691, 0.0
        %vm2708 = vcmp.gt.f32.partialorder %v2692, 0.0
        %v2709 = vmul.f32 %v2677, 0.2
        %v2710 = vmul.f32 %v2678, 0.2
        %v2711 = vmul.f32 %v2679, 0.2
        %v2712 = vmul.f32 %v2680, 0.2
        %v2713 = vmul.f32 %v2681, 0.2
        %v2714 = vmul.f32 %v2682, 0.2
        %v2715 = vmul.f32 %v2683, 0.2
        %v2716 = vmul.f32 %v2684, 0.2
        %v2717 = vmul.f32 %v2685, 0.2
        %v2718 = vmul.f32 %v2686, 0.2
        %v2719 = vmul.f32 %v2687, 0.2
        %v2720 = vmul.f32 %v2688, 0.2
        %v2721 = vmul.f32 %v2689, 0.2
        %v2722 = vmul.f32 %v2690, 0.2
        %v2723 = vmul.f32 %v2691, 0.2
        %v2724 = vmul.f32 %v2692, 0.2
        %v2725 = vsel %vm2693, %v2677, %v2709
        %v2726 = vsel %vm2694, %v2678, %v2710
        %v2727 = vsel %vm2695, %v2679, %v2711
        %v2728 = vsel %vm2696, %v2680, %v2712
        %v2729 = vsel %vm2697, %v2681, %v2713
        %v2730 = vsel %vm2698, %v2682, %v2714
        %v2731 = vsel %vm2699, %v2683, %v2715
        %v2732 = vsel %vm2700, %v2684, %v2716
        %v2733 = vsel %vm2701, %v2685, %v2717
        %v2734 = vsel %vm2702, %v2686, %v2718
        %v2735 = vsel %vm2703, %v2687, %v2719
        %v2736 = vsel %vm2704, %v2688, %v2720
        %v2737 = vsel %vm2705, %v2689, %v2721
        %v2738 = vsel %vm2706, %v2690, %v2722
        %v2739 = vsel %vm2707, %v2691, %v2723
        %v2740 = vsel %vm2708, %v2692, %v2724
        %v2741 = vsel %vm2573, 65537, 0
        %v2742 = vsel %vm2574, 65537, 0
        %v2743 = vsel %vm2575, 65537, 0
        %v2744 = vsel %vm2576, 65537, 0
        %v2745 = vsel %vm2577, 65537, 0
        %v2746 = vsel %vm2578, 65537, 0
        %v2747 = vsel %vm2579, 65537, 0
        %v2748 = vsel %vm2580, 65537, 0
        %v2749 = vsel %vm2581, 65537, 0
        %v2750 = vsel %vm2582, 65537, 0
        %v2751 = vsel %vm2583, 65537, 0
        %v2752 = vsel %vm2584, 65537, 0
        %v2753 = vsel %vm2585, 65537, 0
        %v2754 = vsel %vm2586, 65537, 0
        %v2755 = vsel %vm2587, 65537, 0
        %v2756 = vsel %vm2588, 65537, 0
        %v2757 = vunpack.c.l.b16 %v2741
        %v2758 = vunpack.c.l.b16 %v2742
        %v2759 = vunpack.c.l.b16 %v2743
        %v2760 = vunpack.c.l.b16 %v2744
        %v2761 = vunpack.c.l.b16 %v2745
        %v2762 = vunpack.c.l.b16 %v2746
        %v2763 = vunpack.c.l.b16 %v2747
        %v2764 = vunpack.c.l.b16 %v2748
        %v2765 = vunpack.c.l.b16 %v2749
        %v2766 = vunpack.c.l.b16 %v2750
        %v2767 = vunpack.c.l.b16 %v2751
        %v2768 = vunpack.c.l.b16 %v2752
        %v2769 = vunpack.c.l.b16 %v2753
        %v2770 = vunpack.c.l.b16 %v2754
        %v2771 = vunpack.c.l.b16 %v2755
        %v2772 = vunpack.c.l.b16 %v2756
        %vm2773 = vcmp.ne.s32.totalorder %v2757, 0
        %vm2774 = vcmp.ne.s32.totalorder %v2758, 0
        %vm2775 = vcmp.ne.s32.totalorder %v2759, 0
        %vm2776 = vcmp.ne.s32.totalorder %v2760, 0
        %vm2777 = vcmp.ne.s32.totalorder %v2761, 0
        %vm2778 = vcmp.ne.s32.totalorder %v2762, 0
        %vm2779 = vcmp.ne.s32.totalorder %v2763, 0
        %vm2780 = vcmp.ne.s32.totalorder %v2764, 0
        %vm2781 = vcmp.ne.s32.totalorder %v2765, 0
        %vm2782 = vcmp.ne.s32.totalorder %v2766, 0
        %vm2783 = vcmp.ne.s32.totalorder %v2767, 0
        %vm2784 = vcmp.ne.s32.totalorder %v2768, 0
        %vm2785 = vcmp.ne.s32.totalorder %v2769, 0
        %vm2786 = vcmp.ne.s32.totalorder %v2770, 0
        %vm2787 = vcmp.ne.s32.totalorder %v2771, 0
        %vm2788 = vcmp.ne.s32.totalorder %v2772, 0
        %v2789 = vsel %vm2773, %v2725, -1e+30
        %v2790 = vsel %vm2774, %v2726, -1e+30
        %v2791 = vsel %vm2775, %v2727, -1e+30
        %v2792 = vsel %vm2776, %v2728, -1e+30
        %v2793 = vsel %vm2777, %v2729, -1e+30
        %v2794 = vsel %vm2778, %v2730, -1e+30
        %v2795 = vsel %vm2779, %v2731, -1e+30
        %v2796 = vsel %vm2780, %v2732, -1e+30
        %v2797 = vsel %vm2781, %v2733, -1e+30
        %v2798 = vsel %vm2782, %v2734, -1e+30
        %v2799 = vsel %vm2783, %v2735, -1e+30
        %v2800 = vsel %vm2784, %v2736, -1e+30
        %v2801 = vsel %vm2785, %v2737, -1e+30
        %v2802 = vsel %vm2786, %v2738, -1e+30
        %v2803 = vsel %vm2787, %v2739, -1e+30
        %v2804 = vsel %vm2788, %v2740, -1e+30
        %2805 = vmax.xlane.f32.xlu0 %v2789
        %v2806 = vpop.xlane.xlu0 %2805
        %2807 = vmax.xlane.f32.xlu0 %v2790
        %v2808 = vpop.xlane.xlu0 %2807
        %2809 = vmax.xlane.f32.xlu0 %v2791
        %v2810 = vpop.xlane.xlu0 %2809
        %2811 = vmax.xlane.f32.xlu0 %v2792
        %v2812 = vpop.xlane.xlu0 %2811
        %2813 = vmax.xlane.f32.xlu0 %v2793
        %v2814 = vpop.xlane.xlu0 %2813
        %2815 = vmax.xlane.f32.xlu0 %v2794
        %v2816 = vpop.xlane.xlu0 %2815
        %2817 = vmax.xlane.f32.xlu0 %v2795
        %v2818 = vpop.xlane.xlu0 %2817
        %2819 = vmax.xlane.f32.xlu0 %v2796
        %v2820 = vpop.xlane.xlu0 %2819
        %2821 = vmax.xlane.f32.xlu0 %v2797
        %v2822 = vpop.xlane.xlu0 %2821
        %2823 = vmax.xlane.f32.xlu0 %v2798
        %v2824 = vpop.xlane.xlu0 %2823
        %2825 = vmax.xlane.f32.xlu0 %v2799
        %v2826 = vpop.xlane.xlu0 %2825
        %2827 = vmax.xlane.f32.xlu0 %v2800
        %v2828 = vpop.xlane.xlu0 %2827
        %2829 = vmax.xlane.f32.xlu0 %v2801
        %v2830 = vpop.xlane.xlu0 %2829
        %2831 = vmax.xlane.f32.xlu0 %v2802
        %v2832 = vpop.xlane.xlu0 %2831
        %2833 = vmax.xlane.f32.xlu0 %v2803
        %v2834 = vpop.xlane.xlu0 %2833
        %2835 = vmax.xlane.f32.xlu0 %v2804
        %v2836 = vpop.xlane.xlu0 %2835
        %v2837 = vsub.f32 %v2789, %v2806
        %v2838 = vsub.f32 %v2790, %v2808
        %v2839 = vsub.f32 %v2791, %v2810
        %v2840 = vsub.f32 %v2792, %v2812
        %v2841 = vsub.f32 %v2793, %v2814
        %v2842 = vsub.f32 %v2794, %v2816
        %v2843 = vsub.f32 %v2795, %v2818
        %v2844 = vsub.f32 %v2796, %v2820
        %v2845 = vsub.f32 %v2797, %v2822
        %v2846 = vsub.f32 %v2798, %v2824
        %v2847 = vsub.f32 %v2799, %v2826
        %v2848 = vsub.f32 %v2800, %v2828
        %v2849 = vsub.f32 %v2801, %v2830
        %v2850 = vsub.f32 %v2802, %v2832
        %v2851 = vsub.f32 %v2803, %v2834
        %v2852 = vsub.f32 %v2804, %v2836
        %v2853 = vmul.f32 %v2837, 1.442695
        %v2854 = vpow.pop %v2853
        %v2855 = vmul.f32 %v2838, 1.442695
        %v2856 = vpow.pop %v2855
        %v2857 = vmul.f32 %v2839, 1.442695
        %v2858 = vpow.pop %v2857
        %v2859 = vmul.f32 %v2840, 1.442695
        %v2860 = vpow.pop %v2859
        %v2861 = vmul.f32 %v2841, 1.442695
        %v2862 = vpow.pop %v2861
        %v2863 = vmul.f32 %v2842, 1.442695
        %v2864 = vpow.pop %v2863
        %v2865 = vmul.f32 %v2843, 1.442695
        %v2866 = vpow.pop %v2865
        %v2867 = vmul.f32 %v2844, 1.442695
        %v2868 = vpow.pop %v2867
        %v2869 = vmul.f32 %v2845, 1.442695
        %v2870 = vpow.pop %v2869
        %v2871 = vmul.f32 %v2846, 1.442695
        %v2872 = vpow.pop %v2871
        %v2873 = vmul.f32 %v2847, 1.442695
        %v2874 = vpow.pop %v2873
        %v2875 = vmul.f32 %v2848, 1.442695
        %v2876 = vpow.pop %v2875
        %v2877 = vmul.f32 %v2849, 1.442695
        %v2878 = vpow.pop %v2877
        %v2879 = vmul.f32 %v2850, 1.442695
        %v2880 = vpow.pop %v2879
        %v2881 = vmul.f32 %v2851, 1.442695
        %v2882 = vpow.pop %v2881
        %v2883 = vmul.f32 %v2852, 1.442695
        %v2884 = vpow.pop %v2883
        %2885 = vadd.xlane.f32.xlu0 %v2854
        %v2886 = vpop.xlane.xlu0 %2885
        %2887 = vadd.xlane.f32.xlu0 %v2856
        %v2888 = vpop.xlane.xlu0 %2887
        %2889 = vadd.xlane.f32.xlu0 %v2858
        %v2890 = vpop.xlane.xlu0 %2889
        %2891 = vadd.xlane.f32.xlu0 %v2860
        %v2892 = vpop.xlane.xlu0 %2891
        %2893 = vadd.xlane.f32.xlu0 %v2862
        %v2894 = vpop.xlane.xlu0 %2893
        %2895 = vadd.xlane.f32.xlu0 %v2864
        %v2896 = vpop.xlane.xlu0 %2895
        %2897 = vadd.xlane.f32.xlu0 %v2866
        %v2898 = vpop.xlane.xlu0 %2897
        %2899 = vadd.xlane.f32.xlu0 %v2868
        %v2900 = vpop.xlane.xlu0 %2899
        %2901 = vadd.xlane.f32.xlu0 %v2870
        %v2902 = vpop.xlane.xlu0 %2901
        %2903 = vadd.xlane.f32.xlu0 %v2872
        %v2904 = vpop.xlane.xlu0 %2903
        %2905 = vadd.xlane.f32.xlu0 %v2874
        %v2906 = vpop.xlane.xlu0 %2905
        %2907 = vadd.xlane.f32.xlu0 %v2876
        %v2908 = vpop.xlane.xlu0 %2907
        %2909 = vadd.xlane.f32.xlu0 %v2878
        %v2910 = vpop.xlane.xlu0 %2909
        %2911 = vadd.xlane.f32.xlu0 %v2880
        %v2912 = vpop.xlane.xlu0 %2911
        %2913 = vadd.xlane.f32.xlu0 %v2882
        %v2914 = vpop.xlane.xlu0 %2913
        %2915 = vadd.xlane.f32.xlu0 %v2884
        %v2916 = vpop.xlane.xlu0 %2915
        %v2917 = vrcp.pop %v2886
        %v2918 = vrcp.pop %v2888
        %v2919 = vrcp.pop %v2890
        %v2920 = vrcp.pop %v2892
        %v2921 = vrcp.pop %v2894
        %v2922 = vrcp.pop %v2896
        %v2923 = vrcp.pop %v2898
        %v2924 = vrcp.pop %v2900
        %v2925 = vrcp.pop %v2902
        %v2926 = vrcp.pop %v2904
        %v2927 = vrcp.pop %v2906
        %v2928 = vrcp.pop %v2908
        %v2929 = vrcp.pop %v2910
        %v2930 = vrcp.pop %v2912
        %v2931 = vrcp.pop %v2914
        %v2932 = vrcp.pop %v2916
        %v2933 = vpack.c.bf16 %v2856, %v2854
        %v2934 = vpack.c.bf16 %v2860, %v2858
        %v2935 = vpack.c.bf16 %v2864, %v2862
        %v2936 = vpack.c.bf16 %v2868, %v2866
        %v2937 = vpack.c.bf16 %v2872, %v2870
        %v2938 = vpack.c.bf16 %v2876, %v2874
        %v2939 = vpack.c.bf16 %v2880, %v2878
        %v2940 = vpack.c.bf16 %v2884, %v2882
        %v2941 = vld [vmem:[#allocation4] sm:$0xf]
        %v2942 = vld [vmem:[#allocation4 + $0x4] sm:$0xf]
        %v2943 = vld [vmem:[#allocation4 + $0x8] sm:$0xf]
        %v2944 = vld [vmem:[#allocation4 + $0xc] sm:$0xf]
        %v2945 = vld [vmem:[#allocation4 + $0x10] sm:$0xf]
        %v2946 = vld [vmem:[#allocation4 + $0x14] sm:$0xf]
        %v2947 = vld [vmem:[#allocation4 + $0x18] sm:$0xf]
        %v2948 = vld [vmem:[#allocation4 + $0x1c] sm:$0xf]
        %v2949 = vld [vmem:[#allocation4 + $0x20] sm:$0xf]
        %v2950 = vld [vmem:[#allocation4 + $0x24] sm:$0xf]
        %v2951 = vld [vmem:[#allocation4 + $0x28] sm:$0xf]
        %v2952 = vld [vmem:[#allocation4 + $0x2c] sm:$0xf]
        %v2953 = vld [vmem:[#allocation4 + $0x30] sm:$0xf]
        %v2954 = vld [vmem:[#allocation4 + $0x34] sm:$0xf]
        %v2955 = vld [vmem:[#allocation4 + $0x38] sm:$0xf]
        %v2956 = vld [vmem:[#allocation4 + $0x3c] sm:$0xf]
        %v2973 = vunpack.c.l.b16 %v2941
        %v2974 = vunpack.c.l.b16 %v2942
        %v2975 = vunpack.c.l.b16 %v2943
        %v2976 = vunpack.c.l.b16 %v2944
        %v2977 = vunpack.c.l.b16 %v2945
        %v2978 = vunpack.c.l.b16 %v2946
        %v2979 = vunpack.c.l.b16 %v2947
        %v2980 = vunpack.c.l.b16 %v2948
        %v2981 = vunpack.c.l.b16 %v2949
        %v2982 = vunpack.c.l.b16 %v2950
        %v2983 = vunpack.c.l.b16 %v2951
        %v2984 = vunpack.c.l.b16 %v2952
        %v2985 = vunpack.c.l.b16 %v2953
        %v2986 = vunpack.c.l.b16 %v2954
        %v2987 = vunpack.c.l.b16 %v2955
        %v2988 = vunpack.c.l.b16 %v2956
        %v2989 = vpack.c.b16 %v2974, %v2973
        %v2990 = vpack.c.b16 %v2976, %v2975
        %v2991 = vpack.c.b16 %v2978, %v2977
        %v2992 = vpack.c.b16 %v2980, %v2979
        %v2993 = vpack.c.b16 %v2982, %v2981
        %v2994 = vpack.c.b16 %v2984, %v2983
        %v2995 = vpack.c.b16 %v2986, %v2985
        %v2996 = vpack.c.b16 %v2988, %v2987
        %3005 = vmatprep.subr.bf16.mxu0 0
        %3006 = vmatpush1.bf16.msra.mxu0 %v2996
        %3007 = vmatprep.subr.bf16.mxu0 0
        %3008 = vmatpush1.bf16.msra.mxu0 %v2995
        %3009 = vmatprep.subr.bf16.mxu0 0
        %3010 = vmatpush1.bf16.msra.mxu0 %v2994
        %3011 = vmatprep.subr.bf16.mxu0 0
        %3012 = vmatpush1.bf16.msra.mxu0 %v2993
        %3013 = vmatprep.subr.bf16.mxu0 0
        %3014 = vmatpush1.bf16.msra.mxu0 %v2992
        %3015 = vmatprep.subr.bf16.mxu0 0
        %3016 = vmatpush1.bf16.msra.mxu0 %v2991
        %3017 = vmatprep.subr.bf16.mxu0 0
        %3018 = vmatpush1.bf16.msra.mxu0 %v2990
        %3019 = vmatprep.subr.bf16.mxu0 0
        %3020 = vmatpush1.bf16.msra.mxu0 %v2989
        %3021 = vmatprep.subr.bf16.mxu0 0
        %3022 = vmatpush2.bf16.msra.mxu0 0
        %3023 = vmatprep.subr.bf16.mxu0 0
        %3024 = vmatpush2.bf16.msra.mxu0 0
        %3025 = vmatprep.subr.bf16.mxu0 0
        %3026 = vmatpush2.bf16.msra.mxu0 0
        %3027 = vmatprep.subr.bf16.mxu0 0
        %3028 = vmatpush2.bf16.msra.mxu0 0
        %3029 = vmatprep.subr.bf16.mxu0 0
        %3030 = vmatpush2.bf16.msra.mxu0 0
        %3031 = vmatprep.subr.bf16.mxu0 0
        %3032 = vmatpush2.bf16.msra.mxu0 0
        %3033 = vmatprep.subr.bf16.mxu0 0
        %3034 = vmatpush2.bf16.msra.mxu0 0
        %3035 = vmatprep.subr.bf16.mxu0 0
        %3036 = vmatpush2.bf16.msra.mxu0 0
        %3037 = vmatprep.mubr.bf16.mxu0 0
        %3038 = vmatmul.mubr.bf16.gmra.mxu0 %v2933
        %v3039 = vpop.f32.mrf.mxu0
        %v3040 = vadd.f32 0.0, %v3039
        %v3041 = vpop.f32.mrf.mxu0
        %v3042 = vpop.f32.mrf.mxu0
        %v3043 = vadd.f32 0.0, %v3042
        %v3044 = vpop.f32.mrf.mxu0
        %3045 = vmatprep.mubr.bf16.mxu0 0
        %3046 = vmatmul.mubr.bf16.gmra.mxu0 %v2934
        %v3047 = vpop.f32.mrf.mxu0
        %v3048 = vadd.f32 0.0, %v3047
        %v3049 = vpop.f32.mrf.mxu0
        %v3050 = vpop.f32.mrf.mxu0
        %v3051 = vadd.f32 0.0, %v3050
        %v3052 = vpop.f32.mrf.mxu0
        %3053 = vmatprep.mubr.bf16.mxu0 0
        %3054 = vmatmul.mubr.bf16.gmra.mxu0 %v2935
        %v3055 = vpop.f32.mrf.mxu0
        %v3056 = vadd.f32 0.0, %v3055
        %v3057 = vpop.f32.mrf.mxu0
        %v3058 = vpop.f32.mrf.mxu0
        %v3059 = vadd.f32 0.0, %v3058
        %v3060 = vpop.f32.mrf.mxu0
        %3061 = vmatprep.mubr.bf16.mxu0 0
        %3062 = vmatmul.mubr.bf16.gmra.mxu0 %v2936
        %v3063 = vpop.f32.mrf.mxu0
        %v3064 = vadd.f32 0.0, %v3063
        %v3065 = vpop.f32.mrf.mxu0
        %v3066 = vpop.f32.mrf.mxu0
        %v3067 = vadd.f32 0.0, %v3066
        %v3068 = vpop.f32.mrf.mxu0
        %3069 = vmatprep.mubr.bf16.mxu0 0
        %3070 = vmatmul.mubr.bf16.gmra.mxu0 %v2937
        %v3071 = vpop.f32.mrf.mxu0
        %v3072 = vadd.f32 0.0, %v3071
        %v3073 = vpop.f32.mrf.mxu0
        %v3074 = vpop.f32.mrf.mxu0
        %v3075 = vadd.f32 0.0, %v3074
        %v3076 = vpop.f32.mrf.mxu0
        %3077 = vmatprep.mubr.bf16.mxu0 0
        %3078 = vmatmul.mubr.bf16.gmra.mxu0 %v2938
        %v3079 = vpop.f32.mrf.mxu0
        %v3080 = vadd.f32 0.0, %v3079
        %v3081 = vpop.f32.mrf.mxu0
        %v3082 = vpop.f32.mrf.mxu0
        %v3083 = vadd.f32 0.0, %v3082
        %v3084 = vpop.f32.mrf.mxu0
        %3085 = vmatprep.mubr.bf16.mxu0 0
        %3086 = vmatmul.mubr.bf16.gmra.mxu0 %v2939
        %v3087 = vpop.f32.mrf.mxu0
        %v3088 = vadd.f32 0.0, %v3087
        %v3089 = vpop.f32.mrf.mxu0
        %v3090 = vpop.f32.mrf.mxu0
        %v3091 = vadd.f32 0.0, %v3090
        %v3092 = vpop.f32.mrf.mxu0
        %3093 = vmatprep.mubr.bf16.mxu0 0
        %3094 = vmatmul.mubr.bf16.gmra.mxu0 %v2940
        %v3095 = vpop.f32.mrf.mxu0
        %v3096 = vadd.f32 0.0, %v3095
        %v3097 = vpop.f32.mrf.mxu0
        %v3098 = vpop.f32.mrf.mxu0
        %v3099 = vadd.f32 0.0, %v3098
        %v3100 = vpop.f32.mrf.mxu0
        %3101 = vdwg.mxu0
        %v3102 = vmul.f32 %v3040, %v2917
        %v3103 = vmul.f32 %v3043, %v2918
        %v3104 = vmul.f32 %v3048, %v2919
        %v3105 = vmul.f32 %v3051, %v2920
        %v3106 = vmul.f32 %v3056, %v2921
        %v3107 = vmul.f32 %v3059, %v2922
        %v3108 = vmul.f32 %v3064, %v2923
        %v3109 = vmul.f32 %v3067, %v2924
        %v3110 = vmul.f32 %v3072, %v2925
        %v3111 = vmul.f32 %v3075, %v2926
        %v3112 = vmul.f32 %v3080, %v2927
        %v3113 = vmul.f32 %v3083, %v2928
        %v3114 = vmul.f32 %v3088, %v2929
        %v3115 = vmul.f32 %v3091, %v2930
        %v3116 = vmul.f32 %v3096, %v2931
        %v3117 = vmul.f32 %v3099, %v2932
        %s3118 = sadd.s32 0, 128
        %s3119 = scalar_lea.vmem [#allocation3], %s3118
        %v3120 = vld [vmem:[%s3119] sm:$0xff]
        %v3121 = vld [vmem:[%s3119 + $0x8] sm:$0xff]
        %v3122 = vld [vmem:[%s3119 + $0x10] sm:$0xff]
        %v3123 = vld [vmem:[%s3119 + $0x18] sm:$0xff]
        %v3124 = vld [vmem:[%s3119 + $0x20] sm:$0xff]
        %v3125 = vld [vmem:[%s3119 + $0x28] sm:$0xff]
        %v3126 = vld [vmem:[%s3119 + $0x30] sm:$0xff]
        %v3127 = vld [vmem:[%s3119 + $0x38] sm:$0xff]
        %v3128 = vld [vmem:[%s3119 + $0x40] sm:$0xff]
        %v3129 = vld [vmem:[%s3119 + $0x48] sm:$0xff]
        %v3130 = vld [vmem:[%s3119 + $0x50] sm:$0xff]
        %v3131 = vld [vmem:[%s3119 + $0x58] sm:$0xff]
        %v3132 = vld [vmem:[%s3119 + $0x60] sm:$0xff]
        %v3133 = vld [vmem:[%s3119 + $0x68] sm:$0xff]
        %v3134 = vld [vmem:[%s3119 + $0x70] sm:$0xff]
        %v3135 = vld [vmem:[%s3119 + $0x78] sm:$0xff]
        %v3136 = vlaneseq
        %v3137 = vshrl.u32 %v3136, 7
        %v3138 = vsub.s32 7, %v3137
        %v3139 = vrot.slane %v426, %v3138
        %v3140 = vmul.f32 %v3120, %v3139
        %v3141 = vmul.f32 %v3121, %v3139
        %v3142 = vmul.f32 %v3122, %v3139
        %v3143 = vmul.f32 %v3123, %v3139
        %v3144 = vmul.f32 %v3124, %v3139
        %v3145 = vmul.f32 %v3125, %v3139
        %v3146 = vmul.f32 %v3126, %v3139
        %v3147 = vmul.f32 %v3127, %v3139
        %v3148 = vmul.f32 %v3128, %v3139
        %v3149 = vmul.f32 %v3129, %v3139
        %v3150 = vmul.f32 %v3130, %v3139
        %v3151 = vmul.f32 %v3131, %v3139
        %v3152 = vmul.f32 %v3132, %v3139
        %v3153 = vmul.f32 %v3133, %v3139
        %v3154 = vmul.f32 %v3134, %v3139
        %v3155 = vmul.f32 %v3135, %v3139
        %v3156 = vsel %vm448, %v3140, 0.0
        %3157 = vadd.xlane.f32.xlu0 %v3156
        %v3158 = vpop.xlane.xlu0 %3157
        %v3159 = vsel %vm448, %v3141, 0.0
        %3160 = vadd.xlane.f32.xlu0 %v3159
        %v3161 = vpop.xlane.xlu0 %3160
        %v3162 = vsel %vm448, %v3142, 0.0
        %3163 = vadd.xlane.f32.xlu0 %v3162
        %v3164 = vpop.xlane.xlu0 %3163
        %v3165 = vsel %vm448, %v3143, 0.0
        %3166 = vadd.xlane.f32.xlu0 %v3165
        %v3167 = vpop.xlane.xlu0 %3166
        %v3168 = vsel %vm448, %v3144, 0.0
        %3169 = vadd.xlane.f32.xlu0 %v3168
        %v3170 = vpop.xlane.xlu0 %3169
        %v3171 = vsel %vm448, %v3145, 0.0
        %3172 = vadd.xlane.f32.xlu0 %v3171
        %v3173 = vpop.xlane.xlu0 %3172
        %v3174 = vsel %vm448, %v3146, 0.0
        %3175 = vadd.xlane.f32.xlu0 %v3174
        %v3176 = vpop.xlane.xlu0 %3175
        %v3177 = vsel %vm448, %v3147, 0.0
        %3178 = vadd.xlane.f32.xlu0 %v3177
        %v3179 = vpop.xlane.xlu0 %3178
        %v3180 = vsel %vm448, %v3148, 0.0
        %3181 = vadd.xlane.f32.xlu0 %v3180
        %v3182 = vpop.xlane.xlu0 %3181
        %v3183 = vsel %vm448, %v3149, 0.0
        %3184 = vadd.xlane.f32.xlu0 %v3183
        %v3185 = vpop.xlane.xlu0 %3184
        %v3186 = vsel %vm448, %v3150, 0.0
        %3187 = vadd.xlane.f32.xlu0 %v3186
        %v3188 = vpop.xlane.xlu0 %3187
        %v3189 = vsel %vm448, %v3151, 0.0
        %3190 = vadd.xlane.f32.xlu0 %v3189
        %v3191 = vpop.xlane.xlu0 %3190
        %v3192 = vsel %vm448, %v3152, 0.0
        %3193 = vadd.xlane.f32.xlu0 %v3192
        %v3194 = vpop.xlane.xlu0 %3193
        %v3195 = vsel %vm448, %v3153, 0.0
        %3196 = vadd.xlane.f32.xlu0 %v3195
        %v3197 = vpop.xlane.xlu0 %3196
        %v3198 = vsel %vm448, %v3154, 0.0
        %3199 = vadd.xlane.f32.xlu0 %v3198
        %v3200 = vpop.xlane.xlu0 %3199
        %v3201 = vsel %vm448, %v3155, 0.0
        %3202 = vadd.xlane.f32.xlu0 %v3201
        %v3203 = vpop.xlane.xlu0 %3202
        %v3204 = vlaneseq
        %v3205 = vshrl.u32 %v3204, 7
        %v3206 = vsub.s32 0, %v3205
        %v3207 = vrot.slane %v2554, %v3206
        %v3208 = vadd.f32 %v3158, %v3207
        %v3209 = vadd.f32 %v3161, %v3207
        %v3210 = vadd.f32 %v3164, %v3207
        %v3211 = vadd.f32 %v3167, %v3207
        %v3212 = vadd.f32 %v3170, %v3207
        %v3213 = vadd.f32 %v3173, %v3207
        %v3214 = vadd.f32 %v3176, %v3207
        %v3215 = vadd.f32 %v3179, %v3207
        %v3216 = vadd.f32 %v3182, %v3207
        %v3217 = vadd.f32 %v3185, %v3207
        %v3218 = vadd.f32 %v3188, %v3207
        %v3219 = vadd.f32 %v3191, %v3207
        %v3220 = vadd.f32 %v3194, %v3207
        %v3221 = vadd.f32 %v3197, %v3207
        %v3222 = vadd.f32 %v3200, %v3207
        %v3223 = vadd.f32 %v3203, %v3207
        %vm3224 = vcmp.gt.f32.partialorder %v3208, 0.0
        %vm3225 = vcmp.gt.f32.partialorder %v3209, 0.0
        %vm3226 = vcmp.gt.f32.partialorder %v3210, 0.0
        %vm3227 = vcmp.gt.f32.partialorder %v3211, 0.0
        %vm3228 = vcmp.gt.f32.partialorder %v3212, 0.0
        %vm3229 = vcmp.gt.f32.partialorder %v3213, 0.0
        %vm3230 = vcmp.gt.f32.partialorder %v3214, 0.0
        %vm3231 = vcmp.gt.f32.partialorder %v3215, 0.0
        %vm3232 = vcmp.gt.f32.partialorder %v3216, 0.0
        %vm3233 = vcmp.gt.f32.partialorder %v3217, 0.0
        %vm3234 = vcmp.gt.f32.partialorder %v3218, 0.0
        %vm3235 = vcmp.gt.f32.partialorder %v3219, 0.0
        %vm3236 = vcmp.gt.f32.partialorder %v3220, 0.0
        %vm3237 = vcmp.gt.f32.partialorder %v3221, 0.0
        %vm3238 = vcmp.gt.f32.partialorder %v3222, 0.0
        %vm3239 = vcmp.gt.f32.partialorder %v3223, 0.0
        %v3240 = vmul.f32 %v3208, 0.2
        %v3241 = vmul.f32 %v3209, 0.2
        %v3242 = vmul.f32 %v3210, 0.2
        %v3243 = vmul.f32 %v3211, 0.2
        %v3244 = vmul.f32 %v3212, 0.2
        %v3245 = vmul.f32 %v3213, 0.2
        %v3246 = vmul.f32 %v3214, 0.2
        %v3247 = vmul.f32 %v3215, 0.2
        %v3248 = vmul.f32 %v3216, 0.2
        %v3249 = vmul.f32 %v3217, 0.2
        %v3250 = vmul.f32 %v3218, 0.2
        %v3251 = vmul.f32 %v3219, 0.2
        %v3252 = vmul.f32 %v3220, 0.2
        %v3253 = vmul.f32 %v3221, 0.2
        %v3254 = vmul.f32 %v3222, 0.2
        %v3255 = vmul.f32 %v3223, 0.2
        %v3256 = vsel %vm3224, %v3208, %v3240
        %v3257 = vsel %vm3225, %v3209, %v3241
        %v3258 = vsel %vm3226, %v3210, %v3242
        %v3259 = vsel %vm3227, %v3211, %v3243
        %v3260 = vsel %vm3228, %v3212, %v3244
        %v3261 = vsel %vm3229, %v3213, %v3245
        %v3262 = vsel %vm3230, %v3214, %v3246
        %v3263 = vsel %vm3231, %v3215, %v3247
        %v3264 = vsel %vm3232, %v3216, %v3248
        %v3265 = vsel %vm3233, %v3217, %v3249
        %v3266 = vsel %vm3234, %v3218, %v3250
        %v3267 = vsel %vm3235, %v3219, %v3251
        %v3268 = vsel %vm3236, %v3220, %v3252
        %v3269 = vsel %vm3237, %v3221, %v3253
        %v3270 = vsel %vm3238, %v3222, %v3254
        %v3271 = vsel %vm3239, %v3223, %v3255
        %v3272 = vsel %vm2773, %v3256, -1e+30
        %v3273 = vsel %vm2774, %v3257, -1e+30
        %v3274 = vsel %vm2775, %v3258, -1e+30
        %v3275 = vsel %vm2776, %v3259, -1e+30
        %v3276 = vsel %vm2777, %v3260, -1e+30
        %v3277 = vsel %vm2778, %v3261, -1e+30
        %v3278 = vsel %vm2779, %v3262, -1e+30
        %v3279 = vsel %vm2780, %v3263, -1e+30
        %v3280 = vsel %vm2781, %v3264, -1e+30
        %v3281 = vsel %vm2782, %v3265, -1e+30
        %v3282 = vsel %vm2783, %v3266, -1e+30
        %v3283 = vsel %vm2784, %v3267, -1e+30
        %v3284 = vsel %vm2785, %v3268, -1e+30
        %v3285 = vsel %vm2786, %v3269, -1e+30
        %v3286 = vsel %vm2787, %v3270, -1e+30
        %v3287 = vsel %vm2788, %v3271, -1e+30
        %3288 = vmax.xlane.f32.xlu0 %v3272
        %v3289 = vpop.xlane.xlu0 %3288
        %3290 = vmax.xlane.f32.xlu0 %v3273
        %v3291 = vpop.xlane.xlu0 %3290
        %3292 = vmax.xlane.f32.xlu0 %v3274
        %v3293 = vpop.xlane.xlu0 %3292
        %3294 = vmax.xlane.f32.xlu0 %v3275
        %v3295 = vpop.xlane.xlu0 %3294
        %3296 = vmax.xlane.f32.xlu0 %v3276
        %v3297 = vpop.xlane.xlu0 %3296
        %3298 = vmax.xlane.f32.xlu0 %v3277
        %v3299 = vpop.xlane.xlu0 %3298
        %3300 = vmax.xlane.f32.xlu0 %v3278
        %v3301 = vpop.xlane.xlu0 %3300
        %3302 = vmax.xlane.f32.xlu0 %v3279
        %v3303 = vpop.xlane.xlu0 %3302
        %3304 = vmax.xlane.f32.xlu0 %v3280
        %v3305 = vpop.xlane.xlu0 %3304
        %3306 = vmax.xlane.f32.xlu0 %v3281
        %v3307 = vpop.xlane.xlu0 %3306
        %3308 = vmax.xlane.f32.xlu0 %v3282
        %v3309 = vpop.xlane.xlu0 %3308
        %3310 = vmax.xlane.f32.xlu0 %v3283
        %v3311 = vpop.xlane.xlu0 %3310
        %3312 = vmax.xlane.f32.xlu0 %v3284
        %v3313 = vpop.xlane.xlu0 %3312
        %3314 = vmax.xlane.f32.xlu0 %v3285
        %v3315 = vpop.xlane.xlu0 %3314
        %3316 = vmax.xlane.f32.xlu0 %v3286
        %v3317 = vpop.xlane.xlu0 %3316
        %3318 = vmax.xlane.f32.xlu0 %v3287
        %v3319 = vpop.xlane.xlu0 %3318
        %v3320 = vsub.f32 %v3272, %v3289
        %v3321 = vsub.f32 %v3273, %v3291
        %v3322 = vsub.f32 %v3274, %v3293
        %v3323 = vsub.f32 %v3275, %v3295
        %v3324 = vsub.f32 %v3276, %v3297
        %v3325 = vsub.f32 %v3277, %v3299
        %v3326 = vsub.f32 %v3278, %v3301
        %v3327 = vsub.f32 %v3279, %v3303
        %v3328 = vsub.f32 %v3280, %v3305
        %v3329 = vsub.f32 %v3281, %v3307
        %v3330 = vsub.f32 %v3282, %v3309
        %v3331 = vsub.f32 %v3283, %v3311
        %v3332 = vsub.f32 %v3284, %v3313
        %v3333 = vsub.f32 %v3285, %v3315
        %v3334 = vsub.f32 %v3286, %v3317
        %v3335 = vsub.f32 %v3287, %v3319
        %v3336 = vmul.f32 %v3320, 1.442695
        %v3337 = vpow.pop %v3336
        %v3338 = vmul.f32 %v3321, 1.442695
        %v3339 = vpow.pop %v3338
        %v3340 = vmul.f32 %v3322, 1.442695
        %v3341 = vpow.pop %v3340
        %v3342 = vmul.f32 %v3323, 1.442695
        %v3343 = vpow.pop %v3342
        %v3344 = vmul.f32 %v3324, 1.442695
        %v3345 = vpow.pop %v3344
        %v3346 = vmul.f32 %v3325, 1.442695
        %v3347 = vpow.pop %v3346
        %v3348 = vmul.f32 %v3326, 1.442695
        %v3349 = vpow.pop %v3348
        %v3350 = vmul.f32 %v3327, 1.442695
        %v3351 = vpow.pop %v3350
        %v3352 = vmul.f32 %v3328, 1.442695
        %v3353 = vpow.pop %v3352
        %v3354 = vmul.f32 %v3329, 1.442695
        %v3355 = vpow.pop %v3354
        %v3356 = vmul.f32 %v3330, 1.442695
        %v3357 = vpow.pop %v3356
        %v3358 = vmul.f32 %v3331, 1.442695
        %v3359 = vpow.pop %v3358
        %v3360 = vmul.f32 %v3332, 1.442695
        %v3361 = vpow.pop %v3360
        %v3362 = vmul.f32 %v3333, 1.442695
        %v3363 = vpow.pop %v3362
        %v3364 = vmul.f32 %v3334, 1.442695
        %v3365 = vpow.pop %v3364
        %v3366 = vmul.f32 %v3335, 1.442695
        %v3367 = vpow.pop %v3366
        %3368 = vadd.xlane.f32.xlu0 %v3337
        %v3369 = vpop.xlane.xlu0 %3368
        %3370 = vadd.xlane.f32.xlu0 %v3339
        %v3371 = vpop.xlane.xlu0 %3370
        %3372 = vadd.xlane.f32.xlu0 %v3341
        %v3373 = vpop.xlane.xlu0 %3372
        %3374 = vadd.xlane.f32.xlu0 %v3343
        %v3375 = vpop.xlane.xlu0 %3374
        %3376 = vadd.xlane.f32.xlu0 %v3345
        %v3377 = vpop.xlane.xlu0 %3376
        %3378 = vadd.xlane.f32.xlu0 %v3347
        %v3379 = vpop.xlane.xlu0 %3378
        %3380 = vadd.xlane.f32.xlu0 %v3349
        %v3381 = vpop.xlane.xlu0 %3380
        %3382 = vadd.xlane.f32.xlu0 %v3351
        %v3383 = vpop.xlane.xlu0 %3382
        %3384 = vadd.xlane.f32.xlu0 %v3353
        %v3385 = vpop.xlane.xlu0 %3384
        %3386 = vadd.xlane.f32.xlu0 %v3355
        %v3387 = vpop.xlane.xlu0 %3386
        %3388 = vadd.xlane.f32.xlu0 %v3357
        %v3389 = vpop.xlane.xlu0 %3388
        %3390 = vadd.xlane.f32.xlu0 %v3359
        %v3391 = vpop.xlane.xlu0 %3390
        %3392 = vadd.xlane.f32.xlu0 %v3361
        %v3393 = vpop.xlane.xlu0 %3392
        %3394 = vadd.xlane.f32.xlu0 %v3363
        %v3395 = vpop.xlane.xlu0 %3394
        %3396 = vadd.xlane.f32.xlu0 %v3365
        %v3397 = vpop.xlane.xlu0 %3396
        %3398 = vadd.xlane.f32.xlu0 %v3367
        %v3399 = vpop.xlane.xlu0 %3398
        %v3400 = vrcp.pop %v3369
        %v3401 = vrcp.pop %v3371
        %v3402 = vrcp.pop %v3373
        %v3403 = vrcp.pop %v3375
        %v3404 = vrcp.pop %v3377
        %v3405 = vrcp.pop %v3379
        %v3406 = vrcp.pop %v3381
        %v3407 = vrcp.pop %v3383
        %v3408 = vrcp.pop %v3385
        %v3409 = vrcp.pop %v3387
        %v3410 = vrcp.pop %v3389
        %v3411 = vrcp.pop %v3391
        %v3412 = vrcp.pop %v3393
        %v3413 = vrcp.pop %v3395
        %v3414 = vrcp.pop %v3397
        %v3415 = vrcp.pop %v3399
        %v3416 = vpack.c.bf16 %v3339, %v3337
        %v3417 = vpack.c.bf16 %v3343, %v3341
        %v3418 = vpack.c.bf16 %v3347, %v3345
        %v3419 = vpack.c.bf16 %v3351, %v3349
        %v3420 = vpack.c.bf16 %v3355, %v3353
        %v3421 = vpack.c.bf16 %v3359, %v3357
        %v3422 = vpack.c.bf16 %v3363, %v3361
        %v3423 = vpack.c.bf16 %v3367, %v3365
        %v3424 = vld [vmem:[%s2330] sm:$0xf]
        %v3425 = vld [vmem:[%s2330 + $0x4] sm:$0xf]
        %v3426 = vld [vmem:[%s2330 + $0x8] sm:$0xf]
        %v3427 = vld [vmem:[%s2330 + $0xc] sm:$0xf]
        %v3428 = vld [vmem:[%s2330 + $0x10] sm:$0xf]
        %v3429 = vld [vmem:[%s2330 + $0x14] sm:$0xf]
        %v3430 = vld [vmem:[%s2330 + $0x18] sm:$0xf]
        %v3431 = vld [vmem:[%s2330 + $0x1c] sm:$0xf]
        %v3432 = vld [vmem:[%s2330 + $0x20] sm:$0xf]
        %v3433 = vld [vmem:[%s2330 + $0x24] sm:$0xf]
        %v3434 = vld [vmem:[%s2330 + $0x28] sm:$0xf]
        %v3435 = vld [vmem:[%s2330 + $0x2c] sm:$0xf]
        %v3436 = vld [vmem:[%s2330 + $0x30] sm:$0xf]
        %v3437 = vld [vmem:[%s2330 + $0x34] sm:$0xf]
        %v3438 = vld [vmem:[%s2330 + $0x38] sm:$0xf]
        %v3439 = vld [vmem:[%s2330 + $0x3c] sm:$0xf]
        %v3456 = vunpack.c.l.b16 %v3424
        %v3457 = vunpack.c.l.b16 %v3425
        %v3458 = vunpack.c.l.b16 %v3426
        %v3459 = vunpack.c.l.b16 %v3427
        %v3460 = vunpack.c.l.b16 %v3428
        %v3461 = vunpack.c.l.b16 %v3429
        %v3462 = vunpack.c.l.b16 %v3430
        %v3463 = vunpack.c.l.b16 %v3431
        %v3464 = vunpack.c.l.b16 %v3432
        %v3465 = vunpack.c.l.b16 %v3433
        %v3466 = vunpack.c.l.b16 %v3434
        %v3467 = vunpack.c.l.b16 %v3435
        %v3468 = vunpack.c.l.b16 %v3436
        %v3469 = vunpack.c.l.b16 %v3437
        %v3470 = vunpack.c.l.b16 %v3438
        %v3471 = vunpack.c.l.b16 %v3439
        %v3472 = vpack.c.b16 %v3457, %v3456
        %v3473 = vpack.c.b16 %v3459, %v3458
        %v3474 = vpack.c.b16 %v3461, %v3460
        %v3475 = vpack.c.b16 %v3463, %v3462
        %v3476 = vpack.c.b16 %v3465, %v3464
        %v3477 = vpack.c.b16 %v3467, %v3466
        %v3478 = vpack.c.b16 %v3469, %v3468
        %v3479 = vpack.c.b16 %v3471, %v3470
        %3488 = vmatprep.subr.bf16.mxu0 0
        %3489 = vmatpush1.bf16.msra.mxu0 %v3479
        %3490 = vmatprep.subr.bf16.mxu0 0
        %3491 = vmatpush1.bf16.msra.mxu0 %v3478
        %3492 = vmatprep.subr.bf16.mxu0 0
        %3493 = vmatpush1.bf16.msra.mxu0 %v3477
        %3494 = vmatprep.subr.bf16.mxu0 0
        %3495 = vmatpush1.bf16.msra.mxu0 %v3476
        %3496 = vmatprep.subr.bf16.mxu0 0
        %3497 = vmatpush1.bf16.msra.mxu0 %v3475
        %3498 = vmatprep.subr.bf16.mxu0 0
        %3499 = vmatpush1.bf16.msra.mxu0 %v3474
        %3500 = vmatprep.subr.bf16.mxu0 0
        %3501 = vmatpush1.bf16.msra.mxu0 %v3473
        %3502 = vmatprep.subr.bf16.mxu0 0
        %3503 = vmatpush1.bf16.msra.mxu0 %v3472
        %3504 = vmatprep.subr.bf16.mxu0 0
        %3505 = vmatpush2.bf16.msra.mxu0 0
        %3506 = vmatprep.subr.bf16.mxu0 0
        %3507 = vmatpush2.bf16.msra.mxu0 0
        %3508 = vmatprep.subr.bf16.mxu0 0
        %3509 = vmatpush2.bf16.msra.mxu0 0
        %3510 = vmatprep.subr.bf16.mxu0 0
        %3511 = vmatpush2.bf16.msra.mxu0 0
        %3512 = vmatprep.subr.bf16.mxu0 0
        %3513 = vmatpush2.bf16.msra.mxu0 0
        %3514 = vmatprep.subr.bf16.mxu0 0
        %3515 = vmatpush2.bf16.msra.mxu0 0
        %3516 = vmatprep.subr.bf16.mxu0 0
        %3517 = vmatpush2.bf16.msra.mxu0 0
        %3518 = vmatprep.subr.bf16.mxu0 0
        %3519 = vmatpush2.bf16.msra.mxu0 0
        %3520 = vmatprep.mubr.bf16.mxu0 0
        %3521 = vmatmul.mubr.bf16.gmra.mxu0 %v3416
        %v3522 = vpop.f32.mrf.mxu0
        %v3523 = vadd.f32 0.0, %v3522
        %v3524 = vpop.f32.mrf.mxu0
        %v3525 = vpop.f32.mrf.mxu0
        %v3526 = vadd.f32 0.0, %v3525
        %v3527 = vpop.f32.mrf.mxu0
        %3528 = vmatprep.mubr.bf16.mxu0 0
        %3529 = vmatmul.mubr.bf16.gmra.mxu0 %v3417
        %v3530 = vpop.f32.mrf.mxu0
        %v3531 = vadd.f32 0.0, %v3530
        %v3532 = vpop.f32.mrf.mxu0
        %v3533 = vpop.f32.mrf.mxu0
        %v3534 = vadd.f32 0.0, %v3533
        %v3535 = vpop.f32.mrf.mxu0
        %3536 = vmatprep.mubr.bf16.mxu0 0
        %3537 = vmatmul.mubr.bf16.gmra.mxu0 %v3418
        %v3538 = vpop.f32.mrf.mxu0
        %v3539 = vadd.f32 0.0, %v3538
        %v3540 = vpop.f32.mrf.mxu0
        %v3541 = vpop.f32.mrf.mxu0
        %v3542 = vadd.f32 0.0, %v3541
        %v3543 = vpop.f32.mrf.mxu0
        %3544 = vmatprep.mubr.bf16.mxu0 0
        %3545 = vmatmul.mubr.bf16.gmra.mxu0 %v3419
        %v3546 = vpop.f32.mrf.mxu0
        %v3547 = vadd.f32 0.0, %v3546
        %v3548 = vpop.f32.mrf.mxu0
        %v3549 = vpop.f32.mrf.mxu0
        %v3550 = vadd.f32 0.0, %v3549
        %v3551 = vpop.f32.mrf.mxu0
        %3552 = vmatprep.mubr.bf16.mxu0 0
        %3553 = vmatmul.mubr.bf16.gmra.mxu0 %v3420
        %v3554 = vpop.f32.mrf.mxu0
        %v3555 = vadd.f32 0.0, %v3554
        %v3556 = vpop.f32.mrf.mxu0
        %v3557 = vpop.f32.mrf.mxu0
        %v3558 = vadd.f32 0.0, %v3557
        %v3559 = vpop.f32.mrf.mxu0
        %3560 = vmatprep.mubr.bf16.mxu0 0
        %3561 = vmatmul.mubr.bf16.gmra.mxu0 %v3421
        %v3562 = vpop.f32.mrf.mxu0
        %v3563 = vadd.f32 0.0, %v3562
        %v3564 = vpop.f32.mrf.mxu0
        %v3565 = vpop.f32.mrf.mxu0
        %v3566 = vadd.f32 0.0, %v3565
        %v3567 = vpop.f32.mrf.mxu0
        %3568 = vmatprep.mubr.bf16.mxu0 0
        %3569 = vmatmul.mubr.bf16.gmra.mxu0 %v3422
        %v3570 = vpop.f32.mrf.mxu0
        %v3571 = vadd.f32 0.0, %v3570
        %v3572 = vpop.f32.mrf.mxu0
        %v3573 = vpop.f32.mrf.mxu0
        %v3574 = vadd.f32 0.0, %v3573
        %v3575 = vpop.f32.mrf.mxu0
        %3576 = vmatprep.mubr.bf16.mxu0 0
        %3577 = vmatmul.mubr.bf16.gmra.mxu0 %v3423
        %v3578 = vpop.f32.mrf.mxu0
        %v3579 = vadd.f32 0.0, %v3578
        %v3580 = vpop.f32.mrf.mxu0
        %v3581 = vpop.f32.mrf.mxu0
        %v3582 = vadd.f32 0.0, %v3581
        %v3583 = vpop.f32.mrf.mxu0
        %3584 = vdwg.mxu0
        %v3585 = vmul.f32 %v3523, %v3400
        %v3586 = vmul.f32 %v3526, %v3401
        %v3587 = vmul.f32 %v3531, %v3402
        %v3588 = vmul.f32 %v3534, %v3403
        %v3589 = vmul.f32 %v3539, %v3404
        %v3590 = vmul.f32 %v3542, %v3405
        %v3591 = vmul.f32 %v3547, %v3406
        %v3592 = vmul.f32 %v3550, %v3407
        %v3593 = vmul.f32 %v3555, %v3408
        %v3594 = vmul.f32 %v3558, %v3409
        %v3595 = vmul.f32 %v3563, %v3410
        %v3596 = vmul.f32 %v3566, %v3411
        %v3597 = vmul.f32 %v3571, %v3412
        %v3598 = vmul.f32 %v3574, %v3413
        %v3599 = vmul.f32 %v3579, %v3414
        %v3600 = vmul.f32 %v3582, %v3415
        %3617 = vrot.lane.b32.xlu0 %v3585, 32
        %v3618 = vpop.permute.xlu0 %3617
        %3619 = vrot.lane.b32.xlu0 %v3586, 32
        %v3620 = vpop.permute.xlu0 %3619
        %3621 = vrot.lane.b32.xlu0 %v3587, 32
        %v3622 = vpop.permute.xlu0 %3621
        %3623 = vrot.lane.b32.xlu0 %v3588, 32
        %v3624 = vpop.permute.xlu0 %3623
        %3625 = vrot.lane.b32.xlu0 %v3589, 32
        %v3626 = vpop.permute.xlu0 %3625
        %3627 = vrot.lane.b32.xlu0 %v3590, 32
        %v3628 = vpop.permute.xlu0 %3627
        %3629 = vrot.lane.b32.xlu0 %v3591, 32
        %v3630 = vpop.permute.xlu0 %3629
        %3631 = vrot.lane.b32.xlu0 %v3592, 32
        %v3632 = vpop.permute.xlu0 %3631
        %3633 = vrot.lane.b32.xlu0 %v3593, 32
        %v3634 = vpop.permute.xlu0 %3633
        %3635 = vrot.lane.b32.xlu0 %v3594, 32
        %v3636 = vpop.permute.xlu0 %3635
        %3637 = vrot.lane.b32.xlu0 %v3595, 32
        %v3638 = vpop.permute.xlu0 %3637
        %3639 = vrot.lane.b32.xlu0 %v3596, 32
        %v3640 = vpop.permute.xlu0 %3639
        %3641 = vrot.lane.b32.xlu0 %v3597, 32
        %v3642 = vpop.permute.xlu0 %3641
        %3643 = vrot.lane.b32.xlu0 %v3598, 32
        %v3644 = vpop.permute.xlu0 %3643
        %3645 = vrot.lane.b32.xlu0 %v3599, 32
        %v3646 = vpop.permute.xlu0 %3645
        %3647 = vrot.lane.b32.xlu0 %v3600, 32
        %v3648 = vpop.permute.xlu0 %3647
        %v3665 = vsel %vm448, %v3102, %v3618
        %v3666 = vsel %vm448, %v3103, %v3620
        %v3667 = vsel %vm448, %v3104, %v3622
        %v3668 = vsel %vm448, %v3105, %v3624
        %v3669 = vsel %vm448, %v3106, %v3626
        %v3670 = vsel %vm448, %v3107, %v3628
        %v3671 = vsel %vm448, %v3108, %v3630
        %v3672 = vsel %vm448, %v3109, %v3632
        %v3673 = vsel %vm448, %v3110, %v3634
        %v3674 = vsel %vm448, %v3111, %v3636
        %v3675 = vsel %vm448, %v3112, %v3638
        %v3676 = vsel %vm448, %v3113, %v3640
        %v3677 = vsel %vm448, %v3114, %v3642
        %v3678 = vsel %vm448, %v3115, %v3644
        %v3679 = vsel %vm448, %v3116, %v3646
        %v3680 = vsel %vm448, %v3117, %v3648
        %v3681 = vlaneseq
        %v3682 = vshrl.u32 %v3681, 7
        %v3683 = vsub.s32 0, %v3682
        %v3684 = vrot.slane %v427, %v3683
        %v3685 = vadd.f32 %v3665, %v3684
        %v3686 = vadd.f32 %v3666, %v3684
        %v3687 = vadd.f32 %v3667, %v3684
        %v3688 = vadd.f32 %v3668, %v3684
        %v3689 = vadd.f32 %v3669, %v3684
        %v3690 = vadd.f32 %v3670, %v3684
        %v3691 = vadd.f32 %v3671, %v3684
        %v3692 = vadd.f32 %v3672, %v3684
        %v3693 = vadd.f32 %v3673, %v3684
        %v3694 = vadd.f32 %v3674, %v3684
        %v3695 = vadd.f32 %v3675, %v3684
        %v3696 = vadd.f32 %v3676, %v3684
        %v3697 = vadd.f32 %v3677, %v3684
        %v3698 = vadd.f32 %v3678, %v3684
        %v3699 = vadd.f32 %v3679, %v3684
        %v3700 = vadd.f32 %v3680, %v3684
        %v3701 = vmax.f32 %v3685, 0.0
        %v3702 = vmax.f32 %v3686, 0.0
        %v3703 = vmax.f32 %v3687, 0.0
        %v3704 = vmax.f32 %v3688, 0.0
        %v3705 = vmax.f32 %v3689, 0.0
        %v3706 = vmax.f32 %v3690, 0.0
        %v3707 = vmax.f32 %v3691, 0.0
        %v3708 = vmax.f32 %v3692, 0.0
        %v3709 = vmax.f32 %v3693, 0.0
        %v3710 = vmax.f32 %v3694, 0.0
        %v3711 = vmax.f32 %v3695, 0.0
        %v3712 = vmax.f32 %v3696, 0.0
        %v3713 = vmax.f32 %v3697, 0.0
        %v3714 = vmax.f32 %v3698, 0.0
        %v3715 = vmax.f32 %v3699, 0.0
        %v3716 = vmax.f32 %v3700, 0.0
        %v3717 = vld [vmem:[%s422] sm:$0x1]
        %3718 = vmatprep.subr.mxu0 0.0
        %3719 = vmatpush1.msra.mxu0 %v3716
        %3720 = vmatprep.subr.mxu0 0.0
        %3721 = vmatpush1.msra.mxu0 %v3715
        %3722 = vmatprep.subr.mxu0 0.0
        %3723 = vmatpush1.msra.mxu0 %v3714
        %3724 = vmatprep.subr.mxu0 0.0
        %3725 = vmatpush1.msra.mxu0 %v3713
        %3726 = vmatprep.subr.mxu0 0.0
        %3727 = vmatpush1.msra.mxu0 %v3712
        %3728 = vmatprep.subr.mxu0 0.0
        %3729 = vmatpush1.msra.mxu0 %v3711
        %3730 = vmatprep.subr.mxu0 0.0
        %3731 = vmatpush1.msra.mxu0 %v3710
        %3732 = vmatprep.subr.mxu0 0.0
        %3733 = vmatpush1.msra.mxu0 %v3709
        %3734 = vmatprep.subr.mxu0 0.0
        %3735 = vmatpush1.msra.mxu0 %v3708
        %3736 = vmatprep.subr.mxu0 0.0
        %3737 = vmatpush1.msra.mxu0 %v3707
        %3738 = vmatprep.subr.mxu0 0.0
        %3739 = vmatpush1.msra.mxu0 %v3706
        %3740 = vmatprep.subr.mxu0 0.0
        %3741 = vmatpush1.msra.mxu0 %v3705
        %3742 = vmatprep.subr.mxu0 0.0
        %3743 = vmatpush1.msra.mxu0 %v3704
        %3744 = vmatprep.subr.mxu0 0.0
        %3745 = vmatpush1.msra.mxu0 %v3703
        %3746 = vmatprep.subr.mxu0 0.0
        %3747 = vmatpush1.msra.mxu0 %v3702
        %3748 = vmatprep.subr.mxu0 0.0
        %3749 = vmatpush1.msra.mxu0 %v3701
        %3750 = vmatprep.subr.mxu0 0.0
        %3751 = vmatpush2.msra.mxu0 0.0
        %3752 = vmatprep.subr.mxu0 0.0
        %3753 = vmatpush2.msra.mxu0 0.0
        %3754 = vmatprep.subr.mxu0 0.0
        %3755 = vmatpush2.msra.mxu0 0.0
        %3756 = vmatprep.subr.mxu0 0.0
        %3757 = vmatpush2.msra.mxu0 0.0
        %3758 = vmatprep.subr.mxu0 0.0
        %3759 = vmatpush2.msra.mxu0 0.0
        %3760 = vmatprep.subr.mxu0 0.0
        %3761 = vmatpush2.msra.mxu0 0.0
        %3762 = vmatprep.subr.mxu0 0.0
        %3763 = vmatpush2.msra.mxu0 0.0
        %3764 = vmatprep.subr.mxu0 0.0
        %3765 = vmatpush2.msra.mxu0 0.0
        %3766 = vmatprep.subr.mxu0 0.0
        %3767 = vmatpush2.msra.mxu0 0.0
        %3768 = vmatprep.subr.mxu0 0.0
        %3769 = vmatpush2.msra.mxu0 0.0
        %3770 = vmatprep.subr.mxu0 0.0
        %3771 = vmatpush2.msra.mxu0 0.0
        %3772 = vmatprep.subr.mxu0 0.0
        %3773 = vmatpush2.msra.mxu0 0.0
        %3774 = vmatprep.subr.mxu0 0.0
        %3775 = vmatpush2.msra.mxu0 0.0
        %3776 = vmatprep.subr.mxu0 0.0
        %3777 = vmatpush2.msra.mxu0 0.0
        %3778 = vmatprep.subr.mxu0 0.0
        %3779 = vmatpush2.msra.mxu0 0.0
        %3780 = vmatprep.subr.mxu0 0.0
        %3781 = vmatpush2.msra.mxu0 0.0
        %3782 = vmatprep.mubr.f32.mxu0 0.0
        %3783 = vmatmul.mubr.f32.gmra.mxu0 %v3717
        %v3784 = vpop.f32.mrf.mxu0
        %v3785 = vadd.f32 0.0, %v3784
        %v3786 = vpop.f32.mrf.mxu0
        %3787 = vdwg.mxu0
        %v3788 = vld [vmem:[%s6] sm:$0xff]
        %v3789 = vld [vmem:[%s6 + $0x8] sm:$0xff]
        %v3790 = vld [vmem:[%s6 + $0x10] sm:$0xff]
        %v3791 = vld [vmem:[%s6 + $0x18] sm:$0xff]
        %v3792 = vld [vmem:[%s6 + $0x20] sm:$0xff]
        %v3793 = vld [vmem:[%s6 + $0x28] sm:$0xff]
        %v3794 = vld [vmem:[%s6 + $0x30] sm:$0xff]
        %v3795 = vld [vmem:[%s6 + $0x38] sm:$0xff]
        %v3797 = vrot.slane %v427, 1
        %vm3799 = vcmask 523264
        %v3801 = vsel %vm3799, %v3785, 0
        %3803 = vmatprep.subr.mxu0 0.0
        %3804 = vmatpush1.msra.mxu0 0.0
        %3805 = vmatprep.subr.mxu0 0.0
        %3806 = vmatpush1.msra.mxu0 0.0
        %3807 = vmatprep.subr.mxu0 0.0
        %3808 = vmatpush1.msra.mxu0 0.0
        %3809 = vmatprep.subr.mxu0 0.0
        %3810 = vmatpush1.msra.mxu0 0.0
        %3811 = vmatprep.subr.mxu0 0.0
        %3812 = vmatpush1.msra.mxu0 0.0
        %3813 = vmatprep.subr.mxu0 0.0
        %3814 = vmatpush1.msra.mxu0 0.0
        %3815 = vmatprep.subr.mxu0 0.0
        %3816 = vmatpush1.msra.mxu0 0.0
        %3817 = vmatprep.subr.mxu0 0.0
        %3818 = vmatpush1.msra.mxu0 0.0
        %3819 = vmatprep.subr.mxu0 0.0
        %3820 = vmatpush1.msra.mxu0 %v3795
        %3821 = vmatprep.subr.mxu0 0.0
        %3822 = vmatpush1.msra.mxu0 %v3794
        %3823 = vmatprep.subr.mxu0 0.0
        %3824 = vmatpush1.msra.mxu0 %v3793
        %3825 = vmatprep.subr.mxu0 0.0
        %3826 = vmatpush1.msra.mxu0 %v3792
        %3827 = vmatprep.subr.mxu0 0.0
        %3828 = vmatpush1.msra.mxu0 %v3791
        %3829 = vmatprep.subr.mxu0 0.0
        %3830 = vmatpush1.msra.mxu0 %v3790
        %3831 = vmatprep.subr.mxu0 0.0
        %3832 = vmatpush1.msra.mxu0 %v3789
        %3833 = vmatprep.subr.mxu0 0.0
        %3834 = vmatpush1.msra.mxu0 %v3788
        %3835 = vmatprep.subr.mxu0 0.0
        %3836 = vmatpush2.msra.mxu0 0.0
        %3837 = vmatprep.subr.mxu0 0.0
        %3838 = vmatpush2.msra.mxu0 0.0
        %3839 = vmatprep.subr.mxu0 0.0
        %3840 = vmatpush2.msra.mxu0 0.0
        %3841 = vmatprep.subr.mxu0 0.0
        %3842 = vmatpush2.msra.mxu0 0.0
        %3843 = vmatprep.subr.mxu0 0.0
        %3844 = vmatpush2.msra.mxu0 0.0
        %3845 = vmatprep.subr.mxu0 0.0
        %3846 = vmatpush2.msra.mxu0 0.0
        %3847 = vmatprep.subr.mxu0 0.0
        %3848 = vmatpush2.msra.mxu0 0.0
        %3849 = vmatprep.subr.mxu0 0.0
        %3850 = vmatpush2.msra.mxu0 0.0
        %3851 = vmatprep.subr.mxu0 0.0
        %3852 = vmatpush2.msra.mxu0 0.0
        %3853 = vmatprep.subr.mxu0 0.0
        %3854 = vmatpush2.msra.mxu0 0.0
        %3855 = vmatprep.subr.mxu0 0.0
        %3856 = vmatpush2.msra.mxu0 0.0
        %3857 = vmatprep.subr.mxu0 0.0
        %3858 = vmatpush2.msra.mxu0 0.0
        %3859 = vmatprep.subr.mxu0 0.0
        %3860 = vmatpush2.msra.mxu0 0.0
        %3861 = vmatprep.subr.mxu0 0.0
        %3862 = vmatpush2.msra.mxu0 0.0
        %3863 = vmatprep.subr.mxu0 0.0
        %3864 = vmatpush2.msra.mxu0 0.0
        %3865 = vmatprep.subr.mxu0 0.0
        %3866 = vmatpush2.msra.mxu0 0.0
        %3867 = vmatprep.mubr.f32.mxu0 0.0
        %3868 = vmatmul.mubr.f32.gmra.mxu0 %v3801
        %v3869 = vpop.f32.mrf.mxu0
        %v3870 = vadd.f32 %v3797, %v3869
        %v3871 = vpop.f32.mrf.mxu0
        %3872 = vdwg.mxu0
        %v3873 = vmax.f32 %v3870, 0.0
        %v3874 = vld [vmem:[%s7] sm:$0xff]
        %v3875 = vld [vmem:[%s7 + $0x8] sm:$0xff]
        %v3876 = vld [vmem:[%s7 + $0x10] sm:$0xff]
        %v3877 = vld [vmem:[%s7 + $0x18] sm:$0xff]
        %v3878 = vld [vmem:[%s7 + $0x20] sm:$0xff]
        %v3879 = vld [vmem:[%s7 + $0x28] sm:$0xff]
        %v3880 = vld [vmem:[%s7 + $0x30] sm:$0xff]
        %v3881 = vld [vmem:[%s7 + $0x38] sm:$0xff]
        %v3882 = vld [vmem:[%s7 + $0x40] sm:$0xff]
        %v3883 = vld [vmem:[%s7 + $0x48] sm:$0xff]
        %v3884 = vld [vmem:[%s7 + $0x50] sm:$0xff]
        %v3885 = vld [vmem:[%s7 + $0x58] sm:$0xff]
        %v3886 = vld [vmem:[%s7 + $0x60] sm:$0xff]
        %v3887 = vld [vmem:[%s7 + $0x68] sm:$0xff]
        %v3888 = vld [vmem:[%s7 + $0x70] sm:$0xff]
        %v3889 = vld [vmem:[%s7 + $0x78] sm:$0xff]
        %v3890 = vrot.slane %v427, 2
        %3892 = vmatprep.subr.mxu0 0.0
        %3893 = vmatpush1.msra.mxu0 %v3889
        %3894 = vmatprep.subr.mxu0 0.0
        %3895 = vmatpush1.msra.mxu0 %v3888
        %3896 = vmatprep.subr.mxu0 0.0
        %3897 = vmatpush1.msra.mxu0 %v3887
        %3898 = vmatprep.subr.mxu0 0.0
        %3899 = vmatpush1.msra.mxu0 %v3886
        %3900 = vmatprep.subr.mxu0 0.0
        %3901 = vmatpush1.msra.mxu0 %v3885
        %3902 = vmatprep.subr.mxu0 0.0
        %3903 = vmatpush1.msra.mxu0 %v3884
        %3904 = vmatprep.subr.mxu0 0.0
        %3905 = vmatpush1.msra.mxu0 %v3883
        %3906 = vmatprep.subr.mxu0 0.0
        %3907 = vmatpush1.msra.mxu0 %v3882
        %3908 = vmatprep.subr.mxu0 0.0
        %3909 = vmatpush1.msra.mxu0 %v3881
        %3910 = vmatprep.subr.mxu0 0.0
        %3911 = vmatpush1.msra.mxu0 %v3880
        %3912 = vmatprep.subr.mxu0 0.0
        %3913 = vmatpush1.msra.mxu0 %v3879
        %3914 = vmatprep.subr.mxu0 0.0
        %3915 = vmatpush1.msra.mxu0 %v3878
        %3916 = vmatprep.subr.mxu0 0.0
        %3917 = vmatpush1.msra.mxu0 %v3877
        %3918 = vmatprep.subr.mxu0 0.0
        %3919 = vmatpush1.msra.mxu0 %v3876
        %3920 = vmatprep.subr.mxu0 0.0
        %3921 = vmatpush1.msra.mxu0 %v3875
        %3922 = vmatprep.subr.mxu0 0.0
        %3923 = vmatpush1.msra.mxu0 %v3874
        %3924 = vmatprep.subr.mxu0 0.0
        %3925 = vmatpush2.msra.mxu0 0.0
        %3926 = vmatprep.subr.mxu0 0.0
        %3927 = vmatpush2.msra.mxu0 0.0
        %3928 = vmatprep.subr.mxu0 0.0
        %3929 = vmatpush2.msra.mxu0 0.0
        %3930 = vmatprep.subr.mxu0 0.0
        %3931 = vmatpush2.msra.mxu0 0.0
        %3932 = vmatprep.subr.mxu0 0.0
        %3933 = vmatpush2.msra.mxu0 0.0
        %3934 = vmatprep.subr.mxu0 0.0
        %3935 = vmatpush2.msra.mxu0 0.0
        %3936 = vmatprep.subr.mxu0 0.0
        %3937 = vmatpush2.msra.mxu0 0.0
        %3938 = vmatprep.subr.mxu0 0.0
        %3939 = vmatpush2.msra.mxu0 0.0
        %3940 = vmatprep.subr.mxu0 0.0
        %3941 = vmatpush2.msra.mxu0 0.0
        %3942 = vmatprep.subr.mxu0 0.0
        %3943 = vmatpush2.msra.mxu0 0.0
        %3944 = vmatprep.subr.mxu0 0.0
        %3945 = vmatpush2.msra.mxu0 0.0
        %3946 = vmatprep.subr.mxu0 0.0
        %3947 = vmatpush2.msra.mxu0 0.0
        %3948 = vmatprep.subr.mxu0 0.0
        %3949 = vmatpush2.msra.mxu0 0.0
        %3950 = vmatprep.subr.mxu0 0.0
        %3951 = vmatpush2.msra.mxu0 0.0
        %3952 = vmatprep.subr.mxu0 0.0
        %3953 = vmatpush2.msra.mxu0 0.0
        %3954 = vmatprep.subr.mxu0 0.0
        %3955 = vmatpush2.msra.mxu0 0.0
        %3956 = vmatprep.mubr.f32.mxu0 0.0
        %3957 = vmatmul.mubr.f32.gmra.mxu0 %v3873
        %v3958 = vpop.f32.mrf.mxu0
        %v3959 = vadd.f32 %v3890, %v3958
        %v3960 = vpop.f32.mrf.mxu0
        %3961 = vdwg.mxu0
        %v3962 = vmax.f32 %v3959, 0.0
        %3963 = vst [vmem:[%s409] sm:$0x1] %v3962
        %s3964 = sand.u32 %s238, 1
        %s3965 = scalar_lea.sflag [#allocation7], %s3964
        %s3966 = sand.u32 %s238, 1
        %s3967 = scalar_lea.vmem [#allocation13], %s3966
        // Predicated region
        $region73: #{tpu_custom_call.1} parent=55 // pred_check
          %p3968 = pneg %p248
        $region74: #{tpu_custom_call.1} parent=55 // pred_check_branch
          %3970 = sbr.rel (%p3968) target = $region76
        $region75: #{tpu_custom_call.1} parent=55 // pred_region
          %s3972 = ssub.s32 16, 16
          %3973 = vsyncadd %s3965, %s3972
          %s3974 = smul.addr %s26, 16
          %s3975 = scalar_lea.hbm %s9, %s3974
          %s3977 = sshll.u32 %s3967, 4
          %s3978 = int_to_ptr.vmem [resolvable:$true] %s3977
          %3980 = dma.vmem_to_hbm [thread:$0]  %s3978, 16, %s3975, %s3965
        $region76: #{tpu_custom_call.1} parent=55 // pred_fallthru
          _
      $region56: #{tpu_custom_call.1} parent=5 // pred_fallthru
        _
      %p3981 = scmp.le.s32.totalorder 2, %s21
      // Predicated region
      $region77: #{tpu_custom_call.1} parent=5 // pred_check
        %p3982 = pneg %p3981
      $region78: #{tpu_custom_call.1} parent=5 // pred_check_branch
        %3984 = sbr.rel (%p3982) target = $region80
      $region79: #{tpu_custom_call.1} parent=5 // pred_region
        %s3985 = ssub.s32 %s21, 2
        // Predicated region
        $region81: #{tpu_custom_call.1} parent=79 // pred_check
          %p3986 = pneg %p254
        $region82: #{tpu_custom_call.1} parent=79 // pred_check_branch
          %3988 = sbr.rel (%p3986) target = $region84
        $region83: #{tpu_custom_call.1} parent=79 // pred_region
          %s3989 = sand.u32 %s239, 1
          %s3990 = scalar_lea.sflag [#allocation7], %s3989
          %s3991 = sand.u32 %s239, 1
          %s3992 = scalar_lea.vmem [#allocation13], %s3991
          %3993 = dma.done %s3990, 16
        $region84: #{tpu_custom_call.1} parent=79 // pred_fallthru
          _
      $region80: #{tpu_custom_call.1} parent=5 // pred_fallthru
        _
    $region6: #{tpu_custom_call.1} parent=1 // loop_footer
      %s25 = sadd.s32 1, %s21
    $region7: #{tpu_custom_call.1} parent=1 // loop_footer_branch
      %20 = sbr.rel target = $region3
    $region8: #{tpu_custom_call.1} parent=1 // loop_exit
      _
    %3994 = vsyncpa [#allocation6], 1
    %s3995 = scalar_lea.sflag [#allocation6], 1
    %3996 = vsyncpa %s3995, 1
    %3997 = vsyncpa [#allocation9], 1
    %3998 = vsyncpa [#allocation12], 1
    %3999 = vsyncpa [#allocation7], 1
    %s4000 = scalar_lea.sflag [#allocation7], 1
    %4001 = vsyncpa %s4000, 1

</llo_original>
